<compile_context>
chip_gen: v5e
topology: v5e:2x2
jax: 0.10.0
libtpu: 0.0.40
codegen_flags: <defaults>
</compile_context>

<pallas_src>
import jax
import jax.numpy as jnp
from jax import lax
from jax.experimental import pallas as pl
from jax.experimental.pallas import tpu as pltpu


def _make_resblock_kernel(H, W, Cin, Cout, CP, Cmid, NBLK):
    """Kernel processing NBLK images (whole HxW planes) per grid step.

    CP   : output channels padded to a multiple of 128 (lane-dense output / residual)
    Cmid : conv1-output / mid-scratch channel width (== CP when Cout >= 64, else Cout)
    """
    M = NBLK * H * W
    WPAD = W + 16  # scratch W extent: 8 zero cols left, 8 right (sublane-aligned interior)

    def kernel(xp_ref, w1c_ref, s1_ref, t1_ref, w2_ref, s2_ref, t2_ref,
               o_ref, mid_ref):
        # ---- conv1 + folded 1x1 identity: one im2col matmul (K = 9*Cin, N = CP + Cmid) ----
        taps1 = [xp_ref[:, dy:dy + H, dx:dx + W, :].reshape(M, Cin)
                 for dy in range(3) for dx in range(3)]
        patch1 = jnp.concatenate(taps1, axis=-1)                       # (M, 9*Cin) bf16
        r1 = jnp.dot(patch1, w1c_ref[...],
                     preferred_element_type=jnp.float32)               # (M, CP + Cmid) f32

        # Identity path goes straight into the output block (no (M, CP) f32 value kept
        # live across the conv2 section); BN2 term is accumulated into it at the end.
        o_ref[...] = r1[:, :CP].reshape(NBLK, H, W, CP).astype(o_ref.dtype)

        # ---- BN1 (folded) + ReLU, single cast to bf16 for the mid scratch ----
        y = jnp.maximum(r1[:, CP:] * s1_ref[...] + t1_ref[...], 0.0)   # (M, Cmid) f32

        # Zero only the border of the zero-bordered intermediate; the interior is fully
        # overwritten below.  Done every step so 'parallel' megacore sharding stays correct.
        zrow = jnp.zeros((NBLK, 1, WPAD, Cmid), mid_ref.dtype)
        zcol = jnp.zeros((NBLK, H, 8, Cmid), mid_ref.dtype)
        mid_ref[:, 0:1, :, :] = zrow                     # top border row
        mid_ref[:, H + 1:H + 2, :, :] = zrow             # bottom border row
        mid_ref[:, 1:H + 1, 0:8, :] = zcol               # left border cols (covers col 7)
        mid_ref[:, 1:H + 1, W + 8:W + 16, :] = zcol      # right border cols (covers col W+8)
        mid_ref[:, 1:H + 1, 8:8 + W, :] = (
            y.reshape(NBLK, H, W, Cmid).astype(mid_ref.dtype))

        # ---- conv2: three accumulating im2col matmuls, one per dy (K = 3*Cmid each) ----
        c2 = None
        for dy in range(3):
            taps = [mid_ref[:, dy:dy + H, 7 + dx:7 + dx + W, :].reshape(M, Cmid)
                    for dx in range(3)]
            patch = jnp.concatenate(taps, axis=-1)                     # (M, 3*Cmid) bf16
            d = jnp.dot(patch, w2_ref[dy],
                        preferred_element_type=jnp.float32)            # (M, CP) f32
            c2 = d if c2 is None else c2 + d

        # ---- BN2 (folded) + residual accumulate into the (bf16, lane-dense) output ----
        out = c2 * s2_ref[...] + t2_ref[...]
        o_ref[...] = (o_ref[...].astype(jnp.float32)
                      + out.reshape(NBLK, H, W, CP)).astype(o_ref.dtype)

    return kernel


def resblock2d_pallas(x_nchw, p, eps=1e-5, images_per_step=1,
                      vmem_limit_bytes=48 * 1024 * 1024):
    """x_nchw: (N, Cin, H, W).  p: dict of parameters (PyTorch layouts).  Returns (N, Cout, H, W).

    Tuning: on v5e/v6e (128 MiB VMEM, serial grid) raise vmem_limit_bytes and grow
    images_per_step so M = images_per_step*H*W >= ~1024; on v7x (64 MiB, 2 TCs) keep
    vmem_limit_bytes <= ~56 MiB and N // images_per_step >= 2.
    """
    N, Cin, H, W = x_nchw.shape
    Cout = p["w1"].shape[0]
    CP = ((Cout + 127) // 128) * 128          # output channels padded to lane-dense width
    # Lane-dense conv1 output / mid channels for realistic Cout; for tiny Cout padding
    # would inflate conv2's K by CP/Cout, so keep it ragged there.
    Cmid = CP if Cout >= 64 else Cout
    NBLK = images_per_step
    assert N % NBLK == 0, "batch must be divisible by images_per_step"

    # NCHW -> NHWC, 1-px zero pad, bf16 cast: one fused XLA pass over the (small) input.
    x = jnp.transpose(x_nchw, (0, 2, 3, 1))
    xp = jnp.pad(x, ((0, 0), (1, 1), (1, 1), (0, 0))).astype(jnp.bfloat16)

    # Conv weights -> im2col layout, rows ordered tap-major: row = (dy*3+dx)*C + c.
    w1_hwio = jnp.transpose(p["w1"], (2, 3, 1, 0)).astype(jnp.float32)      # (3,3,Cin,Cout)
    w1r = (jnp.zeros((3, 3, Cin, Cmid), jnp.float32)
           .at[..., :Cout].set(w1_hwio)
           .reshape(9 * Cin, Cmid))
    # Fold the 1x1 identity conv into the conv1 matmul: it only reads the centre tap
    # (row block 4*Cin:5*Cin); its output columns come first and are padded to CP.
    wid = jnp.transpose(p["wid"][:, :, 0, 0], (1, 0)).astype(jnp.float32)   # (Cin, Cout)
    wid_blk = jnp.zeros((9 * Cin, CP), jnp.float32).at[4 * Cin:5 * Cin, :Cout].set(wid)
    w1c = jnp.concatenate([wid_blk, w1r], axis=1).astype(jnp.bfloat16)      # (9*Cin, CP+Cmid)

    w2_hwio = jnp.transpose(p["w2"], (2, 3, 1, 0)).astype(jnp.float32)      # (3,3,Cout,Cout)
    w2p = (jnp.zeros((3, 3, Cmid, CP), jnp.float32)
           .at[:, :, :Cout, :Cout].set(w2_hwio)
           .reshape(3, 3 * Cmid, CP)                                        # per-dy blocks
           .astype(jnp.bfloat16))

    # BatchNorm (eval mode) folded to per-channel scale/shift; conv bias folded into shift.
    s1 = (p["bn1_gamma"] / jnp.sqrt(p["bn1_var"] + eps)).astype(jnp.float32)
    t1 = (p["bn1_beta"] + (p["b1"] - p["bn1_mean"]) * s1).astype(jnp.float32)
    s2 = (p["bn2_gamma"] / jnp.sqrt(p["bn2_var"] + eps)).astype(jnp.float32)
    t2 = (p["bn2_beta"] + (p["b2"] - p["bn2_mean"]) * s2).astype(jnp.float32)
    s1p = jnp.zeros((1, Cmid), jnp.float32).at[0, :Cout].set(s1)
    t1p = jnp.zeros((1, Cmid), jnp.float32).at[0, :Cout].set(t1)
    s2p = jnp.zeros((1, CP), jnp.float32).at[0, :Cout].set(s2)
    t2p = jnp.zeros((1, CP), jnp.float32).at[0, :Cout].set(t2)

    kernel = _make_resblock_kernel(H, W, Cin, Cout, CP, Cmid, NBLK)

    def full_spec(a):
        nd = a.ndim
        return pl.BlockSpec(a.shape, lambda b, _nd=nd: (0,) * _nd)

    out_nhwc = pl.pallas_call(
        kernel,
        out_shape=jax.ShapeDtypeStruct((N, H, W, CP), jnp.bfloat16),   # bf16 writeback
        grid_spec=pltpu.PrefetchScalarGridSpec(
            num_scalar_prefetch=0,
            grid=(N // NBLK,),
            in_specs=[
                pl.BlockSpec((NBLK, H + 2, W + 2, Cin), lambda b: (b, 0, 0, 0)),
                full_spec(w1c), full_spec(s1p), full_spec(t1p),
                full_spec(w2p), full_spec(s2p), full_spec(t2p),
            ],
            out_specs=pl.BlockSpec((NBLK, H, W, CP), lambda b: (b, 0, 0, 0)),
            scratch_shapes=[pltpu.VMEM((NBLK, H + 2, W + 16, Cmid), jnp.bfloat16)],
        ),
        compiler_params=pltpu.CompilerParams(
            dimension_semantics=("parallel",),      # independent batch items (v7x: 2 TCs)
            vmem_limit_bytes=vmem_limit_bytes,
        ),
    )(xp, w1c, s1p, t1p, w2p, s2p, t2p)

    # Drop the channel padding, back to NCHW, restore f32.
    return jnp.transpose(out_nhwc[..., :Cout], (0, 3, 1, 2)).astype(x_nchw.dtype)


def resblock2d_ref(x, p, eps=1e-5):
    """Pure-JAX NCHW reference (for correctness check)."""
    def conv(z, w, pad):
        return lax.conv_general_dilated(z, w, (1, 1), pad,
                                        dimension_numbers=("NCHW", "OIHW", "NCHW"))

    def bn(z, g, b, m, v):
        return (z - m[None, :, None, None]) / jnp.sqrt(v + eps)[None, :, None, None] \
               * g[None, :, None, None] + b[None, :, None, None]

    out = conv(x, p["w1"], ((1, 1), (1, 1))) + p["b1"][None, :, None, None]
    out = bn(out, p["bn1_gamma"], p["bn1_beta"], p["bn1_mean"], p["bn1_var"])
    out = jnp.maximum(out, 0.0)
    out = conv(out, p["w2"], ((1, 1), (1, 1))) + p["b2"][None, :, None, None]
    out = bn(out, p["bn2_gamma"], p["bn2_beta"], p["bn2_mean"], p["bn2_var"])
    ident = conv(x, p["wid"], ((0, 0), (0, 0)))
    return out + ident


def init_params(key, cin, cout, k=3):
    ks = jax.random.split(key, 8)
    p = {
        "w1": 0.1 * jax.random.normal(ks[0], (cout, cin, k, k), jnp.float32),
        "b1": 0.1 * jax.random.normal(ks[1], (cout,), jnp.float32),
        "w2": 0.1 * jax.random.normal(ks[2], (cout, cout, k, k), jnp.float32),
        "b2": 0.1 * jax.random.normal(ks[3], (cout,), jnp.float32),
        "wid": 0.1 * jax.random.normal(ks[4], (cout, cin, 1, 1), jnp.float32),
        "bn1_gamma": 1.0 + 0.1 * jax.random.normal(ks[5], (cout,), jnp.float32),
        "bn1_beta": 0.1 * jax.random.normal(ks[6], (cout,), jnp.float32),
        "bn1_mean": 0.05 * jax.random.normal(ks[7], (cout,), jnp.float32),
        "bn1_var": jnp.abs(1.0 + 0.1 * jax.random.normal(ks[5], (cout,), jnp.float32)),
        "bn2_gamma": 1.0 + 0.1 * jax.random.normal(ks[6], (cout,), jnp.float32),
        "bn2_beta": 0.1 * jax.random.normal(ks[7], (cout,), jnp.float32),
        "bn2_mean": 0.05 * jax.random.normal(ks[0], (cout,), jnp.float32),
        "bn2_var": jnp.abs(1.0 + 0.1 * jax.random.normal(ks[1], (cout,), jnp.float32)),
    }
    return p


if __name__ == "__main__":
    key = jax.random.PRNGKey(0)
    k_x, k_p = jax.random.split(key)

    N, Cin, Cout, H, W = 2, 4, 8, 16, 16
    x = jax.random.normal(k_x, (N, Cin, H, W), jnp.float32)
    params = init_params(k_p, Cin, Cout)

    out = resblock2d_pallas(x, params)
    out = jax.block_until_ready(out)

    ref = resblock2d_ref(x, params)
    assert out.shape == (N, Cout, H, W), out.shape
    # bf16 MXU inputs / bf16 output (f32 accumulation) -> ~1e-2 relative error vs. f32 ref.
    assert jnp.allclose(out, ref, atol=5e-2, rtol=5e-2), \
        float(jnp.max(jnp.abs(out - ref)))

    print("KERNEL_OK")
</pallas_src>

<mosaic_0001>
module attributes {stable_mosaic.version = 11 : i64} {
  func.func @kernel(%arg0: i32, %arg1: memref<1x18x18x4xbf16, #tpu.memory_space<vmem>>, %arg2: memref<36x136xbf16, #tpu.memory_space<vmem>>, %arg3: memref<1x8xf32, #tpu.memory_space<vmem>>, %arg4: memref<1x8xf32, #tpu.memory_space<vmem>>, %arg5: memref<3x24x128xbf16, #tpu.memory_space<vmem>>, %arg6: memref<1x128xf32, #tpu.memory_space<vmem>>, %arg7: memref<1x128xf32, #tpu.memory_space<vmem>>, %arg8: memref<1x16x16x128xbf16, #tpu.memory_space<vmem>>, %arg9: memref<1x18x32x8xbf16, #tpu.memory_space<vmem>>) attributes {dimension_semantics = [#tpu.dimension_semantics<parallel>], iteration_bounds = array<i64: 2>, scalar_prefetch = 0 : i64, scratch_operands = 1 : i64, tpu.core_type = #tpu.core_type<tc>, window_params = [{transform_indices = @transform_0, window_bounds = array<i64: 1, 18, 18, 4>}, {pipeline_mode = #tpu.pipeline_mode<synchronous>, transform_indices = @transform_1, window_bounds = array<i64: 36, 136>}, {pipeline_mode = #tpu.pipeline_mode<synchronous>, transform_indices = @transform_2, window_bounds = array<i64: 1, 8>}, {pipeline_mode = #tpu.pipeline_mode<synchronous>, transform_indices = @transform_3, window_bounds = array<i64: 1, 8>}, {pipeline_mode = #tpu.pipeline_mode<synchronous>, transform_indices = @transform_4, window_bounds = array<i64: 3, 24, 128>}, {pipeline_mode = #tpu.pipeline_mode<synchronous>, transform_indices = @transform_5, window_bounds = array<i64: 1, 128>}, {pipeline_mode = #tpu.pipeline_mode<synchronous>, transform_indices = @transform_6, window_bounds = array<i64: 1, 128>}, {transform_indices = @transform_7, window_bounds = array<i64: 1, 16, 16, 128>}]} {
    %c0 = arith.constant 0 : index
    %c0_0 = arith.constant 0 : index
    %c0_1 = arith.constant 0 : index
    %c0_2 = arith.constant 0 : index
    %0 = vector.load %arg1[%c0, %c0_0, %c0_1, %c0_2] : memref<1x18x18x4xbf16, #tpu.memory_space<vmem>>, vector<1x16x16x4xbf16>
    %1 = vector.shape_cast %0 : vector<1x16x16x4xbf16> to vector<256x4xbf16>
    %c0_3 = arith.constant 0 : index
    %c0_4 = arith.constant 0 : index
    %c1 = arith.constant 1 : index
    %c0_5 = arith.constant 0 : index
    %2 = vector.load %arg1[%c0_3, %c0_4, %c1, %c0_5] : memref<1x18x18x4xbf16, #tpu.memory_space<vmem>>, vector<1x16x16x4xbf16>
    %3 = vector.shape_cast %2 : vector<1x16x16x4xbf16> to vector<256x4xbf16>
    %c0_6 = arith.constant 0 : index
    %c0_7 = arith.constant 0 : index
    %c2 = arith.constant 2 : index
    %c0_8 = arith.constant 0 : index
    %4 = vector.load %arg1[%c0_6, %c0_7, %c2, %c0_8] : memref<1x18x18x4xbf16, #tpu.memory_space<vmem>>, vector<1x16x16x4xbf16>
    %5 = vector.shape_cast %4 : vector<1x16x16x4xbf16> to vector<256x4xbf16>
    %c0_9 = arith.constant 0 : index
    %c1_10 = arith.constant 1 : index
    %c0_11 = arith.constant 0 : index
    %c0_12 = arith.constant 0 : index
    %6 = vector.load %arg1[%c0_9, %c1_10, %c0_11, %c0_12] : memref<1x18x18x4xbf16, #tpu.memory_space<vmem>>, vector<1x16x16x4xbf16>
    %7 = vector.shape_cast %6 : vector<1x16x16x4xbf16> to vector<256x4xbf16>
    %c0_13 = arith.constant 0 : index
    %c1_14 = arith.constant 1 : index
    %c1_15 = arith.constant 1 : index
    %c0_16 = arith.constant 0 : index
    %8 = vector.load %arg1[%c0_13, %c1_14, %c1_15, %c0_16] : memref<1x18x18x4xbf16, #tpu.memory_space<vmem>>, vector<1x16x16x4xbf16>
    %9 = vector.shape_cast %8 : vector<1x16x16x4xbf16> to vector<256x4xbf16>
    %c0_17 = arith.constant 0 : index
    %c1_18 = arith.constant 1 : index
    %c2_19 = arith.constant 2 : index
    %c0_20 = arith.constant 0 : index
    %10 = vector.load %arg1[%c0_17, %c1_18, %c2_19, %c0_20] : memref<1x18x18x4xbf16, #tpu.memory_space<vmem>>, vector<1x16x16x4xbf16>
    %11 = vector.shape_cast %10 : vector<1x16x16x4xbf16> to vector<256x4xbf16>
    %c0_21 = arith.constant 0 : index
    %c2_22 = arith.constant 2 : index
    %c0_23 = arith.constant 0 : index
    %c0_24 = arith.constant 0 : index
    %12 = vector.load %arg1[%c0_21, %c2_22, %c0_23, %c0_24] : memref<1x18x18x4xbf16, #tpu.memory_space<vmem>>, vector<1x16x16x4xbf16>
    %13 = vector.shape_cast %12 : vector<1x16x16x4xbf16> to vector<256x4xbf16>
    %c0_25 = arith.constant 0 : index
    %c2_26 = arith.constant 2 : index
    %c1_27 = arith.constant 1 : index
    %c0_28 = arith.constant 0 : index
    %14 = vector.load %arg1[%c0_25, %c2_26, %c1_27, %c0_28] : memref<1x18x18x4xbf16, #tpu.memory_space<vmem>>, vector<1x16x16x4xbf16>
    %15 = vector.shape_cast %14 : vector<1x16x16x4xbf16> to vector<256x4xbf16>
    %c0_29 = arith.constant 0 : index
    %c2_30 = arith.constant 2 : index
    %c2_31 = arith.constant 2 : index
    %c0_32 = arith.constant 0 : index
    %16 = vector.load %arg1[%c0_29, %c2_30, %c2_31, %c0_32] : memref<1x18x18x4xbf16, #tpu.memory_space<vmem>>, vector<1x16x16x4xbf16>
    %17 = vector.shape_cast %16 : vector<1x16x16x4xbf16> to vector<256x4xbf16>
    %18 = tpu.concatenate %1, %3, %5, %7, %9, %11, %13, %15, %17 in 1 : vector<256x4xbf16>, vector<256x4xbf16>, vector<256x4xbf16>, vector<256x4xbf16>, vector<256x4xbf16>, vector<256x4xbf16>, vector<256x4xbf16>, vector<256x4xbf16>, vector<256x4xbf16> -> vector<256x36xbf16>
    %c0_33 = arith.constant 0 : index
    %c0_34 = arith.constant 0 : index
    %19 = vector.load %arg2[%c0_33, %c0_34] : memref<36x136xbf16, #tpu.memory_space<vmem>>, vector<36x136xbf16>
    %cst = arith.constant dense<0.000000e+00> : vector<256x136xf32>
    %20 = tpu.matmul %18, %19, %cst {dimension_numbers = #tpu.dot_dimension_numbers<[1], [0], [0], [1], [0, 0, 1, 1], [], []>} : vector<256x36xbf16>, vector<36x136xbf16>, vector<256x136xf32> -> vector<256x136xf32>
    %21 = vector.extract_strided_slice %20 {offsets = [0, 0], sizes = [256, 128], strides = [1, 1]} : vector<256x136xf32> to vector<256x128xf32>
    %22 = vector.shape_cast %21 : vector<256x128xf32> to vector<1x16x16x128xf32>
    %23 = arith.truncf %22 : vector<1x16x16x128xf32> to vector<1x16x16x128xbf16>
    %c0_35 = arith.constant 0 : index
    %c0_36 = arith.constant 0 : index
    %c0_37 = arith.constant 0 : index
    %c0_38 = arith.constant 0 : index
    %24 = vector.load %arg8[%c0_35, %c0_36, %c0_37, %c0_38] : memref<1x16x16x128xbf16, #tpu.memory_space<vmem>>, vector<1x16x16x128xbf16>
    tpu.vector_store %arg8[%c0_35, %c0_36, %c0_37, %c0_38], %23 {strides = array<i32>} : memref<1x16x16x128xbf16, #tpu.memory_space<vmem>>, vector<1x16x16x128xbf16>,
    %25 = vector.extract_strided_slice %20 {offsets = [0, 128], sizes = [256, 8], strides = [1, 1]} : vector<256x136xf32> to vector<256x8xf32>
    %c0_39 = arith.constant 0 : index
    %c0_40 = arith.constant 0 : index
    %26 = vector.load %arg3[%c0_39, %c0_40] : memref<1x8xf32, #tpu.memory_space<vmem>>, vector<1x8xf32>
    %27 = vector.broadcast %26 : vector<1x8xf32> to vector<256x8xf32>
    %28 = arith.mulf %25, %27 : vector<256x8xf32>
    %c0_41 = arith.constant 0 : index
    %c0_42 = arith.constant 0 : index
    %29 = vector.load %arg4[%c0_41, %c0_42] : memref<1x8xf32, #tpu.memory_space<vmem>>, vector<1x8xf32>
    %30 = vector.broadcast %29 : vector<1x8xf32> to vector<256x8xf32>
    %31 = arith.addf %28, %30 : vector<256x8xf32>
    %cst_43 = arith.constant 0.000000e+00 : f32
    %32 = vector.broadcast %cst_43 : f32 to vector<256x8xf32>
    %33 = arith.maximumf %31, %32 : vector<256x8xf32>
    %cst_44 = arith.constant 0.000000e+00 : bf16
    %34 = vector.broadcast %cst_44 : bf16 to vector<1x1x32x8xbf16>
    %cst_45 = arith.constant 0.000000e+00 : bf16
    %35 = vector.broadcast %cst_45 : bf16 to vector<1x16x8x8xbf16>
    %c0_46 = arith.constant 0 : index
    %c0_47 = arith.constant 0 : index
    %c0_48 = arith.constant 0 : index
    %c0_49 = arith.constant 0 : index
    %36 = vector.load %arg9[%c0_46, %c0_47, %c0_48, %c0_49] : memref<1x18x32x8xbf16, #tpu.memory_space<vmem>>, vector<1x1x32x8xbf16>
    tpu.vector_store %arg9[%c0_46, %c0_47, %c0_48, %c0_49], %34 {strides = array<i32>} : memref<1x18x32x8xbf16, #tpu.memory_space<vmem>>, vector<1x1x32x8xbf16>,
    %c0_50 = arith.constant 0 : index
    %c17 = arith.constant 17 : index
    %c0_51 = arith.constant 0 : index
    %c0_52 = arith.constant 0 : index
    %37 = vector.load %arg9[%c0_50, %c17, %c0_51, %c0_52] : memref<1x18x32x8xbf16, #tpu.memory_space<vmem>>, vector<1x1x32x8xbf16>
    tpu.vector_store %arg9[%c0_50, %c17, %c0_51, %c0_52], %34 {strides = array<i32>} : memref<1x18x32x8xbf16, #tpu.memory_space<vmem>>, vector<1x1x32x8xbf16>,
    %c0_53 = arith.constant 0 : index
    %c1_54 = arith.constant 1 : index
    %c0_55 = arith.constant 0 : index
    %c0_56 = arith.constant 0 : index
    %38 = vector.load %arg9[%c0_53, %c1_54, %c0_55, %c0_56] : memref<1x18x32x8xbf16, #tpu.memory_space<vmem>>, vector<1x16x8x8xbf16>
    tpu.vector_store %arg9[%c0_53, %c1_54, %c0_55, %c0_56], %35 {strides = array<i32>} : memref<1x18x32x8xbf16, #tpu.memory_space<vmem>>, vector<1x16x8x8xbf16>,
    %c0_57 = arith.constant 0 : index
    %c1_58 = arith.constant 1 : index
    %c24 = arith.constant 24 : index
    %c0_59 = arith.constant 0 : index
    %39 = vector.load %arg9[%c0_57, %c1_58, %c24, %c0_59] : memref<1x18x32x8xbf16, #tpu.memory_space<vmem>>, vector<1x16x8x8xbf16>
    tpu.vector_store %arg9[%c0_57, %c1_58, %c24, %c0_59], %35 {strides = array<i32>} : memref<1x18x32x8xbf16, #tpu.memory_space<vmem>>, vector<1x16x8x8xbf16>,
    %40 = vector.shape_cast %33 : vector<256x8xf32> to vector<1x16x16x8xf32>
    %41 = arith.truncf %40 : vector<1x16x16x8xf32> to vector<1x16x16x8xbf16>
    %c0_60 = arith.constant 0 : index
    %c1_61 = arith.constant 1 : index
    %c8 = arith.constant 8 : index
    %c0_62 = arith.constant 0 : index
    %42 = vector.load %arg9[%c0_60, %c1_61, %c8, %c0_62] : memref<1x18x32x8xbf16, #tpu.memory_space<vmem>>, vector<1x16x16x8xbf16>
    tpu.vector_store %arg9[%c0_60, %c1_61, %c8, %c0_62], %41 {strides = array<i32>} : memref<1x18x32x8xbf16, #tpu.memory_space<vmem>>, vector<1x16x16x8xbf16>,
    %c0_63 = arith.constant 0 : index
    %c0_64 = arith.constant 0 : index
    %c7 = arith.constant 7 : index
    %c0_65 = arith.constant 0 : index
    %43 = vector.load %arg9[%c0_63, %c0_64, %c7, %c0_65] : memref<1x18x32x8xbf16, #tpu.memory_space<vmem>>, vector<1x16x16x8xbf16>
    %44 = vector.shape_cast %43 : vector<1x16x16x8xbf16> to vector<256x8xbf16>
    %c0_66 = arith.constant 0 : index
    %c0_67 = arith.constant 0 : index
    %c8_68 = arith.constant 8 : index
    %c0_69 = arith.constant 0 : index
    %45 = vector.load %arg9[%c0_66, %c0_67, %c8_68, %c0_69] : memref<1x18x32x8xbf16, #tpu.memory_space<vmem>>, vector<1x16x16x8xbf16>
    %46 = vector.shape_cast %45 : vector<1x16x16x8xbf16> to vector<256x8xbf16>
    %c0_70 = arith.constant 0 : index
    %c0_71 = arith.constant 0 : index
    %c9 = arith.constant 9 : index
    %c0_72 = arith.constant 0 : index
    %47 = vector.load %arg9[%c0_70, %c0_71, %c9, %c0_72] : memref<1x18x32x8xbf16, #tpu.memory_space<vmem>>, vector<1x16x16x8xbf16>
    %48 = vector.shape_cast %47 : vector<1x16x16x8xbf16> to vector<256x8xbf16>
    %49 = tpu.concatenate %44, %46, %48 in 1 : vector<256x8xbf16>, vector<256x8xbf16>, vector<256x8xbf16> -> vector<256x24xbf16>
    %c0_73 = arith.constant 0 : index
    %c0_74 = arith.constant 0 : index
    %c0_75 = arith.constant 0 : index
    %50 = vector.load %arg5[%c0_73, %c0_74, %c0_75] : memref<3x24x128xbf16, #tpu.memory_space<vmem>>, vector<1x24x128xbf16>
    %51 = vector.shape_cast %50 : vector<1x24x128xbf16> to vector<24x128xbf16>
    %cst_76 = arith.constant dense<0.000000e+00> : vector<256x128xf32>
    %52 = tpu.matmul %49, %51, %cst_76 {dimension_numbers = #tpu.dot_dimension_numbers<[1], [0], [0], [1], [0, 0, 1, 1], [], []>} : vector<256x24xbf16>, vector<24x128xbf16>, vector<256x128xf32> -> vector<256x128xf32>
    %c0_77 = arith.constant 0 : index
    %c1_78 = arith.constant 1 : index
    %c7_79 = arith.constant 7 : index
    %c0_80 = arith.constant 0 : index
    %53 = vector.load %arg9[%c0_77, %c1_78, %c7_79, %c0_80] : memref<1x18x32x8xbf16, #tpu.memory_space<vmem>>, vector<1x16x16x8xbf16>
    %54 = vector.shape_cast %53 : vector<1x16x16x8xbf16> to vector<256x8xbf16>
    %c0_81 = arith.constant 0 : index
    %c1_82 = arith.constant 1 : index
    %c8_83 = arith.constant 8 : index
    %c0_84 = arith.constant 0 : index
    %55 = vector.load %arg9[%c0_81, %c1_82, %c8_83, %c0_84] : memref<1x18x32x8xbf16, #tpu.memory_space<vmem>>, vector<1x16x16x8xbf16>
    %56 = vector.shape_cast %55 : vector<1x16x16x8xbf16> to vector<256x8xbf16>
    %c0_85 = arith.constant 0 : index
    %c1_86 = arith.constant 1 : index
    %c9_87 = arith.constant 9 : index
    %c0_88 = arith.constant 0 : index
    %57 = vector.load %arg9[%c0_85, %c1_86, %c9_87, %c0_88] : memref<1x18x32x8xbf16, #tpu.memory_space<vmem>>, vector<1x16x16x8xbf16>
    %58 = vector.shape_cast %57 : vector<1x16x16x8xbf16> to vector<256x8xbf16>
    %59 = tpu.concatenate %54, %56, %58 in 1 : vector<256x8xbf16>, vector<256x8xbf16>, vector<256x8xbf16> -> vector<256x24xbf16>
    %c1_89 = arith.constant 1 : index
    %c0_90 = arith.constant 0 : index
    %c0_91 = arith.constant 0 : index
    %60 = vector.load %arg5[%c1_89, %c0_90, %c0_91] : memref<3x24x128xbf16, #tpu.memory_space<vmem>>, vector<1x24x128xbf16>
    %61 = vector.shape_cast %60 : vector<1x24x128xbf16> to vector<24x128xbf16>
    %cst_92 = arith.constant dense<0.000000e+00> : vector<256x128xf32>
    %62 = tpu.matmul %59, %61, %cst_92 {dimension_numbers = #tpu.dot_dimension_numbers<[1], [0], [0], [1], [0, 0, 1, 1], [], []>} : vector<256x24xbf16>, vector<24x128xbf16>, vector<256x128xf32> -> vector<256x128xf32>
    %63 = arith.addf %52, %62 : vector<256x128xf32>
    %c0_93 = arith.constant 0 : index
    %c2_94 = arith.constant 2 : index
    %c7_95 = arith.constant 7 : index
    %c0_96 = arith.constant 0 : index
    %64 = vector.load %arg9[%c0_93, %c2_94, %c7_95, %c0_96] : memref<1x18x32x8xbf16, #tpu.memory_space<vmem>>, vector<1x16x16x8xbf16>
    %65 = vector.shape_cast %64 : vector<1x16x16x8xbf16> to vector<256x8xbf16>
    %c0_97 = arith.constant 0 : index
    %c2_98 = arith.constant 2 : index
    %c8_99 = arith.constant 8 : index
    %c0_100 = arith.constant 0 : index
    %66 = vector.load %arg9[%c0_97, %c2_98, %c8_99, %c0_100] : memref<1x18x32x8xbf16, #tpu.memory_space<vmem>>, vector<1x16x16x8xbf16>
    %67 = vector.shape_cast %66 : vector<1x16x16x8xbf16> to vector<256x8xbf16>
    %c0_101 = arith.constant 0 : index
    %c2_102 = arith.constant 2 : index
    %c9_103 = arith.constant 9 : index
    %c0_104 = arith.constant 0 : index
    %68 = vector.load %arg9[%c0_101, %c2_102, %c9_103, %c0_104] : memref<1x18x32x8xbf16, #tpu.memory_space<vmem>>, vector<1x16x16x8xbf16>
    %69 = vector.shape_cast %68 : vector<1x16x16x8xbf16> to vector<256x8xbf16>
    %70 = tpu.concatenate %65, %67, %69 in 1 : vector<256x8xbf16>, vector<256x8xbf16>, vector<256x8xbf16> -> vector<256x24xbf16>
    %c2_105 = arith.constant 2 : index
    %c0_106 = arith.constant 0 : index
    %c0_107 = arith.constant 0 : index
    %71 = vector.load %arg5[%c2_105, %c0_106, %c0_107] : memref<3x24x128xbf16, #tpu.memory_space<vmem>>, vector<1x24x128xbf16>
    %72 = vector.shape_cast %71 : vector<1x24x128xbf16> to vector<24x128xbf16>
    %cst_108 = arith.constant dense<0.000000e+00> : vector<256x128xf32>
    %73 = tpu.matmul %70, %72, %cst_108 {dimension_numbers = #tpu.dot_dimension_numbers<[1], [0], [0], [1], [0, 0, 1, 1], [], []>} : vector<256x24xbf16>, vector<24x128xbf16>, vector<256x128xf32> -> vector<256x128xf32>
    %74 = arith.addf %63, %73 : vector<256x128xf32>
    %c0_109 = arith.constant 0 : index
    %c0_110 = arith.constant 0 : index
    %75 = vector.load %arg6[%c0_109, %c0_110] : memref<1x128xf32, #tpu.memory_space<vmem>>, vector<1x128xf32>
    %76 = vector.broadcast %75 : vector<1x128xf32> to vector<256x128xf32>
    %77 = arith.mulf %74, %76 : vector<256x128xf32>
    %c0_111 = arith.constant 0 : index
    %c0_112 = arith.constant 0 : index
    %78 = vector.load %arg7[%c0_111, %c0_112] : memref<1x128xf32, #tpu.memory_space<vmem>>, vector<1x128xf32>
    %79 = vector.broadcast %78 : vector<1x128xf32> to vector<256x128xf32>
    %80 = arith.addf %77, %79 : vector<256x128xf32>
    %c0_113 = arith.constant 0 : index
    %c0_114 = arith.constant 0 : index
    %c0_115 = arith.constant 0 : index
    %c0_116 = arith.constant 0 : index
    %81 = vector.load %arg8[%c0_113, %c0_114, %c0_115, %c0_116] : memref<1x16x16x128xbf16, #tpu.memory_space<vmem>>, vector<1x16x16x128xbf16>
    %82 = arith.extf %81 : vector<1x16x16x128xbf16> to vector<1x16x16x128xf32>
    %83 = vector.shape_cast %80 : vector<256x128xf32> to vector<1x16x16x128xf32>
    %84 = arith.addf %82, %83 : vector<1x16x16x128xf32>
    %85 = arith.truncf %84 : vector<1x16x16x128xf32> to vector<1x16x16x128xbf16>
    %c0_117 = arith.constant 0 : index
    %c0_118 = arith.constant 0 : index
    %c0_119 = arith.constant 0 : index
    %c0_120 = arith.constant 0 : index
    %86 = vector.load %arg8[%c0_117, %c0_118, %c0_119, %c0_120] : memref<1x16x16x128xbf16, #tpu.memory_space<vmem>>, vector<1x16x16x128xbf16>
    tpu.vector_store %arg8[%c0_117, %c0_118, %c0_119, %c0_120], %85 {strides = array<i32>} : memref<1x16x16x128xbf16, #tpu.memory_space<vmem>>, vector<1x16x16x128xbf16>,
    return
  }
  func.func @transform_0(%arg0: i32) -> (i32, i32, i32, i32) {
    %c0_i32 = arith.constant 0 : i32
    %c0_i32_0 = arith.constant 0 : i32
    %c0_i32_1 = arith.constant 0 : i32
    %c0_i32_2 = arith.constant 0 : i32
    return %arg0, %c0_i32, %c0_i32_0, %c0_i32_1 : i32, i32, i32, i32
  }
  func.func @transform_1(%arg0: i32) -> (i32, i32) {
    %c0_i32 = arith.constant 0 : i32
    %c0_i32_0 = arith.constant 0 : i32
    %c0_i32_1 = arith.constant 0 : i32
    return %c0_i32, %c0_i32_0 : i32, i32
  }
  func.func @transform_2(%arg0: i32) -> (i32, i32) {
    %c0_i32 = arith.constant 0 : i32
    %c0_i32_0 = arith.constant 0 : i32
    %c0_i32_1 = arith.constant 0 : i32
    return %c0_i32, %c0_i32_0 : i32, i32
  }
  func.func @transform_3(%arg0: i32) -> (i32, i32) {
    %c0_i32 = arith.constant 0 : i32
    %c0_i32_0 = arith.constant 0 : i32
    %c0_i32_1 = arith.constant 0 : i32
    return %c0_i32, %c0_i32_0 : i32, i32
  }
  func.func @transform_4(%arg0: i32) -> (i32, i32, i32) {
    %c0_i32 = arith.constant 0 : i32
    %c0_i32_0 = arith.constant 0 : i32
    %c0_i32_1 = arith.constant 0 : i32
    %c0_i32_2 = arith.constant 0 : i32
    return %c0_i32, %c0_i32_0, %c0_i32_1 : i32, i32, i32
  }
  func.func @transform_5(%arg0: i32) -> (i32, i32) {
    %c0_i32 = arith.constant 0 : i32
    %c0_i32_0 = arith.constant 0 : i32
    %c0_i32_1 = arith.constant 0 : i32
    return %c0_i32, %c0_i32_0 : i32, i32
  }
  func.func @transform_6(%arg0: i32) -> (i32, i32) {
    %c0_i32 = arith.constant 0 : i32
    %c0_i32_0 = arith.constant 0 : i32
    %c0_i32_1 = arith.constant 0 : i32
    return %c0_i32, %c0_i32_0 : i32, i32
  }
  func.func @transform_7(%arg0: i32) -> (i32, i32, i32, i32) {
    %c0_i32 = arith.constant 0 : i32
    %c0_i32_0 = arith.constant 0 : i32
    %c0_i32_1 = arith.constant 0 : i32
    %c0_i32_2 = arith.constant 0 : i32
    return %arg0, %c0_i32, %c0_i32_0, %c0_i32_1 : i32, i32, i32, i32
  }
}

</mosaic_0001>

<llo_original>
// kernel: tpu_custom_call.1
$region0: #{tpu_custom_call.1}
  #allocation0 [shape = 'u32[]', space=smem, size = 0x4, offset = 0x4, fixed_abs, tag = 'smem constant byte address 0x4 - core index']
  #allocation1 [shape = 'u32[72,128]{1,0:T(1,128)}', space=vmem, size = 0x9000, scoped, tag = 'internal scratch']
  #allocation2 [shape = 'bf16[1,18,32,8]{3,2,1,0:T(8,128)(2,1)}', space=vmem, size = 0x24000, scoped, tag = 'scratch operand']
  %s0 = inlined_call_operand.vmem [shape: bf16[2,18,18,4], index: 0, kind: input, shape index: {}]
  %s1 = inlined_call_operand.vmem [shape: bf16[36,136], index: 1, kind: input, shape index: {}]
  %s2 = inlined_call_operand.vmem [shape: f32[1,8], index: 2, kind: input, shape index: {}]
  %s3 = inlined_call_operand.vmem [shape: f32[1,8], index: 3, kind: input, shape index: {}]
  %s4 = inlined_call_operand.vmem [shape: bf16[3,24,128], index: 4, kind: input, shape index: {}]
  %s5 = inlined_call_operand.vmem [shape: f32[1,128], index: 5, kind: input, shape index: {}]
  %s6 = inlined_call_operand.vmem [shape: f32[1,128], index: 6, kind: input, shape index: {}]
  %s7 = inlined_call_operand.hbm [shape: bf16[2,16,16,128], index: 7, kind: output, shape index: {}]
  %s8 = sld [smem:[#allocation0]]
  $region61: #{tpu_custom_call.1} parent=0
    _
  %s10 = ssub.s32 1, %s8
  %s11 = scalar_select 0, %s10, %s8
  $region1: #{tpu_custom_call.1} parent=0
    #allocation3 [shape = 'u8[131072]{0}', space=vmem, size = 0x20000, scoped, tag = 'output window, operand 0']
    #allocation4 [shape = 's32[2]{0}', space=sflag, size = 0x8, scoped, tag = 'scoped memory for tpu_custom_call.1']
    %12 = vsyncpa [#allocation4], 0
    %s13 = scalar_lea.sflag [#allocation4], 1
    %14 = vsyncpa %s13, 0
    loop: start=0, step=1, limit=4
    $region2: #{tpu_custom_call.1} parent=1 // loop_pre_header
      _
    $region3: #{tpu_custom_call.1} parent=1 // loop_header
      %s16 = sphi 0, %s20
      %p17 = scmp.ge.s32.totalorder %s16, 4
      %s26 = sphi 0, %s28
      %s29 = sphi 0, %s26
      %s30 = sphi 0, %s29
      %s46 = sphi 0, %s30
      %s50 = sphi 0, %s50
      %s52 = sphi 0, %s50
      %s53 = sphi 0, %s52
      %s67 = sphi 0, %s53
      %s71 = sphi 0, %s71
      %s73 = sphi 0, %s71
      %s74 = sphi 0, %s73
      %s88 = sphi 0, %s74
      %s92 = sphi 0, %s92
      %s94 = sphi 0, %s92
      %s95 = sphi 0, %s94
      %s109 = sphi 0, %s95
      %s113 = sphi 0, %s113
      %s115 = sphi 0, %s113
      %s116 = sphi 0, %s115
      %s130 = sphi 0, %s116
      %s134 = sphi 0, %s134
      %s136 = sphi 0, %s134
      %s137 = sphi 0, %s136
      %s151 = sphi 0, %s137
      %s155 = sphi 0, %s155
      %s157 = sphi 0, %s155
      %s158 = sphi 0, %s157
      %s172 = sphi 0, %s158
      %s178 = sphi 0, %s180
      %s181 = sphi 0, %s178
      %s182 = sphi 0, %s181
      %s198 = sphi 0, %s182
    $region4: #{tpu_custom_call.1} parent=1 // loop_header_branch
      %19 = sbr.rel (%p17) target = $region8
    $region5: #{tpu_custom_call.1} parent=1 // loop_body
      %s21 = ssub.s32 %s16, 1
      %s22 = ssub.s32 %s16, 2
      %s23 = sadd.s32 %s16, 1
      %s24 = ssub.s32 %s16, %s23
      %p25 = scmp.eq.s32.totalorder %s24, 0
      %s27 = sadd.s32 %s26, 1
      %s28 = scalar_select %p25, %s26, %s27
      %p31 = pneg %p25
      %p32 = scmp.eq.s32.totalorder %s16, 1
      %p33 = por %p31, %p32
      %p34 = scmp.ne.s32.totalorder %s26, %s29
      %p35 = scmp.eq.s32.totalorder %s16, 0
      %p36 = por %p34, %p35
      %p37 = scmp.ne.s32.totalorder %s26, %s29
      %p38 = scmp.eq.s32.totalorder %s21, 1
      %p39 = por %p37, %p38
      %p40 = scmp.ne.s32.totalorder %s29, %s30
      %p41 = scmp.eq.s32.totalorder %s21, 0
      %p42 = por %p40, %p41
      %p43 = scmp.ne.s32.totalorder %s29, %s30
      %p44 = scmp.eq.s32.totalorder %s22, 1
      %p45 = por %p43, %p44
      %p47 = scmp.ne.s32.totalorder %s30, %s46
      %p48 = scmp.eq.s32.totalorder %s22, 0
      %p49 = por %p47, %p48
      %s51 = sadd.s32 %s50, 1
      %p54 = scmp.eq.s32.totalorder %s16, 1
      %p55 = scmp.ne.s32.totalorder %s50, %s52
      %p56 = scmp.eq.s32.totalorder %s16, 0
      %p57 = por %p55, %p56
      %p58 = scmp.ne.s32.totalorder %s50, %s52
      %p59 = scmp.eq.s32.totalorder %s21, 1
      %p60 = por %p58, %p59
      %p61 = scmp.ne.s32.totalorder %s52, %s53
      %p62 = scmp.eq.s32.totalorder %s21, 0
      %p63 = por %p61, %p62
      %p64 = scmp.ne.s32.totalorder %s52, %s53
      %p65 = scmp.eq.s32.totalorder %s22, 1
      %p66 = por %p64, %p65
      %p68 = scmp.ne.s32.totalorder %s53, %s67
      %p69 = scmp.eq.s32.totalorder %s22, 0
      %p70 = por %p68, %p69
      %s72 = sadd.s32 %s71, 1
      %p75 = scmp.eq.s32.totalorder %s16, 1
      %p76 = scmp.ne.s32.totalorder %s71, %s73
      %p77 = scmp.eq.s32.totalorder %s16, 0
      %p78 = por %p76, %p77
      %p79 = scmp.ne.s32.totalorder %s71, %s73
      %p80 = scmp.eq.s32.totalorder %s21, 1
      %p81 = por %p79, %p80
      %p82 = scmp.ne.s32.totalorder %s73, %s74
      %p83 = scmp.eq.s32.totalorder %s21, 0
      %p84 = por %p82, %p83
      %p85 = scmp.ne.s32.totalorder %s73, %s74
      %p86 = scmp.eq.s32.totalorder %s22, 1
      %p87 = por %p85, %p86
      %p89 = scmp.ne.s32.totalorder %s74, %s88
      %p90 = scmp.eq.s32.totalorder %s22, 0
      %p91 = por %p89, %p90
      %s93 = sadd.s32 %s92, 1
      %p96 = scmp.eq.s32.totalorder %s16, 1
      %p97 = scmp.ne.s32.totalorder %s92, %s94
      %p98 = scmp.eq.s32.totalorder %s16, 0
      %p99 = por %p97, %p98
      %p100 = scmp.ne.s32.totalorder %s92, %s94
      %p101 = scmp.eq.s32.totalorder %s21, 1
      %p102 = por %p100, %p101
      %p103 = scmp.ne.s32.totalorder %s94, %s95
      %p104 = scmp.eq.s32.totalorder %s21, 0
      %p105 = por %p103, %p104
      %p106 = scmp.ne.s32.totalorder %s94, %s95
      %p107 = scmp.eq.s32.totalorder %s22, 1
      %p108 = por %p106, %p107
      %p110 = scmp.ne.s32.totalorder %s95, %s109
      %p111 = scmp.eq.s32.totalorder %s22, 0
      %p112 = por %p110, %p111
      %s114 = sadd.s32 %s113, 1
      %p117 = scmp.eq.s32.totalorder %s16, 1
      %p118 = scmp.ne.s32.totalorder %s113, %s115
      %p119 = scmp.eq.s32.totalorder %s16, 0
      %p120 = por %p118, %p119
      %p121 = scmp.ne.s32.totalorder %s113, %s115
      %p122 = scmp.eq.s32.totalorder %s21, 1
      %p123 = por %p121, %p122
      %p124 = scmp.ne.s32.totalorder %s115, %s116
      %p125 = scmp.eq.s32.totalorder %s21, 0
      %p126 = por %p124, %p125
      %p127 = scmp.ne.s32.totalorder %s115, %s116
      %p128 = scmp.eq.s32.totalorder %s22, 1
      %p129 = por %p127, %p128
      %p131 = scmp.ne.s32.totalorder %s116, %s130
      %p132 = scmp.eq.s32.totalorder %s22, 0
      %p133 = por %p131, %p132
      %s135 = sadd.s32 %s134, 1
      %p138 = scmp.eq.s32.totalorder %s16, 1
      %p139 = scmp.ne.s32.totalorder %s134, %s136
      %p140 = scmp.eq.s32.totalorder %s16, 0
      %p141 = por %p139, %p140
      %p142 = scmp.ne.s32.totalorder %s134, %s136
      %p143 = scmp.eq.s32.totalorder %s21, 1
      %p144 = por %p142, %p143
      %p145 = scmp.ne.s32.totalorder %s136, %s137
      %p146 = scmp.eq.s32.totalorder %s21, 0
      %p147 = por %p145, %p146
      %p148 = scmp.ne.s32.totalorder %s136, %s137
      %p149 = scmp.eq.s32.totalorder %s22, 1
      %p150 = por %p148, %p149
      %p152 = scmp.ne.s32.totalorder %s137, %s151
      %p153 = scmp.eq.s32.totalorder %s22, 0
      %p154 = por %p152, %p153
      %s156 = sadd.s32 %s155, 1
      %p159 = scmp.eq.s32.totalorder %s16, 1
      %p160 = scmp.ne.s32.totalorder %s155, %s157
      %p161 = scmp.eq.s32.totalorder %s16, 0
      %p162 = por %p160, %p161
      %p163 = scmp.ne.s32.totalorder %s155, %s157
      %p164 = scmp.eq.s32.totalorder %s21, 1
      %p165 = por %p163, %p164
      %p166 = scmp.ne.s32.totalorder %s157, %s158
      %p167 = scmp.eq.s32.totalorder %s21, 0
      %p168 = por %p166, %p167
      %p169 = scmp.ne.s32.totalorder %s157, %s158
      %p170 = scmp.eq.s32.totalorder %s22, 1
      %p171 = por %p169, %p170
      %p173 = scmp.ne.s32.totalorder %s158, %s172
      %p174 = scmp.eq.s32.totalorder %s22, 0
      %p175 = por %p173, %p174
      %s176 = ssub.s32 %s16, %s23
      %p177 = scmp.eq.s32.totalorder %s176, 0
      %s179 = sadd.s32 %s178, 1
      %s180 = scalar_select %p177, %s178, %s179
      %p183 = pneg %p177
      %p184 = scmp.eq.s32.totalorder %s16, 1
      %p185 = por %p183, %p184
      %p186 = scmp.ne.s32.totalorder %s178, %s181
      %p187 = scmp.eq.s32.totalorder %s16, 0
      %p188 = por %p186, %p187
      %p189 = scmp.ne.s32.totalorder %s178, %s181
      %p190 = scmp.eq.s32.totalorder %s21, 1
      %p191 = por %p189, %p190
      %p192 = scmp.ne.s32.totalorder %s181, %s182
      %p193 = scmp.eq.s32.totalorder %s21, 0
      %p194 = por %p192, %p193
      %p195 = scmp.ne.s32.totalorder %s181, %s182
      %p196 = scmp.eq.s32.totalorder %s22, 1
      %p197 = por %p195, %p196
      %p199 = scmp.ne.s32.totalorder %s182, %s198
      %p200 = scmp.eq.s32.totalorder %s22, 0
      %p201 = por %p199, %p200
      %p202 = scmp.le.s32.totalorder 1, %s16
      %p203 = scmp.lt.s32.totalorder %s16, 3
      %p204 = pnand %p202, %p203
      %p205 = pneg %p204
      // Predicated region
      $region9: #{tpu_custom_call.1} parent=5 // pred_check
        _
      $region10: #{tpu_custom_call.1} parent=5 // pred_check_branch
        %207 = sbr.rel (%p204) target = $region12
      $region11: #{tpu_custom_call.1} parent=5 // pred_region
        %s208 = ssub.s32 %s16, 1
        // Predicated region
        $region13: #{tpu_custom_call.1} parent=11 // pred_check
          %p209 = pneg %p63
        $region14: #{tpu_custom_call.1} parent=11 // pred_check_branch
          %211 = sbr.rel (%p209) target = $region16
        $region15: #{tpu_custom_call.1} parent=11 // pred_region
          _
        $region16: #{tpu_custom_call.1} parent=11 // pred_fallthru
          _
        // Predicated region
        $region17: #{tpu_custom_call.1} parent=11 // pred_check
          %p212 = pneg %p84
        $region18: #{tpu_custom_call.1} parent=11 // pred_check_branch
          %214 = sbr.rel (%p212) target = $region20
        $region19: #{tpu_custom_call.1} parent=11 // pred_region
          _
        $region20: #{tpu_custom_call.1} parent=11 // pred_fallthru
          _
        // Predicated region
        $region21: #{tpu_custom_call.1} parent=11 // pred_check
          %p215 = pneg %p105
        $region22: #{tpu_custom_call.1} parent=11 // pred_check_branch
          %217 = sbr.rel (%p215) target = $region24
        $region23: #{tpu_custom_call.1} parent=11 // pred_region
          _
        $region24: #{tpu_custom_call.1} parent=11 // pred_fallthru
          _
        // Predicated region
        $region25: #{tpu_custom_call.1} parent=11 // pred_check
          %p218 = pneg %p126
        $region26: #{tpu_custom_call.1} parent=11 // pred_check_branch
          %220 = sbr.rel (%p218) target = $region28
        $region27: #{tpu_custom_call.1} parent=11 // pred_region
          _
        $region28: #{tpu_custom_call.1} parent=11 // pred_fallthru
          _
        // Predicated region
        $region29: #{tpu_custom_call.1} parent=11 // pred_check
          %p221 = pneg %p147
        $region30: #{tpu_custom_call.1} parent=11 // pred_check_branch
          %223 = sbr.rel (%p221) target = $region32
        $region31: #{tpu_custom_call.1} parent=11 // pred_region
          _
        $region32: #{tpu_custom_call.1} parent=11 // pred_fallthru
          _
        // Predicated region
        $region33: #{tpu_custom_call.1} parent=11 // pred_check
          %p224 = pneg %p168
        $region34: #{tpu_custom_call.1} parent=11 // pred_check_branch
          %226 = sbr.rel (%p224) target = $region36
        $region35: #{tpu_custom_call.1} parent=11 // pred_region
          _
        $region36: #{tpu_custom_call.1} parent=11 // pred_fallthru
          _
      $region12: #{tpu_custom_call.1} parent=5 // pred_fallthru
        _
      %p227 = scmp.lt.s32.totalorder %s16, 2
      // Predicated region
      $region37: #{tpu_custom_call.1} parent=5 // pred_check
        %p228 = pneg %p227
      $region38: #{tpu_custom_call.1} parent=5 // pred_check_branch
        %230 = sbr.rel (%p228) target = $region40
      $region39: #{tpu_custom_call.1} parent=5 // pred_region
        // Predicated region
        $region41: #{tpu_custom_call.1} parent=39 // pred_check
          %p231 = pneg %p36
        $region42: #{tpu_custom_call.1} parent=39 // pred_check_branch
          %233 = sbr.rel (%p231) target = $region44
        $region43: #{tpu_custom_call.1} parent=39 // pred_region
          %p234 = scmp.lt.s32.totalorder %s16, 1
          %s235 = scalar_select %p234, %s16, 1
          %s236 = smul.addr %s235, 54
          %s237 = smul.addr %s236, 4
          %s238 = scalar_lea.vmem %s0, %s237
        $region44: #{tpu_custom_call.1} parent=39 // pred_fallthru
          _
      $region40: #{tpu_custom_call.1} parent=5 // pred_fallthru
        _
      %p239 = scmp.le.s32.totalorder 1, %s16
      %p240 = scmp.lt.s32.totalorder %s16, 3
      %p241 = pnand %p239, %p240
      %p242 = pneg %p241
      // Predicated region
      $region45: #{tpu_custom_call.1} parent=5 // pred_check
        _
      $region46: #{tpu_custom_call.1} parent=5 // pred_check_branch
        %244 = sbr.rel (%p241) target = $region48
      $region47: #{tpu_custom_call.1} parent=5 // pred_region
        %s245 = ssub.s32 %s16, 1
        %p246 = scmp.lt.s32.totalorder %s21, 1
        %s247 = scalar_select %p246, %s21, 1
        %s248 = smul.addr %s247, 54
        %s249 = smul.addr %s248, 4
        %s250 = scalar_lea.vmem %s0, %s249
        %p251 = pneg %p42
        %p252 = pneg %p39
        %p253 = pneg %p63
        %p254 = pneg %p60
        %p255 = pneg %p84
        %p256 = pneg %p81
        %p257 = pneg %p105
        %p258 = pneg %p102
        %p259 = pneg %p126
        %p260 = pneg %p123
        %p261 = pneg %p147
        %p262 = pneg %p144
        %p263 = pneg %p168
        %p264 = pneg %p165
        %p265 = pneg %p194
        %p266 = pneg %p191
        %s267 = sand.u32 %s181, 1
        %s268 = scalar_lea.sflag [#allocation4], %s267
        %s269 = sand.u32 %s181, 1
        %s270 = smul.addr %s269, 128
        %s271 = scalar_lea.vmem [#allocation3], %s270
        %p272 = scmp.lt.s32.totalorder %s21, 1
        %s273 = scalar_select %p272, %s21, 1
        %s274 = smul.addr %s273, 54
        %s275 = smul.addr %s274, 4
        %s276 = scalar_lea.vmem %s0, %s275
        %v278 = vld [vmem:[%s276] sm:$0xf]
        %v279 = vld [vmem:[%s276 + $0x4] sm:$0xf]
        %v280 = vld [vmem:[%s276 + $0xc] sm:$0xf]
        %v281 = vld [vmem:[%s276 + $0x10] sm:$0xf]
        %v282 = vld [vmem:[%s276 + $0x18] sm:$0xf]
        %v283 = vld [vmem:[%s276 + $0x1c] sm:$0xf]
        %v284 = vld [vmem:[%s276 + $0x24] sm:$0xf]
        %v285 = vld [vmem:[%s276 + $0x28] sm:$0xf]
        %v286 = vld [vmem:[%s276 + $0x30] sm:$0xf]
        %v287 = vld [vmem:[%s276 + $0x34] sm:$0xf]
        %v288 = vld [vmem:[%s276 + $0x3c] sm:$0xf]
        %v289 = vld [vmem:[%s276 + $0x40] sm:$0xf]
        %v290 = vld [vmem:[%s276 + $0x48] sm:$0xf]
        %v291 = vld [vmem:[%s276 + $0x4c] sm:$0xf]
        %v292 = vld [vmem:[%s276 + $0x54] sm:$0xf]
        %v293 = vld [vmem:[%s276 + $0x58] sm:$0xf]
        %v294 = vld [vmem:[%s276 + $0x60] sm:$0xf]
        %v295 = vld [vmem:[%s276 + $0x64] sm:$0xf]
        %v296 = vld [vmem:[%s276 + $0x6c] sm:$0xf]
        %v297 = vld [vmem:[%s276 + $0x70] sm:$0xf]
        %v298 = vld [vmem:[%s276 + $0x78] sm:$0xf]
        %v299 = vld [vmem:[%s276 + $0x7c] sm:$0xf]
        %v300 = vld [vmem:[%s276 + $0x84] sm:$0xf]
        %v301 = vld [vmem:[%s276 + $0x88] sm:$0xf]
        %v302 = vld [vmem:[%s276 + $0x90] sm:$0xf]
        %v303 = vld [vmem:[%s276 + $0x94] sm:$0xf]
        %v304 = vld [vmem:[%s276 + $0x9c] sm:$0xf]
        %v305 = vld [vmem:[%s276 + $0xa0] sm:$0xf]
        %v306 = vld [vmem:[%s276 + $0xa8] sm:$0xf]
        %v307 = vld [vmem:[%s276 + $0xac] sm:$0xf]
        %v308 = vld [vmem:[%s276 + $0xb4] sm:$0xf]
        %v309 = vld [vmem:[%s276 + $0xb8] sm:$0xf]
        %v310 = vld [vmem:[%s276 + $0x8] sm:$0x1]
        %v311 = vld [vmem:[%s276 + $0x14] sm:$0x1]
        %v312 = vld [vmem:[%s276 + $0x20] sm:$0x1]
        %v313 = vld [vmem:[%s276 + $0x2c] sm:$0x1]
        %v314 = vld [vmem:[%s276 + $0x38] sm:$0x1]
        %v315 = vld [vmem:[%s276 + $0x44] sm:$0x1]
        %v316 = vld [vmem:[%s276 + $0x50] sm:$0x1]
        %v317 = vld [vmem:[%s276 + $0x5c] sm:$0x1]
        %v318 = vld [vmem:[%s276 + $0x68] sm:$0x1]
        %v319 = vld [vmem:[%s276 + $0x74] sm:$0x1]
        %v320 = vld [vmem:[%s276 + $0x80] sm:$0x1]
        %v321 = vld [vmem:[%s276 + $0x8c] sm:$0x1]
        %v322 = vld [vmem:[%s276 + $0x98] sm:$0x1]
        %v323 = vld [vmem:[%s276 + $0xa4] sm:$0x1]
        %v324 = vld [vmem:[%s276 + $0xb0] sm:$0x1]
        %v325 = vld [vmem:[%s276 + $0xbc] sm:$0x1]
        %vm326 = vsmask.f32 3328
        %vm327 = vsmask.f32 7440
        %vm328 = vmor %vm326, %vm327
        %v330 = vshrl.u32 %v278, 16
        %v332 = vrot.slane %v330, 4
        %v333 = vshll.u32 %v278, 16
        %v335 = vrot.slane %v333, 5
        %v336 = vor.u32 %v332, %v335
        %v337 = vrot.slane %v336, 4
        %v339 = vshll.u32 %v279, 16
        %v341 = vrot.slane %v339, 5
        %v342 = vsel %vm328, %v337, %v341
        %v343 = vshrl.u32 %v279, 16
        %v345 = vrot.slane %v343, 4
        %v346 = vor.u32 %v345, %v341
        %v347 = vrot.slane %v346, 4
        %v349 = vshll.u32 %v310, 16
        %v351 = vrot.slane %v349, 5
        %v352 = vsel %vm328, %v347, %v351
        %v354 = vshrl.u32 %v280, 16
        %v356 = vrot.slane %v354, 4
        %v357 = vshll.u32 %v280, 16
        %v359 = vrot.slane %v357, 5
        %v360 = vor.u32 %v356, %v359
        %v361 = vrot.slane %v360, 4
        %v363 = vshll.u32 %v281, 16
        %v365 = vrot.slane %v363, 5
        %v366 = vsel %vm328, %v361, %v365
        %v367 = vshrl.u32 %v281, 16
        %v369 = vrot.slane %v367, 4
        %v370 = vor.u32 %v369, %v365
        %v371 = vrot.slane %v370, 4
        %v373 = vshll.u32 %v311, 16
        %v375 = vrot.slane %v373, 5
        %v376 = vsel %vm328, %v371, %v375
        %v378 = vshrl.u32 %v282, 16
        %v380 = vrot.slane %v378, 4
        %v381 = vshll.u32 %v282, 16
        %v383 = vrot.slane %v381, 5
        %v384 = vor.u32 %v380, %v383
        %v385 = vrot.slane %v384, 4
        %v387 = vshll.u32 %v283, 16
        %v389 = vrot.slane %v387, 5
        %v390 = vsel %vm328, %v385, %v389
        %v391 = vshrl.u32 %v283, 16
        %v393 = vrot.slane %v391, 4
        %v394 = vor.u32 %v393, %v389
        %v395 = vrot.slane %v394, 4
        %v397 = vshll.u32 %v312, 16
        %v399 = vrot.slane %v397, 5
        %v400 = vsel %vm328, %v395, %v399
        %v402 = vshrl.u32 %v284, 16
        %v404 = vrot.slane %v402, 4
        %v405 = vshll.u32 %v284, 16
        %v407 = vrot.slane %v405, 5
        %v408 = vor.u32 %v404, %v407
        %v409 = vrot.slane %v408, 4
        %v411 = vshll.u32 %v285, 16
        %v413 = vrot.slane %v411, 5
        %v414 = vsel %vm328, %v409, %v413
        %v415 = vshrl.u32 %v285, 16
        %v417 = vrot.slane %v415, 4
        %v418 = vor.u32 %v417, %v413
        %v419 = vrot.slane %v418, 4
        %v421 = vshll.u32 %v313, 16
        %v423 = vrot.slane %v421, 5
        %v424 = vsel %vm328, %v419, %v423
        %v426 = vshrl.u32 %v286, 16
        %v428 = vrot.slane %v426, 4
        %v429 = vshll.u32 %v286, 16
        %v431 = vrot.slane %v429, 5
        %v432 = vor.u32 %v428, %v431
        %v433 = vrot.slane %v432, 4
        %v435 = vshll.u32 %v287, 16
        %v437 = vrot.slane %v435, 5
        %v438 = vsel %vm328, %v433, %v437
        %v439 = vshrl.u32 %v287, 16
        %v441 = vrot.slane %v439, 4
        %v442 = vor.u32 %v441, %v437
        %v443 = vrot.slane %v442, 4
        %v445 = vshll.u32 %v314, 16
        %v447 = vrot.slane %v445, 5
        %v448 = vsel %vm328, %v443, %v447
        %v450 = vshrl.u32 %v288, 16
        %v452 = vrot.slane %v450, 4
        %v453 = vshll.u32 %v288, 16
        %v455 = vrot.slane %v453, 5
        %v456 = vor.u32 %v452, %v455
        %v457 = vrot.slane %v456, 4
        %v459 = vshll.u32 %v289, 16
        %v461 = vrot.slane %v459, 5
        %v462 = vsel %vm328, %v457, %v461
        %v463 = vshrl.u32 %v289, 16
        %v465 = vrot.slane %v463, 4
        %v466 = vor.u32 %v465, %v461
        %v467 = vrot.slane %v466, 4
        %v469 = vshll.u32 %v315, 16
        %v471 = vrot.slane %v469, 5
        %v472 = vsel %vm328, %v467, %v471
        %v474 = vshrl.u32 %v290, 16
        %v476 = vrot.slane %v474, 4
        %v477 = vshll.u32 %v290, 16
        %v479 = vrot.slane %v477, 5
        %v480 = vor.u32 %v476, %v479
        %v481 = vrot.slane %v480, 4
        %v483 = vshll.u32 %v291, 16
        %v485 = vrot.slane %v483, 5
        %v486 = vsel %vm328, %v481, %v485
        %v487 = vshrl.u32 %v291, 16
        %v489 = vrot.slane %v487, 4
        %v490 = vor.u32 %v489, %v485
        %v491 = vrot.slane %v490, 4
        %v493 = vshll.u32 %v316, 16
        %v495 = vrot.slane %v493, 5
        %v496 = vsel %vm328, %v491, %v495
        %v498 = vshrl.u32 %v292, 16
        %v500 = vrot.slane %v498, 4
        %v501 = vshll.u32 %v292, 16
        %v503 = vrot.slane %v501, 5
        %v504 = vor.u32 %v500, %v503
        %v505 = vrot.slane %v504, 4
        %v507 = vshll.u32 %v293, 16
        %v509 = vrot.slane %v507, 5
        %v510 = vsel %vm328, %v505, %v509
        %v511 = vshrl.u32 %v293, 16
        %v513 = vrot.slane %v511, 4
        %v514 = vor.u32 %v513, %v509
        %v515 = vrot.slane %v514, 4
        %v517 = vshll.u32 %v317, 16
        %v519 = vrot.slane %v517, 5
        %v520 = vsel %vm328, %v515, %v519
        %v522 = vshrl.u32 %v294, 16
        %v524 = vrot.slane %v522, 4
        %v525 = vshll.u32 %v294, 16
        %v527 = vrot.slane %v525, 5
        %v528 = vor.u32 %v524, %v527
        %v529 = vrot.slane %v528, 4
        %v531 = vshll.u32 %v295, 16
        %v533 = vrot.slane %v531, 5
        %v534 = vsel %vm328, %v529, %v533
        %v535 = vshrl.u32 %v295, 16
        %v537 = vrot.slane %v535, 4
        %v538 = vor.u32 %v537, %v533
        %v539 = vrot.slane %v538, 4
        %v541 = vshll.u32 %v318, 16
        %v543 = vrot.slane %v541, 5
        %v544 = vsel %vm328, %v539, %v543
        %v546 = vshrl.u32 %v296, 16
        %v548 = vrot.slane %v546, 4
        %v549 = vshll.u32 %v296, 16
        %v551 = vrot.slane %v549, 5
        %v552 = vor.u32 %v548, %v551
        %v553 = vrot.slane %v552, 4
        %v555 = vshll.u32 %v297, 16
        %v557 = vrot.slane %v555, 5
        %v558 = vsel %vm328, %v553, %v557
        %v559 = vshrl.u32 %v297, 16
        %v561 = vrot.slane %v559, 4
        %v562 = vor.u32 %v561, %v557
        %v563 = vrot.slane %v562, 4
        %v565 = vshll.u32 %v319, 16
        %v567 = vrot.slane %v565, 5
        %v568 = vsel %vm328, %v563, %v567
        %v570 = vshrl.u32 %v298, 16
        %v572 = vrot.slane %v570, 4
        %v573 = vshll.u32 %v298, 16
        %v575 = vrot.slane %v573, 5
        %v576 = vor.u32 %v572, %v575
        %v577 = vrot.slane %v576, 4
        %v579 = vshll.u32 %v299, 16
        %v581 = vrot.slane %v579, 5
        %v582 = vsel %vm328, %v577, %v581
        %v583 = vshrl.u32 %v299, 16
        %v585 = vrot.slane %v583, 4
        %v586 = vor.u32 %v585, %v581
        %v587 = vrot.slane %v586, 4
        %v589 = vshll.u32 %v320, 16
        %v591 = vrot.slane %v589, 5
        %v592 = vsel %vm328, %v587, %v591
        %v594 = vshrl.u32 %v300, 16
        %v596 = vrot.slane %v594, 4
        %v597 = vshll.u32 %v300, 16
        %v599 = vrot.slane %v597, 5
        %v600 = vor.u32 %v596, %v599
        %v601 = vrot.slane %v600, 4
        %v603 = vshll.u32 %v301, 16
        %v605 = vrot.slane %v603, 5
        %v606 = vsel %vm328, %v601, %v605
        %v607 = vshrl.u32 %v301, 16
        %v609 = vrot.slane %v607, 4
        %v610 = vor.u32 %v609, %v605
        %v611 = vrot.slane %v610, 4
        %v613 = vshll.u32 %v321, 16
        %v615 = vrot.slane %v613, 5
        %v616 = vsel %vm328, %v611, %v615
        %v618 = vshrl.u32 %v302, 16
        %v620 = vrot.slane %v618, 4
        %v621 = vshll.u32 %v302, 16
        %v623 = vrot.slane %v621, 5
        %v624 = vor.u32 %v620, %v623
        %v625 = vrot.slane %v624, 4
        %v627 = vshll.u32 %v303, 16
        %v629 = vrot.slane %v627, 5
        %v630 = vsel %vm328, %v625, %v629
        %v631 = vshrl.u32 %v303, 16
        %v633 = vrot.slane %v631, 4
        %v634 = vor.u32 %v633, %v629
        %v635 = vrot.slane %v634, 4
        %v637 = vshll.u32 %v322, 16
        %v639 = vrot.slane %v637, 5
        %v640 = vsel %vm328, %v635, %v639
        %v642 = vshrl.u32 %v304, 16
        %v644 = vrot.slane %v642, 4
        %v645 = vshll.u32 %v304, 16
        %v647 = vrot.slane %v645, 5
        %v648 = vor.u32 %v644, %v647
        %v649 = vrot.slane %v648, 4
        %v651 = vshll.u32 %v305, 16
        %v653 = vrot.slane %v651, 5
        %v654 = vsel %vm328, %v649, %v653
        %v655 = vshrl.u32 %v305, 16
        %v657 = vrot.slane %v655, 4
        %v658 = vor.u32 %v657, %v653
        %v659 = vrot.slane %v658, 4
        %v661 = vshll.u32 %v323, 16
        %v663 = vrot.slane %v661, 5
        %v664 = vsel %vm328, %v659, %v663
        %v666 = vshrl.u32 %v306, 16
        %v668 = vrot.slane %v666, 4
        %v669 = vshll.u32 %v306, 16
        %v671 = vrot.slane %v669, 5
        %v672 = vor.u32 %v668, %v671
        %v673 = vrot.slane %v672, 4
        %v675 = vshll.u32 %v307, 16
        %v677 = vrot.slane %v675, 5
        %v678 = vsel %vm328, %v673, %v677
        %v679 = vshrl.u32 %v307, 16
        %v681 = vrot.slane %v679, 4
        %v682 = vor.u32 %v681, %v677
        %v683 = vrot.slane %v682, 4
        %v685 = vshll.u32 %v324, 16
        %v687 = vrot.slane %v685, 5
        %v688 = vsel %vm328, %v683, %v687
        %v690 = vshrl.u32 %v308, 16
        %v692 = vrot.slane %v690, 4
        %v693 = vshll.u32 %v308, 16
        %v695 = vrot.slane %v693, 5
        %v696 = vor.u32 %v692, %v695
        %v697 = vrot.slane %v696, 4
        %v699 = vshll.u32 %v309, 16
        %v701 = vrot.slane %v699, 5
        %v702 = vsel %vm328, %v697, %v701
        %v703 = vshrl.u32 %v309, 16
        %v705 = vrot.slane %v703, 4
        %v706 = vor.u32 %v705, %v701
        %v707 = vrot.slane %v706, 4
        %v709 = vshll.u32 %v325, 16
        %v711 = vrot.slane %v709, 5
        %v712 = vsel %vm328, %v707, %v711
        %v713 = vld [vmem:[%s276] sm:$0xe]
        %v714 = vld [vmem:[%s276 + $0xc] sm:$0xe]
        %v715 = vld [vmem:[%s276 + $0x18] sm:$0xe]
        %v716 = vld [vmem:[%s276 + $0x24] sm:$0xe]
        %v717 = vld [vmem:[%s276 + $0x30] sm:$0xe]
        %v718 = vld [vmem:[%s276 + $0x3c] sm:$0xe]
        %v719 = vld [vmem:[%s276 + $0x48] sm:$0xe]
        %v720 = vld [vmem:[%s276 + $0x54] sm:$0xe]
        %v721 = vld [vmem:[%s276 + $0x60] sm:$0xe]
        %v722 = vld [vmem:[%s276 + $0x6c] sm:$0xe]
        %v723 = vld [vmem:[%s276 + $0x78] sm:$0xe]
        %v724 = vld [vmem:[%s276 + $0x84] sm:$0xe]
        %v725 = vld [vmem:[%s276 + $0x90] sm:$0xe]
        %v726 = vld [vmem:[%s276 + $0x9c] sm:$0xe]
        %v727 = vld [vmem:[%s276 + $0xa8] sm:$0xe]
        %v728 = vld [vmem:[%s276 + $0xb4] sm:$0xe]
        %vm777 = vcmask 1042432
        %vm778 = vcmask 1046532
        %vm779 = vmor %vm777, %vm778
        %v780 = vrot.slane %v713, 5
        %v781 = vrot.slane %v780, 4
        %v782 = vrot.slane %v279, 5
        %v783 = vsel %vm779, %v781, %v782
        %v784 = vrot.slane %v782, 4
        %v785 = vrot.slane %v310, 5
        %v786 = vsel %vm779, %v784, %v785
        %v787 = vrot.slane %v714, 5
        %v788 = vrot.slane %v787, 4
        %v789 = vrot.slane %v281, 5
        %v790 = vsel %vm779, %v788, %v789
        %v791 = vrot.slane %v789, 4
        %v792 = vrot.slane %v311, 5
        %v793 = vsel %vm779, %v791, %v792
        %v794 = vrot.slane %v715, 5
        %v795 = vrot.slane %v794, 4
        %v796 = vrot.slane %v283, 5
        %v797 = vsel %vm779, %v795, %v796
        %v798 = vrot.slane %v796, 4
        %v799 = vrot.slane %v312, 5
        %v800 = vsel %vm779, %v798, %v799
        %v801 = vrot.slane %v716, 5
        %v802 = vrot.slane %v801, 4
        %v803 = vrot.slane %v285, 5
        %v804 = vsel %vm779, %v802, %v803
        %v805 = vrot.slane %v803, 4
        %v806 = vrot.slane %v313, 5
        %v807 = vsel %vm779, %v805, %v806
        %v808 = vrot.slane %v717, 5
        %v809 = vrot.slane %v808, 4
        %v810 = vrot.slane %v287, 5
        %v811 = vsel %vm779, %v809, %v810
        %v812 = vrot.slane %v810, 4
        %v813 = vrot.slane %v314, 5
        %v814 = vsel %vm779, %v812, %v813
        %v815 = vrot.slane %v718, 5
        %v816 = vrot.slane %v815, 4
        %v817 = vrot.slane %v289, 5
        %v818 = vsel %vm779, %v816, %v817
        %v819 = vrot.slane %v817, 4
        %v820 = vrot.slane %v315, 5
        %v821 = vsel %vm779, %v819, %v820
        %v822 = vrot.slane %v719, 5
        %v823 = vrot.slane %v822, 4
        %v824 = vrot.slane %v291, 5
        %v825 = vsel %vm779, %v823, %v824
        %v826 = vrot.slane %v824, 4
        %v827 = vrot.slane %v316, 5
        %v828 = vsel %vm779, %v826, %v827
        %v829 = vrot.slane %v720, 5
        %v830 = vrot.slane %v829, 4
        %v831 = vrot.slane %v293, 5
        %v832 = vsel %vm779, %v830, %v831
        %v833 = vrot.slane %v831, 4
        %v834 = vrot.slane %v317, 5
        %v835 = vsel %vm779, %v833, %v834
        %v836 = vrot.slane %v721, 5
        %v837 = vrot.slane %v836, 4
        %v838 = vrot.slane %v295, 5
        %v839 = vsel %vm779, %v837, %v838
        %v840 = vrot.slane %v838, 4
        %v841 = vrot.slane %v318, 5
        %v842 = vsel %vm779, %v840, %v841
        %v843 = vrot.slane %v722, 5
        %v844 = vrot.slane %v843, 4
        %v845 = vrot.slane %v297, 5
        %v846 = vsel %vm779, %v844, %v845
        %v847 = vrot.slane %v845, 4
        %v848 = vrot.slane %v319, 5
        %v849 = vsel %vm779, %v847, %v848
        %v850 = vrot.slane %v723, 5
        %v851 = vrot.slane %v850, 4
        %v852 = vrot.slane %v299, 5
        %v853 = vsel %vm779, %v851, %v852
        %v854 = vrot.slane %v852, 4
        %v855 = vrot.slane %v320, 5
        %v856 = vsel %vm779, %v854, %v855
        %v857 = vrot.slane %v724, 5
        %v858 = vrot.slane %v857, 4
        %v859 = vrot.slane %v301, 5
        %v860 = vsel %vm779, %v858, %v859
        %v861 = vrot.slane %v859, 4
        %v862 = vrot.slane %v321, 5
        %v863 = vsel %vm779, %v861, %v862
        %v864 = vrot.slane %v725, 5
        %v865 = vrot.slane %v864, 4
        %v866 = vrot.slane %v303, 5
        %v867 = vsel %vm779, %v865, %v866
        %v868 = vrot.slane %v866, 4
        %v869 = vrot.slane %v322, 5
        %v870 = vsel %vm779, %v868, %v869
        %v871 = vrot.slane %v726, 5
        %v872 = vrot.slane %v871, 4
        %v873 = vrot.slane %v305, 5
        %v874 = vsel %vm779, %v872, %v873
        %v875 = vrot.slane %v873, 4
        %v876 = vrot.slane %v323, 5
        %v877 = vsel %vm779, %v875, %v876
        %v878 = vrot.slane %v727, 5
        %v879 = vrot.slane %v878, 4
        %v880 = vrot.slane %v307, 5
        %v881 = vsel %vm779, %v879, %v880
        %v882 = vrot.slane %v880, 4
        %v883 = vrot.slane %v324, 5
        %v884 = vsel %vm779, %v882, %v883
        %v885 = vrot.slane %v728, 5
        %v886 = vrot.slane %v885, 4
        %v887 = vrot.slane %v309, 5
        %v888 = vsel %vm779, %v886, %v887
        %v889 = vrot.slane %v887, 4
        %v890 = vrot.slane %v325, 5
        %v891 = vsel %vm779, %v889, %v890
        %s892 = scalar_lea.vmem %s276, 12
        %v893 = vld [vmem:[%s892] sm:$0xf]
        %v894 = vld [vmem:[%s892 + $0x4] sm:$0xf]
        %v895 = vld [vmem:[%s892 + $0xc] sm:$0xf]
        %v896 = vld [vmem:[%s892 + $0x10] sm:$0xf]
        %v897 = vld [vmem:[%s892 + $0x18] sm:$0xf]
        %v898 = vld [vmem:[%s892 + $0x1c] sm:$0xf]
        %v899 = vld [vmem:[%s892 + $0x24] sm:$0xf]
        %v900 = vld [vmem:[%s892 + $0x28] sm:$0xf]
        %v901 = vld [vmem:[%s892 + $0x30] sm:$0xf]
        %v902 = vld [vmem:[%s892 + $0x34] sm:$0xf]
        %v903 = vld [vmem:[%s892 + $0x3c] sm:$0xf]
        %v904 = vld [vmem:[%s892 + $0x40] sm:$0xf]
        %v905 = vld [vmem:[%s892 + $0x48] sm:$0xf]
        %v906 = vld [vmem:[%s892 + $0x4c] sm:$0xf]
        %v907 = vld [vmem:[%s892 + $0x54] sm:$0xf]
        %v908 = vld [vmem:[%s892 + $0x58] sm:$0xf]
        %v909 = vld [vmem:[%s892 + $0x60] sm:$0xf]
        %v910 = vld [vmem:[%s892 + $0x64] sm:$0xf]
        %v911 = vld [vmem:[%s892 + $0x6c] sm:$0xf]
        %v912 = vld [vmem:[%s892 + $0x70] sm:$0xf]
        %v913 = vld [vmem:[%s892 + $0x78] sm:$0xf]
        %v914 = vld [vmem:[%s892 + $0x7c] sm:$0xf]
        %v915 = vld [vmem:[%s892 + $0x84] sm:$0xf]
        %v916 = vld [vmem:[%s892 + $0x88] sm:$0xf]
        %v917 = vld [vmem:[%s892 + $0x90] sm:$0xf]
        %v918 = vld [vmem:[%s892 + $0x94] sm:$0xf]
        %v919 = vld [vmem:[%s892 + $0x9c] sm:$0xf]
        %v920 = vld [vmem:[%s892 + $0xa0] sm:$0xf]
        %v921 = vld [vmem:[%s892 + $0xa8] sm:$0xf]
        %v922 = vld [vmem:[%s892 + $0xac] sm:$0xf]
        %v923 = vld [vmem:[%s892 + $0xb4] sm:$0xf]
        %v924 = vld [vmem:[%s892 + $0xb8] sm:$0xf]
        %v925 = vld [vmem:[%s892 + $0x8] sm:$0x1]
        %v926 = vld [vmem:[%s892 + $0x14] sm:$0x1]
        %v927 = vld [vmem:[%s892 + $0x20] sm:$0x1]
        %v928 = vld [vmem:[%s892 + $0x2c] sm:$0x1]
        %v929 = vld [vmem:[%s892 + $0x38] sm:$0x1]
        %v930 = vld [vmem:[%s892 + $0x44] sm:$0x1]
        %v931 = vld [vmem:[%s892 + $0x50] sm:$0x1]
        %v932 = vld [vmem:[%s892 + $0x5c] sm:$0x1]
        %v933 = vld [vmem:[%s892 + $0x68] sm:$0x1]
        %v934 = vld [vmem:[%s892 + $0x74] sm:$0x1]
        %v935 = vld [vmem:[%s892 + $0x80] sm:$0x1]
        %v936 = vld [vmem:[%s892 + $0x8c] sm:$0x1]
        %v937 = vld [vmem:[%s892 + $0x98] sm:$0x1]
        %v938 = vld [vmem:[%s892 + $0xa4] sm:$0x1]
        %v939 = vld [vmem:[%s892 + $0xb0] sm:$0x1]
        %v940 = vld [vmem:[%s892 + $0xbc] sm:$0x1]
        %v942 = vshrl.u32 %v893, 16
        %v944 = vrot.slane %v942, 4
        %v945 = vshll.u32 %v893, 16
        %v947 = vrot.slane %v945, 5
        %v948 = vor.u32 %v944, %v947
        %v949 = vrot.slane %v948, 4
        %v951 = vshll.u32 %v894, 16
        %v953 = vrot.slane %v951, 5
        %v954 = vsel %vm328, %v949, %v953
        %v955 = vshrl.u32 %v894, 16
        %v957 = vrot.slane %v955, 4
        %v958 = vor.u32 %v957, %v953
        %v959 = vrot.slane %v958, 4
        %v961 = vshll.u32 %v925, 16
        %v963 = vrot.slane %v961, 5
        %v964 = vsel %vm328, %v959, %v963
        %v966 = vshrl.u32 %v895, 16
        %v968 = vrot.slane %v966, 4
        %v969 = vshll.u32 %v895, 16
        %v971 = vrot.slane %v969, 5
        %v972 = vor.u32 %v968, %v971
        %v973 = vrot.slane %v972, 4
        %v975 = vshll.u32 %v896, 16
        %v977 = vrot.slane %v975, 5
        %v978 = vsel %vm328, %v973, %v977
        %v979 = vshrl.u32 %v896, 16
        %v981 = vrot.slane %v979, 4
        %v982 = vor.u32 %v981, %v977
        %v983 = vrot.slane %v982, 4
        %v985 = vshll.u32 %v926, 16
        %v987 = vrot.slane %v985, 5
        %v988 = vsel %vm328, %v983, %v987
        %v990 = vshrl.u32 %v897, 16
        %v992 = vrot.slane %v990, 4
        %v993 = vshll.u32 %v897, 16
        %v995 = vrot.slane %v993, 5
        %v996 = vor.u32 %v992, %v995
        %v997 = vrot.slane %v996, 4
        %v999 = vshll.u32 %v898, 16
        %v1001 = vrot.slane %v999, 5
        %v1002 = vsel %vm328, %v997, %v1001
        %v1003 = vshrl.u32 %v898, 16
        %v1005 = vrot.slane %v1003, 4
        %v1006 = vor.u32 %v1005, %v1001
        %v1007 = vrot.slane %v1006, 4
        %v1009 = vshll.u32 %v927, 16
        %v1011 = vrot.slane %v1009, 5
        %v1012 = vsel %vm328, %v1007, %v1011
        %v1014 = vshrl.u32 %v899, 16
        %v1016 = vrot.slane %v1014, 4
        %v1017 = vshll.u32 %v899, 16
        %v1019 = vrot.slane %v1017, 5
        %v1020 = vor.u32 %v1016, %v1019
        %v1021 = vrot.slane %v1020, 4
        %v1023 = vshll.u32 %v900, 16
        %v1025 = vrot.slane %v1023, 5
        %v1026 = vsel %vm328, %v1021, %v1025
        %v1027 = vshrl.u32 %v900, 16
        %v1029 = vrot.slane %v1027, 4
        %v1030 = vor.u32 %v1029, %v1025
        %v1031 = vrot.slane %v1030, 4
        %v1033 = vshll.u32 %v928, 16
        %v1035 = vrot.slane %v1033, 5
        %v1036 = vsel %vm328, %v1031, %v1035
        %v1038 = vshrl.u32 %v901, 16
        %v1040 = vrot.slane %v1038, 4
        %v1041 = vshll.u32 %v901, 16
        %v1043 = vrot.slane %v1041, 5
        %v1044 = vor.u32 %v1040, %v1043
        %v1045 = vrot.slane %v1044, 4
        %v1047 = vshll.u32 %v902, 16
        %v1049 = vrot.slane %v1047, 5
        %v1050 = vsel %vm328, %v1045, %v1049
        %v1051 = vshrl.u32 %v902, 16
        %v1053 = vrot.slane %v1051, 4
        %v1054 = vor.u32 %v1053, %v1049
        %v1055 = vrot.slane %v1054, 4
        %v1057 = vshll.u32 %v929, 16
        %v1059 = vrot.slane %v1057, 5
        %v1060 = vsel %vm328, %v1055, %v1059
        %v1062 = vshrl.u32 %v903, 16
        %v1064 = vrot.slane %v1062, 4
        %v1065 = vshll.u32 %v903, 16
        %v1067 = vrot.slane %v1065, 5
        %v1068 = vor.u32 %v1064, %v1067
        %v1069 = vrot.slane %v1068, 4
        %v1071 = vshll.u32 %v904, 16
        %v1073 = vrot.slane %v1071, 5
        %v1074 = vsel %vm328, %v1069, %v1073
        %v1075 = vshrl.u32 %v904, 16
        %v1077 = vrot.slane %v1075, 4
        %v1078 = vor.u32 %v1077, %v1073
        %v1079 = vrot.slane %v1078, 4
        %v1081 = vshll.u32 %v930, 16
        %v1083 = vrot.slane %v1081, 5
        %v1084 = vsel %vm328, %v1079, %v1083
        %v1086 = vshrl.u32 %v905, 16
        %v1088 = vrot.slane %v1086, 4
        %v1089 = vshll.u32 %v905, 16
        %v1091 = vrot.slane %v1089, 5
        %v1092 = vor.u32 %v1088, %v1091
        %v1093 = vrot.slane %v1092, 4
        %v1095 = vshll.u32 %v906, 16
        %v1097 = vrot.slane %v1095, 5
        %v1098 = vsel %vm328, %v1093, %v1097
        %v1099 = vshrl.u32 %v906, 16
        %v1101 = vrot.slane %v1099, 4
        %v1102 = vor.u32 %v1101, %v1097
        %v1103 = vrot.slane %v1102, 4
        %v1105 = vshll.u32 %v931, 16
        %v1107 = vrot.slane %v1105, 5
        %v1108 = vsel %vm328, %v1103, %v1107
        %v1110 = vshrl.u32 %v907, 16
        %v1112 = vrot.slane %v1110, 4
        %v1113 = vshll.u32 %v907, 16
        %v1115 = vrot.slane %v1113, 5
        %v1116 = vor.u32 %v1112, %v1115
        %v1117 = vrot.slane %v1116, 4
        %v1119 = vshll.u32 %v908, 16
        %v1121 = vrot.slane %v1119, 5
        %v1122 = vsel %vm328, %v1117, %v1121
        %v1123 = vshrl.u32 %v908, 16
        %v1125 = vrot.slane %v1123, 4
        %v1126 = vor.u32 %v1125, %v1121
        %v1127 = vrot.slane %v1126, 4
        %v1129 = vshll.u32 %v932, 16
        %v1131 = vrot.slane %v1129, 5
        %v1132 = vsel %vm328, %v1127, %v1131
        %v1134 = vshrl.u32 %v909, 16
        %v1136 = vrot.slane %v1134, 4
        %v1137 = vshll.u32 %v909, 16
        %v1139 = vrot.slane %v1137, 5
        %v1140 = vor.u32 %v1136, %v1139
        %v1141 = vrot.slane %v1140, 4
        %v1143 = vshll.u32 %v910, 16
        %v1145 = vrot.slane %v1143, 5
        %v1146 = vsel %vm328, %v1141, %v1145
        %v1147 = vshrl.u32 %v910, 16
        %v1149 = vrot.slane %v1147, 4
        %v1150 = vor.u32 %v1149, %v1145
        %v1151 = vrot.slane %v1150, 4
        %v1153 = vshll.u32 %v933, 16
        %v1155 = vrot.slane %v1153, 5
        %v1156 = vsel %vm328, %v1151, %v1155
        %v1158 = vshrl.u32 %v911, 16
        %v1160 = vrot.slane %v1158, 4
        %v1161 = vshll.u32 %v911, 16
        %v1163 = vrot.slane %v1161, 5
        %v1164 = vor.u32 %v1160, %v1163
        %v1165 = vrot.slane %v1164, 4
        %v1167 = vshll.u32 %v912, 16
        %v1169 = vrot.slane %v1167, 5
        %v1170 = vsel %vm328, %v1165, %v1169
        %v1171 = vshrl.u32 %v912, 16
        %v1173 = vrot.slane %v1171, 4
        %v1174 = vor.u32 %v1173, %v1169
        %v1175 = vrot.slane %v1174, 4
        %v1177 = vshll.u32 %v934, 16
        %v1179 = vrot.slane %v1177, 5
        %v1180 = vsel %vm328, %v1175, %v1179
        %v1182 = vshrl.u32 %v913, 16
        %v1184 = vrot.slane %v1182, 4
        %v1185 = vshll.u32 %v913, 16
        %v1187 = vrot.slane %v1185, 5
        %v1188 = vor.u32 %v1184, %v1187
        %v1189 = vrot.slane %v1188, 4
        %v1191 = vshll.u32 %v914, 16
        %v1193 = vrot.slane %v1191, 5
        %v1194 = vsel %vm328, %v1189, %v1193
        %v1195 = vshrl.u32 %v914, 16
        %v1197 = vrot.slane %v1195, 4
        %v1198 = vor.u32 %v1197, %v1193
        %v1199 = vrot.slane %v1198, 4
        %v1201 = vshll.u32 %v935, 16
        %v1203 = vrot.slane %v1201, 5
        %v1204 = vsel %vm328, %v1199, %v1203
        %v1206 = vshrl.u32 %v915, 16
        %v1208 = vrot.slane %v1206, 4
        %v1209 = vshll.u32 %v915, 16
        %v1211 = vrot.slane %v1209, 5
        %v1212 = vor.u32 %v1208, %v1211
        %v1213 = vrot.slane %v1212, 4
        %v1215 = vshll.u32 %v916, 16
        %v1217 = vrot.slane %v1215, 5
        %v1218 = vsel %vm328, %v1213, %v1217
        %v1219 = vshrl.u32 %v916, 16
        %v1221 = vrot.slane %v1219, 4
        %v1222 = vor.u32 %v1221, %v1217
        %v1223 = vrot.slane %v1222, 4
        %v1225 = vshll.u32 %v936, 16
        %v1227 = vrot.slane %v1225, 5
        %v1228 = vsel %vm328, %v1223, %v1227
        %v1230 = vshrl.u32 %v917, 16
        %v1232 = vrot.slane %v1230, 4
        %v1233 = vshll.u32 %v917, 16
        %v1235 = vrot.slane %v1233, 5
        %v1236 = vor.u32 %v1232, %v1235
        %v1237 = vrot.slane %v1236, 4
        %v1239 = vshll.u32 %v918, 16
        %v1241 = vrot.slane %v1239, 5
        %v1242 = vsel %vm328, %v1237, %v1241
        %v1243 = vshrl.u32 %v918, 16
        %v1245 = vrot.slane %v1243, 4
        %v1246 = vor.u32 %v1245, %v1241
        %v1247 = vrot.slane %v1246, 4
        %v1249 = vshll.u32 %v937, 16
        %v1251 = vrot.slane %v1249, 5
        %v1252 = vsel %vm328, %v1247, %v1251
        %v1254 = vshrl.u32 %v919, 16
        %v1256 = vrot.slane %v1254, 4
        %v1257 = vshll.u32 %v919, 16
        %v1259 = vrot.slane %v1257, 5
        %v1260 = vor.u32 %v1256, %v1259
        %v1261 = vrot.slane %v1260, 4
        %v1263 = vshll.u32 %v920, 16
        %v1265 = vrot.slane %v1263, 5
        %v1266 = vsel %vm328, %v1261, %v1265
        %v1267 = vshrl.u32 %v920, 16
        %v1269 = vrot.slane %v1267, 4
        %v1270 = vor.u32 %v1269, %v1265
        %v1271 = vrot.slane %v1270, 4
        %v1273 = vshll.u32 %v938, 16
        %v1275 = vrot.slane %v1273, 5
        %v1276 = vsel %vm328, %v1271, %v1275
        %v1278 = vshrl.u32 %v921, 16
        %v1280 = vrot.slane %v1278, 4
        %v1281 = vshll.u32 %v921, 16
        %v1283 = vrot.slane %v1281, 5
        %v1284 = vor.u32 %v1280, %v1283
        %v1285 = vrot.slane %v1284, 4
        %v1287 = vshll.u32 %v922, 16
        %v1289 = vrot.slane %v1287, 5
        %v1290 = vsel %vm328, %v1285, %v1289
        %v1291 = vshrl.u32 %v922, 16
        %v1293 = vrot.slane %v1291, 4
        %v1294 = vor.u32 %v1293, %v1289
        %v1295 = vrot.slane %v1294, 4
        %v1297 = vshll.u32 %v939, 16
        %v1299 = vrot.slane %v1297, 5
        %v1300 = vsel %vm328, %v1295, %v1299
        %v1302 = vshrl.u32 %v923, 16
        %v1304 = vrot.slane %v1302, 4
        %v1305 = vshll.u32 %v923, 16
        %v1307 = vrot.slane %v1305, 5
        %v1308 = vor.u32 %v1304, %v1307
        %v1309 = vrot.slane %v1308, 4
        %v1311 = vshll.u32 %v924, 16
        %v1313 = vrot.slane %v1311, 5
        %v1314 = vsel %vm328, %v1309, %v1313
        %v1315 = vshrl.u32 %v924, 16
        %v1317 = vrot.slane %v1315, 4
        %v1318 = vor.u32 %v1317, %v1313
        %v1319 = vrot.slane %v1318, 4
        %v1321 = vshll.u32 %v940, 16
        %v1323 = vrot.slane %v1321, 5
        %v1324 = vsel %vm328, %v1319, %v1323
        %v1325 = vld [vmem:[%s892] sm:$0xe]
        %v1326 = vld [vmem:[%s892 + $0xc] sm:$0xe]
        %v1327 = vld [vmem:[%s892 + $0x18] sm:$0xe]
        %v1328 = vld [vmem:[%s892 + $0x24] sm:$0xe]
        %v1329 = vld [vmem:[%s892 + $0x30] sm:$0xe]
        %v1330 = vld [vmem:[%s892 + $0x3c] sm:$0xe]
        %v1331 = vld [vmem:[%s892 + $0x48] sm:$0xe]
        %v1332 = vld [vmem:[%s892 + $0x54] sm:$0xe]
        %v1333 = vld [vmem:[%s892 + $0x60] sm:$0xe]
        %v1334 = vld [vmem:[%s892 + $0x6c] sm:$0xe]
        %v1335 = vld [vmem:[%s892 + $0x78] sm:$0xe]
        %v1336 = vld [vmem:[%s892 + $0x84] sm:$0xe]
        %v1337 = vld [vmem:[%s892 + $0x90] sm:$0xe]
        %v1338 = vld [vmem:[%s892 + $0x9c] sm:$0xe]
        %v1339 = vld [vmem:[%s892 + $0xa8] sm:$0xe]
        %v1340 = vld [vmem:[%s892 + $0xb4] sm:$0xe]
        %v1389 = vrot.slane %v1325, 5
        %v1390 = vrot.slane %v1389, 4
        %v1391 = vrot.slane %v894, 5
        %v1392 = vsel %vm779, %v1390, %v1391
        %v1393 = vrot.slane %v1391, 4
        %v1394 = vrot.slane %v925, 5
        %v1395 = vsel %vm779, %v1393, %v1394
        %v1396 = vrot.slane %v1326, 5
        %v1397 = vrot.slane %v1396, 4
        %v1398 = vrot.slane %v896, 5
        %v1399 = vsel %vm779, %v1397, %v1398
        %v1400 = vrot.slane %v1398, 4
        %v1401 = vrot.slane %v926, 5
        %v1402 = vsel %vm779, %v1400, %v1401
        %v1403 = vrot.slane %v1327, 5
        %v1404 = vrot.slane %v1403, 4
        %v1405 = vrot.slane %v898, 5
        %v1406 = vsel %vm779, %v1404, %v1405
        %v1407 = vrot.slane %v1405, 4
        %v1408 = vrot.slane %v927, 5
        %v1409 = vsel %vm779, %v1407, %v1408
        %v1410 = vrot.slane %v1328, 5
        %v1411 = vrot.slane %v1410, 4
        %v1412 = vrot.slane %v900, 5
        %v1413 = vsel %vm779, %v1411, %v1412
        %v1414 = vrot.slane %v1412, 4
        %v1415 = vrot.slane %v928, 5
        %v1416 = vsel %vm779, %v1414, %v1415
        %v1417 = vrot.slane %v1329, 5
        %v1418 = vrot.slane %v1417, 4
        %v1419 = vrot.slane %v902, 5
        %v1420 = vsel %vm779, %v1418, %v1419
        %v1421 = vrot.slane %v1419, 4
        %v1422 = vrot.slane %v929, 5
        %v1423 = vsel %vm779, %v1421, %v1422
        %v1424 = vrot.slane %v1330, 5
        %v1425 = vrot.slane %v1424, 4
        %v1426 = vrot.slane %v904, 5
        %v1427 = vsel %vm779, %v1425, %v1426
        %v1428 = vrot.slane %v1426, 4
        %v1429 = vrot.slane %v930, 5
        %v1430 = vsel %vm779, %v1428, %v1429
        %v1431 = vrot.slane %v1331, 5
        %v1432 = vrot.slane %v1431, 4
        %v1433 = vrot.slane %v906, 5
        %v1434 = vsel %vm779, %v1432, %v1433
        %v1435 = vrot.slane %v1433, 4
        %v1436 = vrot.slane %v931, 5
        %v1437 = vsel %vm779, %v1435, %v1436
        %v1438 = vrot.slane %v1332, 5
        %v1439 = vrot.slane %v1438, 4
        %v1440 = vrot.slane %v908, 5
        %v1441 = vsel %vm779, %v1439, %v1440
        %v1442 = vrot.slane %v1440, 4
        %v1443 = vrot.slane %v932, 5
        %v1444 = vsel %vm779, %v1442, %v1443
        %v1445 = vrot.slane %v1333, 5
        %v1446 = vrot.slane %v1445, 4
        %v1447 = vrot.slane %v910, 5
        %v1448 = vsel %vm779, %v1446, %v1447
        %v1449 = vrot.slane %v1447, 4
        %v1450 = vrot.slane %v933, 5
        %v1451 = vsel %vm779, %v1449, %v1450
        %v1452 = vrot.slane %v1334, 5
        %v1453 = vrot.slane %v1452, 4
        %v1454 = vrot.slane %v912, 5
        %v1455 = vsel %vm779, %v1453, %v1454
        %v1456 = vrot.slane %v1454, 4
        %v1457 = vrot.slane %v934, 5
        %v1458 = vsel %vm779, %v1456, %v1457
        %v1459 = vrot.slane %v1335, 5
        %v1460 = vrot.slane %v1459, 4
        %v1461 = vrot.slane %v914, 5
        %v1462 = vsel %vm779, %v1460, %v1461
        %v1463 = vrot.slane %v1461, 4
        %v1464 = vrot.slane %v935, 5
        %v1465 = vsel %vm779, %v1463, %v1464
        %v1466 = vrot.slane %v1336, 5
        %v1467 = vrot.slane %v1466, 4
        %v1468 = vrot.slane %v916, 5
        %v1469 = vsel %vm779, %v1467, %v1468
        %v1470 = vrot.slane %v1468, 4
        %v1471 = vrot.slane %v936, 5
        %v1472 = vsel %vm779, %v1470, %v1471
        %v1473 = vrot.slane %v1337, 5
        %v1474 = vrot.slane %v1473, 4
        %v1475 = vrot.slane %v918, 5
        %v1476 = vsel %vm779, %v1474, %v1475
        %v1477 = vrot.slane %v1475, 4
        %v1478 = vrot.slane %v937, 5
        %v1479 = vsel %vm779, %v1477, %v1478
        %v1480 = vrot.slane %v1338, 5
        %v1481 = vrot.slane %v1480, 4
        %v1482 = vrot.slane %v920, 5
        %v1483 = vsel %vm779, %v1481, %v1482
        %v1484 = vrot.slane %v1482, 4
        %v1485 = vrot.slane %v938, 5
        %v1486 = vsel %vm779, %v1484, %v1485
        %v1487 = vrot.slane %v1339, 5
        %v1488 = vrot.slane %v1487, 4
        %v1489 = vrot.slane %v922, 5
        %v1490 = vsel %vm779, %v1488, %v1489
        %v1491 = vrot.slane %v1489, 4
        %v1492 = vrot.slane %v939, 5
        %v1493 = vsel %vm779, %v1491, %v1492
        %v1494 = vrot.slane %v1340, 5
        %v1495 = vrot.slane %v1494, 4
        %v1496 = vrot.slane %v924, 5
        %v1497 = vsel %vm779, %v1495, %v1496
        %v1498 = vrot.slane %v1496, 4
        %v1499 = vrot.slane %v940, 5
        %v1500 = vsel %vm779, %v1498, %v1499
        %s1501 = scalar_lea.vmem %s276, 24
        %v1502 = vld [vmem:[%s1501] sm:$0xf]
        %v1503 = vld [vmem:[%s1501 + $0x4] sm:$0xf]
        %v1504 = vld [vmem:[%s1501 + $0xc] sm:$0xf]
        %v1505 = vld [vmem:[%s1501 + $0x10] sm:$0xf]
        %v1506 = vld [vmem:[%s1501 + $0x18] sm:$0xf]
        %v1507 = vld [vmem:[%s1501 + $0x1c] sm:$0xf]
        %v1508 = vld [vmem:[%s1501 + $0x24] sm:$0xf]
        %v1509 = vld [vmem:[%s1501 + $0x28] sm:$0xf]
        %v1510 = vld [vmem:[%s1501 + $0x30] sm:$0xf]
        %v1511 = vld [vmem:[%s1501 + $0x34] sm:$0xf]
        %v1512 = vld [vmem:[%s1501 + $0x3c] sm:$0xf]
        %v1513 = vld [vmem:[%s1501 + $0x40] sm:$0xf]
        %v1514 = vld [vmem:[%s1501 + $0x48] sm:$0xf]
        %v1515 = vld [vmem:[%s1501 + $0x4c] sm:$0xf]
        %v1516 = vld [vmem:[%s1501 + $0x54] sm:$0xf]
        %v1517 = vld [vmem:[%s1501 + $0x58] sm:$0xf]
        %v1518 = vld [vmem:[%s1501 + $0x60] sm:$0xf]
        %v1519 = vld [vmem:[%s1501 + $0x64] sm:$0xf]
        %v1520 = vld [vmem:[%s1501 + $0x6c] sm:$0xf]
        %v1521 = vld [vmem:[%s1501 + $0x70] sm:$0xf]
        %v1522 = vld [vmem:[%s1501 + $0x78] sm:$0xf]
        %v1523 = vld [vmem:[%s1501 + $0x7c] sm:$0xf]
        %v1524 = vld [vmem:[%s1501 + $0x84] sm:$0xf]
        %v1525 = vld [vmem:[%s1501 + $0x88] sm:$0xf]
        %v1526 = vld [vmem:[%s1501 + $0x90] sm:$0xf]
        %v1527 = vld [vmem:[%s1501 + $0x94] sm:$0xf]
        %v1528 = vld [vmem:[%s1501 + $0x9c] sm:$0xf]
        %v1529 = vld [vmem:[%s1501 + $0xa0] sm:$0xf]
        %v1530 = vld [vmem:[%s1501 + $0xa8] sm:$0xf]
        %v1531 = vld [vmem:[%s1501 + $0xac] sm:$0xf]
        %v1532 = vld [vmem:[%s1501 + $0xb4] sm:$0xf]
        %v1533 = vld [vmem:[%s1501 + $0xb8] sm:$0xf]
        %v1534 = vld [vmem:[%s1501 + $0x8] sm:$0x1]
        %v1535 = vld [vmem:[%s1501 + $0x14] sm:$0x1]
        %v1536 = vld [vmem:[%s1501 + $0x20] sm:$0x1]
        %v1537 = vld [vmem:[%s1501 + $0x2c] sm:$0x1]
        %v1538 = vld [vmem:[%s1501 + $0x38] sm:$0x1]
        %v1539 = vld [vmem:[%s1501 + $0x44] sm:$0x1]
        %v1540 = vld [vmem:[%s1501 + $0x50] sm:$0x1]
        %v1541 = vld [vmem:[%s1501 + $0x5c] sm:$0x1]
        %v1542 = vld [vmem:[%s1501 + $0x68] sm:$0x1]
        %v1543 = vld [vmem:[%s1501 + $0x74] sm:$0x1]
        %v1544 = vld [vmem:[%s1501 + $0x80] sm:$0x1]
        %v1545 = vld [vmem:[%s1501 + $0x8c] sm:$0x1]
        %v1546 = vld [vmem:[%s1501 + $0x98] sm:$0x1]
        %v1547 = vld [vmem:[%s1501 + $0xa4] sm:$0x1]
        %v1548 = vld [vmem:[%s1501 + $0xb0] sm:$0x1]
        %v1549 = vld [vmem:[%s1501 + $0xbc] sm:$0x1]
        %v1551 = vshrl.u32 %v1502, 16
        %v1553 = vrot.slane %v1551, 4
        %v1554 = vshll.u32 %v1502, 16
        %v1556 = vrot.slane %v1554, 5
        %v1557 = vor.u32 %v1553, %v1556
        %v1558 = vrot.slane %v1557, 4
        %v1560 = vshll.u32 %v1503, 16
        %v1562 = vrot.slane %v1560, 5
        %v1563 = vsel %vm328, %v1558, %v1562
        %v1564 = vshrl.u32 %v1503, 16
        %v1566 = vrot.slane %v1564, 4
        %v1567 = vor.u32 %v1566, %v1562
        %v1568 = vrot.slane %v1567, 4
        %v1570 = vshll.u32 %v1534, 16
        %v1572 = vrot.slane %v1570, 5
        %v1573 = vsel %vm328, %v1568, %v1572
        %v1575 = vshrl.u32 %v1504, 16
        %v1577 = vrot.slane %v1575, 4
        %v1578 = vshll.u32 %v1504, 16
        %v1580 = vrot.slane %v1578, 5
        %v1581 = vor.u32 %v1577, %v1580
        %v1582 = vrot.slane %v1581, 4
        %v1584 = vshll.u32 %v1505, 16
        %v1586 = vrot.slane %v1584, 5
        %v1587 = vsel %vm328, %v1582, %v1586
        %v1588 = vshrl.u32 %v1505, 16
        %v1590 = vrot.slane %v1588, 4
        %v1591 = vor.u32 %v1590, %v1586
        %v1592 = vrot.slane %v1591, 4
        %v1594 = vshll.u32 %v1535, 16
        %v1596 = vrot.slane %v1594, 5
        %v1597 = vsel %vm328, %v1592, %v1596
        %v1599 = vshrl.u32 %v1506, 16
        %v1601 = vrot.slane %v1599, 4
        %v1602 = vshll.u32 %v1506, 16
        %v1604 = vrot.slane %v1602, 5
        %v1605 = vor.u32 %v1601, %v1604
        %v1606 = vrot.slane %v1605, 4
        %v1608 = vshll.u32 %v1507, 16
        %v1610 = vrot.slane %v1608, 5
        %v1611 = vsel %vm328, %v1606, %v1610
        %v1612 = vshrl.u32 %v1507, 16
        %v1614 = vrot.slane %v1612, 4
        %v1615 = vor.u32 %v1614, %v1610
        %v1616 = vrot.slane %v1615, 4
        %v1618 = vshll.u32 %v1536, 16
        %v1620 = vrot.slane %v1618, 5
        %v1621 = vsel %vm328, %v1616, %v1620
        %v1623 = vshrl.u32 %v1508, 16
        %v1625 = vrot.slane %v1623, 4
        %v1626 = vshll.u32 %v1508, 16
        %v1628 = vrot.slane %v1626, 5
        %v1629 = vor.u32 %v1625, %v1628
        %v1630 = vrot.slane %v1629, 4
        %v1632 = vshll.u32 %v1509, 16
        %v1634 = vrot.slane %v1632, 5
        %v1635 = vsel %vm328, %v1630, %v1634
        %v1636 = vshrl.u32 %v1509, 16
        %v1638 = vrot.slane %v1636, 4
        %v1639 = vor.u32 %v1638, %v1634
        %v1640 = vrot.slane %v1639, 4
        %v1642 = vshll.u32 %v1537, 16
        %v1644 = vrot.slane %v1642, 5
        %v1645 = vsel %vm328, %v1640, %v1644
        %v1647 = vshrl.u32 %v1510, 16
        %v1649 = vrot.slane %v1647, 4
        %v1650 = vshll.u32 %v1510, 16
        %v1652 = vrot.slane %v1650, 5
        %v1653 = vor.u32 %v1649, %v1652
        %v1654 = vrot.slane %v1653, 4
        %v1656 = vshll.u32 %v1511, 16
        %v1658 = vrot.slane %v1656, 5
        %v1659 = vsel %vm328, %v1654, %v1658
        %v1660 = vshrl.u32 %v1511, 16
        %v1662 = vrot.slane %v1660, 4
        %v1663 = vor.u32 %v1662, %v1658
        %v1664 = vrot.slane %v1663, 4
        %v1666 = vshll.u32 %v1538, 16
        %v1668 = vrot.slane %v1666, 5
        %v1669 = vsel %vm328, %v1664, %v1668
        %v1671 = vshrl.u32 %v1512, 16
        %v1673 = vrot.slane %v1671, 4
        %v1674 = vshll.u32 %v1512, 16
        %v1676 = vrot.slane %v1674, 5
        %v1677 = vor.u32 %v1673, %v1676
        %v1678 = vrot.slane %v1677, 4
        %v1680 = vshll.u32 %v1513, 16
        %v1682 = vrot.slane %v1680, 5
        %v1683 = vsel %vm328, %v1678, %v1682
        %v1684 = vshrl.u32 %v1513, 16
        %v1686 = vrot.slane %v1684, 4
        %v1687 = vor.u32 %v1686, %v1682
        %v1688 = vrot.slane %v1687, 4
        %v1690 = vshll.u32 %v1539, 16
        %v1692 = vrot.slane %v1690, 5
        %v1693 = vsel %vm328, %v1688, %v1692
        %v1695 = vshrl.u32 %v1514, 16
        %v1697 = vrot.slane %v1695, 4
        %v1698 = vshll.u32 %v1514, 16
        %v1700 = vrot.slane %v1698, 5
        %v1701 = vor.u32 %v1697, %v1700
        %v1702 = vrot.slane %v1701, 4
        %v1704 = vshll.u32 %v1515, 16
        %v1706 = vrot.slane %v1704, 5
        %v1707 = vsel %vm328, %v1702, %v1706
        %v1708 = vshrl.u32 %v1515, 16
        %v1710 = vrot.slane %v1708, 4
        %v1711 = vor.u32 %v1710, %v1706
        %v1712 = vrot.slane %v1711, 4
        %v1714 = vshll.u32 %v1540, 16
        %v1716 = vrot.slane %v1714, 5
        %v1717 = vsel %vm328, %v1712, %v1716
        %v1719 = vshrl.u32 %v1516, 16
        %v1721 = vrot.slane %v1719, 4
        %v1722 = vshll.u32 %v1516, 16
        %v1724 = vrot.slane %v1722, 5
        %v1725 = vor.u32 %v1721, %v1724
        %v1726 = vrot.slane %v1725, 4
        %v1728 = vshll.u32 %v1517, 16
        %v1730 = vrot.slane %v1728, 5
        %v1731 = vsel %vm328, %v1726, %v1730
        %v1732 = vshrl.u32 %v1517, 16
        %v1734 = vrot.slane %v1732, 4
        %v1735 = vor.u32 %v1734, %v1730
        %v1736 = vrot.slane %v1735, 4
        %v1738 = vshll.u32 %v1541, 16
        %v1740 = vrot.slane %v1738, 5
        %v1741 = vsel %vm328, %v1736, %v1740
        %v1743 = vshrl.u32 %v1518, 16
        %v1745 = vrot.slane %v1743, 4
        %v1746 = vshll.u32 %v1518, 16
        %v1748 = vrot.slane %v1746, 5
        %v1749 = vor.u32 %v1745, %v1748
        %v1750 = vrot.slane %v1749, 4
        %v1752 = vshll.u32 %v1519, 16
        %v1754 = vrot.slane %v1752, 5
        %v1755 = vsel %vm328, %v1750, %v1754
        %v1756 = vshrl.u32 %v1519, 16
        %v1758 = vrot.slane %v1756, 4
        %v1759 = vor.u32 %v1758, %v1754
        %v1760 = vrot.slane %v1759, 4
        %v1762 = vshll.u32 %v1542, 16
        %v1764 = vrot.slane %v1762, 5
        %v1765 = vsel %vm328, %v1760, %v1764
        %v1767 = vshrl.u32 %v1520, 16
        %v1769 = vrot.slane %v1767, 4
        %v1770 = vshll.u32 %v1520, 16
        %v1772 = vrot.slane %v1770, 5
        %v1773 = vor.u32 %v1769, %v1772
        %v1774 = vrot.slane %v1773, 4
        %v1776 = vshll.u32 %v1521, 16
        %v1778 = vrot.slane %v1776, 5
        %v1779 = vsel %vm328, %v1774, %v1778
        %v1780 = vshrl.u32 %v1521, 16
        %v1782 = vrot.slane %v1780, 4
        %v1783 = vor.u32 %v1782, %v1778
        %v1784 = vrot.slane %v1783, 4
        %v1786 = vshll.u32 %v1543, 16
        %v1788 = vrot.slane %v1786, 5
        %v1789 = vsel %vm328, %v1784, %v1788
        %v1791 = vshrl.u32 %v1522, 16
        %v1793 = vrot.slane %v1791, 4
        %v1794 = vshll.u32 %v1522, 16
        %v1796 = vrot.slane %v1794, 5
        %v1797 = vor.u32 %v1793, %v1796
        %v1798 = vrot.slane %v1797, 4
        %v1800 = vshll.u32 %v1523, 16
        %v1802 = vrot.slane %v1800, 5
        %v1803 = vsel %vm328, %v1798, %v1802
        %v1804 = vshrl.u32 %v1523, 16
        %v1806 = vrot.slane %v1804, 4
        %v1807 = vor.u32 %v1806, %v1802
        %v1808 = vrot.slane %v1807, 4
        %v1810 = vshll.u32 %v1544, 16
        %v1812 = vrot.slane %v1810, 5
        %v1813 = vsel %vm328, %v1808, %v1812
        %v1815 = vshrl.u32 %v1524, 16
        %v1817 = vrot.slane %v1815, 4
        %v1818 = vshll.u32 %v1524, 16
        %v1820 = vrot.slane %v1818, 5
        %v1821 = vor.u32 %v1817, %v1820
        %v1822 = vrot.slane %v1821, 4
        %v1824 = vshll.u32 %v1525, 16
        %v1826 = vrot.slane %v1824, 5
        %v1827 = vsel %vm328, %v1822, %v1826
        %v1828 = vshrl.u32 %v1525, 16
        %v1830 = vrot.slane %v1828, 4
        %v1831 = vor.u32 %v1830, %v1826
        %v1832 = vrot.slane %v1831, 4
        %v1834 = vshll.u32 %v1545, 16
        %v1836 = vrot.slane %v1834, 5
        %v1837 = vsel %vm328, %v1832, %v1836
        %v1839 = vshrl.u32 %v1526, 16
        %v1841 = vrot.slane %v1839, 4
        %v1842 = vshll.u32 %v1526, 16
        %v1844 = vrot.slane %v1842, 5
        %v1845 = vor.u32 %v1841, %v1844
        %v1846 = vrot.slane %v1845, 4
        %v1848 = vshll.u32 %v1527, 16
        %v1850 = vrot.slane %v1848, 5
        %v1851 = vsel %vm328, %v1846, %v1850
        %v1852 = vshrl.u32 %v1527, 16
        %v1854 = vrot.slane %v1852, 4
        %v1855 = vor.u32 %v1854, %v1850
        %v1856 = vrot.slane %v1855, 4
        %v1858 = vshll.u32 %v1546, 16
        %v1860 = vrot.slane %v1858, 5
        %v1861 = vsel %vm328, %v1856, %v1860
        %v1863 = vshrl.u32 %v1528, 16
        %v1865 = vrot.slane %v1863, 4
        %v1866 = vshll.u32 %v1528, 16
        %v1868 = vrot.slane %v1866, 5
        %v1869 = vor.u32 %v1865, %v1868
        %v1870 = vrot.slane %v1869, 4
        %v1872 = vshll.u32 %v1529, 16
        %v1874 = vrot.slane %v1872, 5
        %v1875 = vsel %vm328, %v1870, %v1874
        %v1876 = vshrl.u32 %v1529, 16
        %v1878 = vrot.slane %v1876, 4
        %v1879 = vor.u32 %v1878, %v1874
        %v1880 = vrot.slane %v1879, 4
        %v1882 = vshll.u32 %v1547, 16
        %v1884 = vrot.slane %v1882, 5
        %v1885 = vsel %vm328, %v1880, %v1884
        %v1887 = vshrl.u32 %v1530, 16
        %v1889 = vrot.slane %v1887, 4
        %v1890 = vshll.u32 %v1530, 16
        %v1892 = vrot.slane %v1890, 5
        %v1893 = vor.u32 %v1889, %v1892
        %v1894 = vrot.slane %v1893, 4
        %v1896 = vshll.u32 %v1531, 16
        %v1898 = vrot.slane %v1896, 5
        %v1899 = vsel %vm328, %v1894, %v1898
        %v1900 = vshrl.u32 %v1531, 16
        %v1902 = vrot.slane %v1900, 4
        %v1903 = vor.u32 %v1902, %v1898
        %v1904 = vrot.slane %v1903, 4
        %v1906 = vshll.u32 %v1548, 16
        %v1908 = vrot.slane %v1906, 5
        %v1909 = vsel %vm328, %v1904, %v1908
        %v1911 = vshrl.u32 %v1532, 16
        %v1913 = vrot.slane %v1911, 4
        %v1914 = vshll.u32 %v1532, 16
        %v1916 = vrot.slane %v1914, 5
        %v1917 = vor.u32 %v1913, %v1916
        %v1918 = vrot.slane %v1917, 4
        %v1920 = vshll.u32 %v1533, 16
        %v1922 = vrot.slane %v1920, 5
        %v1923 = vsel %vm328, %v1918, %v1922
        %v1924 = vshrl.u32 %v1533, 16
        %v1926 = vrot.slane %v1924, 4
        %v1927 = vor.u32 %v1926, %v1922
        %v1928 = vrot.slane %v1927, 4
        %v1930 = vshll.u32 %v1549, 16
        %v1932 = vrot.slane %v1930, 5
        %v1933 = vsel %vm328, %v1928, %v1932
        %v1934 = vld [vmem:[%s1501] sm:$0xe]
        %v1935 = vld [vmem:[%s1501 + $0xc] sm:$0xe]
        %v1936 = vld [vmem:[%s1501 + $0x18] sm:$0xe]
        %v1937 = vld [vmem:[%s1501 + $0x24] sm:$0xe]
        %v1938 = vld [vmem:[%s1501 + $0x30] sm:$0xe]
        %v1939 = vld [vmem:[%s1501 + $0x3c] sm:$0xe]
        %v1940 = vld [vmem:[%s1501 + $0x48] sm:$0xe]
        %v1941 = vld [vmem:[%s1501 + $0x54] sm:$0xe]
        %v1942 = vld [vmem:[%s1501 + $0x60] sm:$0xe]
        %v1943 = vld [vmem:[%s1501 + $0x6c] sm:$0xe]
        %v1944 = vld [vmem:[%s1501 + $0x78] sm:$0xe]
        %v1945 = vld [vmem:[%s1501 + $0x84] sm:$0xe]
        %v1946 = vld [vmem:[%s1501 + $0x90] sm:$0xe]
        %v1947 = vld [vmem:[%s1501 + $0x9c] sm:$0xe]
        %v1948 = vld [vmem:[%s1501 + $0xa8] sm:$0xe]
        %v1949 = vld [vmem:[%s1501 + $0xb4] sm:$0xe]
        %v1998 = vrot.slane %v1934, 5
        %v1999 = vrot.slane %v1998, 4
        %v2000 = vrot.slane %v1503, 5
        %v2001 = vsel %vm779, %v1999, %v2000
        %v2002 = vrot.slane %v2000, 4
        %v2003 = vrot.slane %v1534, 5
        %v2004 = vsel %vm779, %v2002, %v2003
        %v2005 = vrot.slane %v1935, 5
        %v2006 = vrot.slane %v2005, 4
        %v2007 = vrot.slane %v1505, 5
        %v2008 = vsel %vm779, %v2006, %v2007
        %v2009 = vrot.slane %v2007, 4
        %v2010 = vrot.slane %v1535, 5
        %v2011 = vsel %vm779, %v2009, %v2010
        %v2012 = vrot.slane %v1936, 5
        %v2013 = vrot.slane %v2012, 4
        %v2014 = vrot.slane %v1507, 5
        %v2015 = vsel %vm779, %v2013, %v2014
        %v2016 = vrot.slane %v2014, 4
        %v2017 = vrot.slane %v1536, 5
        %v2018 = vsel %vm779, %v2016, %v2017
        %v2019 = vrot.slane %v1937, 5
        %v2020 = vrot.slane %v2019, 4
        %v2021 = vrot.slane %v1509, 5
        %v2022 = vsel %vm779, %v2020, %v2021
        %v2023 = vrot.slane %v2021, 4
        %v2024 = vrot.slane %v1537, 5
        %v2025 = vsel %vm779, %v2023, %v2024
        %v2026 = vrot.slane %v1938, 5
        %v2027 = vrot.slane %v2026, 4
        %v2028 = vrot.slane %v1511, 5
        %v2029 = vsel %vm779, %v2027, %v2028
        %v2030 = vrot.slane %v2028, 4
        %v2031 = vrot.slane %v1538, 5
        %v2032 = vsel %vm779, %v2030, %v2031
        %v2033 = vrot.slane %v1939, 5
        %v2034 = vrot.slane %v2033, 4
        %v2035 = vrot.slane %v1513, 5
        %v2036 = vsel %vm779, %v2034, %v2035
        %v2037 = vrot.slane %v2035, 4
        %v2038 = vrot.slane %v1539, 5
        %v2039 = vsel %vm779, %v2037, %v2038
        %v2040 = vrot.slane %v1940, 5
        %v2041 = vrot.slane %v2040, 4
        %v2042 = vrot.slane %v1515, 5
        %v2043 = vsel %vm779, %v2041, %v2042
        %v2044 = vrot.slane %v2042, 4
        %v2045 = vrot.slane %v1540, 5
        %v2046 = vsel %vm779, %v2044, %v2045
        %v2047 = vrot.slane %v1941, 5
        %v2048 = vrot.slane %v2047, 4
        %v2049 = vrot.slane %v1517, 5
        %v2050 = vsel %vm779, %v2048, %v2049
        %v2051 = vrot.slane %v2049, 4
        %v2052 = vrot.slane %v1541, 5
        %v2053 = vsel %vm779, %v2051, %v2052
        %v2054 = vrot.slane %v1942, 5
        %v2055 = vrot.slane %v2054, 4
        %v2056 = vrot.slane %v1519, 5
        %v2057 = vsel %vm779, %v2055, %v2056
        %v2058 = vrot.slane %v2056, 4
        %v2059 = vrot.slane %v1542, 5
        %v2060 = vsel %vm779, %v2058, %v2059
        %v2061 = vrot.slane %v1943, 5
        %v2062 = vrot.slane %v2061, 4
        %v2063 = vrot.slane %v1521, 5
        %v2064 = vsel %vm779, %v2062, %v2063
        %v2065 = vrot.slane %v2063, 4
        %v2066 = vrot.slane %v1543, 5
        %v2067 = vsel %vm779, %v2065, %v2066
        %v2068 = vrot.slane %v1944, 5
        %v2069 = vrot.slane %v2068, 4
        %v2070 = vrot.slane %v1523, 5
        %v2071 = vsel %vm779, %v2069, %v2070
        %v2072 = vrot.slane %v2070, 4
        %v2073 = vrot.slane %v1544, 5
        %v2074 = vsel %vm779, %v2072, %v2073
        %v2075 = vrot.slane %v1945, 5
        %v2076 = vrot.slane %v2075, 4
        %v2077 = vrot.slane %v1525, 5
        %v2078 = vsel %vm779, %v2076, %v2077
        %v2079 = vrot.slane %v2077, 4
        %v2080 = vrot.slane %v1545, 5
        %v2081 = vsel %vm779, %v2079, %v2080
        %v2082 = vrot.slane %v1946, 5
        %v2083 = vrot.slane %v2082, 4
        %v2084 = vrot.slane %v1527, 5
        %v2085 = vsel %vm779, %v2083, %v2084
        %v2086 = vrot.slane %v2084, 4
        %v2087 = vrot.slane %v1546, 5
        %v2088 = vsel %vm779, %v2086, %v2087
        %v2089 = vrot.slane %v1947, 5
        %v2090 = vrot.slane %v2089, 4
        %v2091 = vrot.slane %v1529, 5
        %v2092 = vsel %vm779, %v2090, %v2091
        %v2093 = vrot.slane %v2091, 4
        %v2094 = vrot.slane %v1547, 5
        %v2095 = vsel %vm779, %v2093, %v2094
        %v2096 = vrot.slane %v1948, 5
        %v2097 = vrot.slane %v2096, 4
        %v2098 = vrot.slane %v1531, 5
        %v2099 = vsel %vm779, %v2097, %v2098
        %v2100 = vrot.slane %v2098, 4
        %v2101 = vrot.slane %v1548, 5
        %v2102 = vsel %vm779, %v2100, %v2101
        %v2103 = vrot.slane %v1949, 5
        %v2104 = vrot.slane %v2103, 4
        %v2105 = vrot.slane %v1533, 5
        %v2106 = vsel %vm779, %v2104, %v2105
        %v2107 = vrot.slane %v2105, 4
        %v2108 = vrot.slane %v1549, 5
        %v2109 = vsel %vm779, %v2107, %v2108
        %v2126 = vunpack.c.l.b16 %v278
        %v2127 = vunpack.c.l.b16 %v279
        %v2128 = vunpack.c.l.b16 %v280
        %v2129 = vunpack.c.l.b16 %v281
        %v2130 = vunpack.c.l.b16 %v282
        %v2131 = vunpack.c.l.b16 %v283
        %v2132 = vunpack.c.l.b16 %v284
        %v2133 = vunpack.c.l.b16 %v285
        %v2134 = vunpack.c.l.b16 %v286
        %v2135 = vunpack.c.l.b16 %v287
        %v2136 = vunpack.c.l.b16 %v288
        %v2137 = vunpack.c.l.b16 %v289
        %v2138 = vunpack.c.l.b16 %v290
        %v2139 = vunpack.c.l.b16 %v291
        %v2140 = vunpack.c.l.b16 %v292
        %v2141 = vunpack.c.l.b16 %v293
        %v2142 = vunpack.c.l.b16 %v294
        %v2143 = vunpack.c.l.b16 %v295
        %v2144 = vunpack.c.l.b16 %v296
        %v2145 = vunpack.c.l.b16 %v297
        %v2146 = vunpack.c.l.b16 %v298
        %v2147 = vunpack.c.l.b16 %v299
        %v2148 = vunpack.c.l.b16 %v300
        %v2149 = vunpack.c.l.b16 %v301
        %v2150 = vunpack.c.l.b16 %v302
        %v2151 = vunpack.c.l.b16 %v303
        %v2152 = vunpack.c.l.b16 %v304
        %v2153 = vunpack.c.l.b16 %v305
        %v2154 = vunpack.c.l.b16 %v306
        %v2155 = vunpack.c.l.b16 %v307
        %v2156 = vunpack.c.l.b16 %v308
        %v2157 = vunpack.c.l.b16 %v309
        %v2158 = vpack.c.b16 %v2127, %v2126
        %v2159 = vpack.c.b16 %v2129, %v2128
        %v2160 = vpack.c.b16 %v2131, %v2130
        %v2161 = vpack.c.b16 %v2133, %v2132
        %v2162 = vpack.c.b16 %v2135, %v2134
        %v2163 = vpack.c.b16 %v2137, %v2136
        %v2164 = vpack.c.b16 %v2139, %v2138
        %v2165 = vpack.c.b16 %v2141, %v2140
        %v2166 = vpack.c.b16 %v2143, %v2142
        %v2167 = vpack.c.b16 %v2145, %v2144
        %v2168 = vpack.c.b16 %v2147, %v2146
        %v2169 = vpack.c.b16 %v2149, %v2148
        %v2170 = vpack.c.b16 %v2151, %v2150
        %v2171 = vpack.c.b16 %v2153, %v2152
        %v2172 = vpack.c.b16 %v2155, %v2154
        %v2173 = vpack.c.b16 %v2157, %v2156
        %v2174 = vunpack.c.l.b16 %v342
        %v2175 = vunpack.c.l.b16 %v352
        %v2176 = vunpack.c.l.b16 %v366
        %v2177 = vunpack.c.l.b16 %v376
        %v2178 = vunpack.c.l.b16 %v390
        %v2179 = vunpack.c.l.b16 %v400
        %v2180 = vunpack.c.l.b16 %v414
        %v2181 = vunpack.c.l.b16 %v424
        %v2182 = vunpack.c.l.b16 %v438
        %v2183 = vunpack.c.l.b16 %v448
        %v2184 = vunpack.c.l.b16 %v462
        %v2185 = vunpack.c.l.b16 %v472
        %v2186 = vunpack.c.l.b16 %v486
        %v2187 = vunpack.c.l.b16 %v496
        %v2188 = vunpack.c.l.b16 %v510
        %v2189 = vunpack.c.l.b16 %v520
        %v2190 = vunpack.c.l.b16 %v534
        %v2191 = vunpack.c.l.b16 %v544
        %v2192 = vunpack.c.l.b16 %v558
        %v2193 = vunpack.c.l.b16 %v568
        %v2194 = vunpack.c.l.b16 %v582
        %v2195 = vunpack.c.l.b16 %v592
        %v2196 = vunpack.c.l.b16 %v606
        %v2197 = vunpack.c.l.b16 %v616
        %v2198 = vunpack.c.l.b16 %v630
        %v2199 = vunpack.c.l.b16 %v640
        %v2200 = vunpack.c.l.b16 %v654
        %v2201 = vunpack.c.l.b16 %v664
        %v2202 = vunpack.c.l.b16 %v678
        %v2203 = vunpack.c.l.b16 %v688
        %v2204 = vunpack.c.l.b16 %v702
        %v2205 = vunpack.c.l.b16 %v712
        %v2206 = vpack.c.b16 %v2175, %v2174
        %v2207 = vpack.c.b16 %v2177, %v2176
        %v2208 = vpack.c.b16 %v2179, %v2178
        %v2209 = vpack.c.b16 %v2181, %v2180
        %v2210 = vpack.c.b16 %v2183, %v2182
        %v2211 = vpack.c.b16 %v2185, %v2184
        %v2212 = vpack.c.b16 %v2187, %v2186
        %v2213 = vpack.c.b16 %v2189, %v2188
        %v2214 = vpack.c.b16 %v2191, %v2190
        %v2215 = vpack.c.b16 %v2193, %v2192
        %v2216 = vpack.c.b16 %v2195, %v2194
        %v2217 = vpack.c.b16 %v2197, %v2196
        %v2218 = vpack.c.b16 %v2199, %v2198
        %v2219 = vpack.c.b16 %v2201, %v2200
        %v2220 = vpack.c.b16 %v2203, %v2202
        %v2221 = vpack.c.b16 %v2205, %v2204
        %2222 = vrot.lane.b32.xlu0 %v2206, 4
        %v2223 = vpop.permute.xlu0 %2222
        %2224 = vrot.lane.b32.xlu0 %v2207, 4
        %v2225 = vpop.permute.xlu0 %2224
        %2226 = vrot.lane.b32.xlu0 %v2208, 4
        %v2227 = vpop.permute.xlu0 %2226
        %2228 = vrot.lane.b32.xlu0 %v2209, 4
        %v2229 = vpop.permute.xlu0 %2228
        %2230 = vrot.lane.b32.xlu0 %v2210, 4
        %v2231 = vpop.permute.xlu0 %2230
        %2232 = vrot.lane.b32.xlu0 %v2211, 4
        %v2233 = vpop.permute.xlu0 %2232
        %2234 = vrot.lane.b32.xlu0 %v2212, 4
        %v2235 = vpop.permute.xlu0 %2234
        %2236 = vrot.lane.b32.xlu0 %v2213, 4
        %v2237 = vpop.permute.xlu0 %2236
        %2238 = vrot.lane.b32.xlu0 %v2214, 4
        %v2239 = vpop.permute.xlu0 %2238
        %2240 = vrot.lane.b32.xlu0 %v2215, 4
        %v2241 = vpop.permute.xlu0 %2240
        %2242 = vrot.lane.b32.xlu0 %v2216, 4
        %v2243 = vpop.permute.xlu0 %2242
        %2244 = vrot.lane.b32.xlu0 %v2217, 4
        %v2245 = vpop.permute.xlu0 %2244
        %2246 = vrot.lane.b32.xlu0 %v2218, 4
        %v2247 = vpop.permute.xlu0 %2246
        %2248 = vrot.lane.b32.xlu0 %v2219, 4
        %v2249 = vpop.permute.xlu0 %2248
        %2250 = vrot.lane.b32.xlu0 %v2220, 4
        %v2251 = vpop.permute.xlu0 %2250
        %2252 = vrot.lane.b32.xlu0 %v2221, 4
        %v2253 = vpop.permute.xlu0 %2252
        %v2254 = vunpack.c.l.b16 %v783
        %v2255 = vunpack.c.l.b16 %v786
        %v2256 = vunpack.c.l.b16 %v790
        %v2257 = vunpack.c.l.b16 %v793
        %v2258 = vunpack.c.l.b16 %v797
        %v2259 = vunpack.c.l.b16 %v800
        %v2260 = vunpack.c.l.b16 %v804
        %v2261 = vunpack.c.l.b16 %v807
        %v2262 = vunpack.c.l.b16 %v811
        %v2263 = vunpack.c.l.b16 %v814
        %v2264 = vunpack.c.l.b16 %v818
        %v2265 = vunpack.c.l.b16 %v821
        %v2266 = vunpack.c.l.b16 %v825
        %v2267 = vunpack.c.l.b16 %v828
        %v2268 = vunpack.c.l.b16 %v832
        %v2269 = vunpack.c.l.b16 %v835
        %v2270 = vunpack.c.l.b16 %v839
        %v2271 = vunpack.c.l.b16 %v842
        %v2272 = vunpack.c.l.b16 %v846
        %v2273 = vunpack.c.l.b16 %v849
        %v2274 = vunpack.c.l.b16 %v853
        %v2275 = vunpack.c.l.b16 %v856
        %v2276 = vunpack.c.l.b16 %v860
        %v2277 = vunpack.c.l.b16 %v863
        %v2278 = vunpack.c.l.b16 %v867
        %v2279 = vunpack.c.l.b16 %v870
        %v2280 = vunpack.c.l.b16 %v874
        %v2281 = vunpack.c.l.b16 %v877
        %v2282 = vunpack.c.l.b16 %v881
        %v2283 = vunpack.c.l.b16 %v884
        %v2284 = vunpack.c.l.b16 %v888
        %v2285 = vunpack.c.l.b16 %v891
        %v2286 = vpack.c.b16 %v2255, %v2254
        %v2287 = vpack.c.b16 %v2257, %v2256
        %v2288 = vpack.c.b16 %v2259, %v2258
        %v2289 = vpack.c.b16 %v2261, %v2260
        %v2290 = vpack.c.b16 %v2263, %v2262
        %v2291 = vpack.c.b16 %v2265, %v2264
        %v2292 = vpack.c.b16 %v2267, %v2266
        %v2293 = vpack.c.b16 %v2269, %v2268
        %v2294 = vpack.c.b16 %v2271, %v2270
        %v2295 = vpack.c.b16 %v2273, %v2272
        %v2296 = vpack.c.b16 %v2275, %v2274
        %v2297 = vpack.c.b16 %v2277, %v2276
        %v2298 = vpack.c.b16 %v2279, %v2278
        %v2299 = vpack.c.b16 %v2281, %v2280
        %v2300 = vpack.c.b16 %v2283, %v2282
        %v2301 = vpack.c.b16 %v2285, %v2284
        %2302 = vrot.lane.b32.xlu0 %v2286, 8
        %v2303 = vpop.permute.xlu0 %2302
        %2304 = vrot.lane.b32.xlu0 %v2287, 8
        %v2305 = vpop.permute.xlu0 %2304
        %2306 = vrot.lane.b32.xlu0 %v2288, 8
        %v2307 = vpop.permute.xlu0 %2306
        %2308 = vrot.lane.b32.xlu0 %v2289, 8
        %v2309 = vpop.permute.xlu0 %2308
        %2310 = vrot.lane.b32.xlu0 %v2290, 8
        %v2311 = vpop.permute.xlu0 %2310
        %2312 = vrot.lane.b32.xlu0 %v2291, 8
        %v2313 = vpop.permute.xlu0 %2312
        %2314 = vrot.lane.b32.xlu0 %v2292, 8
        %v2315 = vpop.permute.xlu0 %2314
        %2316 = vrot.lane.b32.xlu0 %v2293, 8
        %v2317 = vpop.permute.xlu0 %2316
        %2318 = vrot.lane.b32.xlu0 %v2294, 8
        %v2319 = vpop.permute.xlu0 %2318
        %2320 = vrot.lane.b32.xlu0 %v2295, 8
        %v2321 = vpop.permute.xlu0 %2320
        %2322 = vrot.lane.b32.xlu0 %v2296, 8
        %v2323 = vpop.permute.xlu0 %2322
        %2324 = vrot.lane.b32.xlu0 %v2297, 8
        %v2325 = vpop.permute.xlu0 %2324
        %2326 = vrot.lane.b32.xlu0 %v2298, 8
        %v2327 = vpop.permute.xlu0 %2326
        %2328 = vrot.lane.b32.xlu0 %v2299, 8
        %v2329 = vpop.permute.xlu0 %2328
        %2330 = vrot.lane.b32.xlu0 %v2300, 8
        %v2331 = vpop.permute.xlu0 %2330
        %2332 = vrot.lane.b32.xlu0 %v2301, 8
        %v2333 = vpop.permute.xlu0 %2332
        %v2350 = vunpack.c.l.b16 %v893
        %v2351 = vunpack.c.l.b16 %v894
        %v2352 = vunpack.c.l.b16 %v895
        %v2353 = vunpack.c.l.b16 %v896
        %v2354 = vunpack.c.l.b16 %v897
        %v2355 = vunpack.c.l.b16 %v898
        %v2356 = vunpack.c.l.b16 %v899
        %v2357 = vunpack.c.l.b16 %v900
        %v2358 = vunpack.c.l.b16 %v901
        %v2359 = vunpack.c.l.b16 %v902
        %v2360 = vunpack.c.l.b16 %v903
        %v2361 = vunpack.c.l.b16 %v904
        %v2362 = vunpack.c.l.b16 %v905
        %v2363 = vunpack.c.l.b16 %v906
        %v2364 = vunpack.c.l.b16 %v907
        %v2365 = vunpack.c.l.b16 %v908
        %v2366 = vunpack.c.l.b16 %v909
        %v2367 = vunpack.c.l.b16 %v910
        %v2368 = vunpack.c.l.b16 %v911
        %v2369 = vunpack.c.l.b16 %v912
        %v2370 = vunpack.c.l.b16 %v913
        %v2371 = vunpack.c.l.b16 %v914
        %v2372 = vunpack.c.l.b16 %v915
        %v2373 = vunpack.c.l.b16 %v916
        %v2374 = vunpack.c.l.b16 %v917
        %v2375 = vunpack.c.l.b16 %v918
        %v2376 = vunpack.c.l.b16 %v919
        %v2377 = vunpack.c.l.b16 %v920
        %v2378 = vunpack.c.l.b16 %v921
        %v2379 = vunpack.c.l.b16 %v922
        %v2380 = vunpack.c.l.b16 %v923
        %v2381 = vunpack.c.l.b16 %v924
        %v2382 = vpack.c.b16 %v2351, %v2350
        %v2383 = vpack.c.b16 %v2353, %v2352
        %v2384 = vpack.c.b16 %v2355, %v2354
        %v2385 = vpack.c.b16 %v2357, %v2356
        %v2386 = vpack.c.b16 %v2359, %v2358
        %v2387 = vpack.c.b16 %v2361, %v2360
        %v2388 = vpack.c.b16 %v2363, %v2362
        %v2389 = vpack.c.b16 %v2365, %v2364
        %v2390 = vpack.c.b16 %v2367, %v2366
        %v2391 = vpack.c.b16 %v2369, %v2368
        %v2392 = vpack.c.b16 %v2371, %v2370
        %v2393 = vpack.c.b16 %v2373, %v2372
        %v2394 = vpack.c.b16 %v2375, %v2374
        %v2395 = vpack.c.b16 %v2377, %v2376
        %v2396 = vpack.c.b16 %v2379, %v2378
        %v2397 = vpack.c.b16 %v2381, %v2380
        %2398 = vrot.lane.b32.xlu0 %v2382, 12
        %v2399 = vpop.permute.xlu0 %2398
        %2400 = vrot.lane.b32.xlu0 %v2383, 12
        %v2401 = vpop.permute.xlu0 %2400
        %2402 = vrot.lane.b32.xlu0 %v2384, 12
        %v2403 = vpop.permute.xlu0 %2402
        %2404 = vrot.lane.b32.xlu0 %v2385, 12
        %v2405 = vpop.permute.xlu0 %2404
        %2406 = vrot.lane.b32.xlu0 %v2386, 12
        %v2407 = vpop.permute.xlu0 %2406
        %2408 = vrot.lane.b32.xlu0 %v2387, 12
        %v2409 = vpop.permute.xlu0 %2408
        %2410 = vrot.lane.b32.xlu0 %v2388, 12
        %v2411 = vpop.permute.xlu0 %2410
        %2412 = vrot.lane.b32.xlu0 %v2389, 12
        %v2413 = vpop.permute.xlu0 %2412
        %2414 = vrot.lane.b32.xlu0 %v2390, 12
        %v2415 = vpop.permute.xlu0 %2414
        %2416 = vrot.lane.b32.xlu0 %v2391, 12
        %v2417 = vpop.permute.xlu0 %2416
        %2418 = vrot.lane.b32.xlu0 %v2392, 12
        %v2419 = vpop.permute.xlu0 %2418
        %2420 = vrot.lane.b32.xlu0 %v2393, 12
        %v2421 = vpop.permute.xlu0 %2420
        %2422 = vrot.lane.b32.xlu0 %v2394, 12
        %v2423 = vpop.permute.xlu0 %2422
        %2424 = vrot.lane.b32.xlu0 %v2395, 12
        %v2425 = vpop.permute.xlu0 %2424
        %2426 = vrot.lane.b32.xlu0 %v2396, 12
        %v2427 = vpop.permute.xlu0 %2426
        %2428 = vrot.lane.b32.xlu0 %v2397, 12
        %v2429 = vpop.permute.xlu0 %2428
        %v2430 = vunpack.c.l.b16 %v954
        %v2431 = vunpack.c.l.b16 %v964
        %v2432 = vunpack.c.l.b16 %v978
        %v2433 = vunpack.c.l.b16 %v988
        %v2434 = vunpack.c.l.b16 %v1002
        %v2435 = vunpack.c.l.b16 %v1012
        %v2436 = vunpack.c.l.b16 %v1026
        %v2437 = vunpack.c.l.b16 %v1036
        %v2438 = vunpack.c.l.b16 %v1050
        %v2439 = vunpack.c.l.b16 %v1060
        %v2440 = vunpack.c.l.b16 %v1074
        %v2441 = vunpack.c.l.b16 %v1084
        %v2442 = vunpack.c.l.b16 %v1098
        %v2443 = vunpack.c.l.b16 %v1108
        %v2444 = vunpack.c.l.b16 %v1122
        %v2445 = vunpack.c.l.b16 %v1132
        %v2446 = vunpack.c.l.b16 %v1146
        %v2447 = vunpack.c.l.b16 %v1156
        %v2448 = vunpack.c.l.b16 %v1170
        %v2449 = vunpack.c.l.b16 %v1180
        %v2450 = vunpack.c.l.b16 %v1194
        %v2451 = vunpack.c.l.b16 %v1204
        %v2452 = vunpack.c.l.b16 %v1218
        %v2453 = vunpack.c.l.b16 %v1228
        %v2454 = vunpack.c.l.b16 %v1242
        %v2455 = vunpack.c.l.b16 %v1252
        %v2456 = vunpack.c.l.b16 %v1266
        %v2457 = vunpack.c.l.b16 %v1276
        %v2458 = vunpack.c.l.b16 %v1290
        %v2459 = vunpack.c.l.b16 %v1300
        %v2460 = vunpack.c.l.b16 %v1314
        %v2461 = vunpack.c.l.b16 %v1324
        %v2462 = vpack.c.b16 %v2431, %v2430
        %v2463 = vpack.c.b16 %v2433, %v2432
        %v2464 = vpack.c.b16 %v2435, %v2434
        %v2465 = vpack.c.b16 %v2437, %v2436
        %v2466 = vpack.c.b16 %v2439, %v2438
        %v2467 = vpack.c.b16 %v2441, %v2440
        %v2468 = vpack.c.b16 %v2443, %v2442
        %v2469 = vpack.c.b16 %v2445, %v2444
        %v2470 = vpack.c.b16 %v2447, %v2446
        %v2471 = vpack.c.b16 %v2449, %v2448
        %v2472 = vpack.c.b16 %v2451, %v2450
        %v2473 = vpack.c.b16 %v2453, %v2452
        %v2474 = vpack.c.b16 %v2455, %v2454
        %v2475 = vpack.c.b16 %v2457, %v2456
        %v2476 = vpack.c.b16 %v2459, %v2458
        %v2477 = vpack.c.b16 %v2461, %v2460
        %2478 = vrot.lane.b32.xlu0 %v2462, 16
        %v2479 = vpop.permute.xlu0 %2478
        %2480 = vrot.lane.b32.xlu0 %v2463, 16
        %v2481 = vpop.permute.xlu0 %2480
        %2482 = vrot.lane.b32.xlu0 %v2464, 16
        %v2483 = vpop.permute.xlu0 %2482
        %2484 = vrot.lane.b32.xlu0 %v2465, 16
        %v2485 = vpop.permute.xlu0 %2484
        %2486 = vrot.lane.b32.xlu0 %v2466, 16
        %v2487 = vpop.permute.xlu0 %2486
        %2488 = vrot.lane.b32.xlu0 %v2467, 16
        %v2489 = vpop.permute.xlu0 %2488
        %2490 = vrot.lane.b32.xlu0 %v2468, 16
        %v2491 = vpop.permute.xlu0 %2490
        %2492 = vrot.lane.b32.xlu0 %v2469, 16
        %v2493 = vpop.permute.xlu0 %2492
        %2494 = vrot.lane.b32.xlu0 %v2470, 16
        %v2495 = vpop.permute.xlu0 %2494
        %2496 = vrot.lane.b32.xlu0 %v2471, 16
        %v2497 = vpop.permute.xlu0 %2496
        %2498 = vrot.lane.b32.xlu0 %v2472, 16
        %v2499 = vpop.permute.xlu0 %2498
        %2500 = vrot.lane.b32.xlu0 %v2473, 16
        %v2501 = vpop.permute.xlu0 %2500
        %2502 = vrot.lane.b32.xlu0 %v2474, 16
        %v2503 = vpop.permute.xlu0 %2502
        %2504 = vrot.lane.b32.xlu0 %v2475, 16
        %v2505 = vpop.permute.xlu0 %2504
        %2506 = vrot.lane.b32.xlu0 %v2476, 16
        %v2507 = vpop.permute.xlu0 %2506
        %2508 = vrot.lane.b32.xlu0 %v2477, 16
        %v2509 = vpop.permute.xlu0 %2508
        %v2510 = vunpack.c.l.b16 %v1392
        %v2511 = vunpack.c.l.b16 %v1395
        %v2512 = vunpack.c.l.b16 %v1399
        %v2513 = vunpack.c.l.b16 %v1402
        %v2514 = vunpack.c.l.b16 %v1406
        %v2515 = vunpack.c.l.b16 %v1409
        %v2516 = vunpack.c.l.b16 %v1413
        %v2517 = vunpack.c.l.b16 %v1416
        %v2518 = vunpack.c.l.b16 %v1420
        %v2519 = vunpack.c.l.b16 %v1423
        %v2520 = vunpack.c.l.b16 %v1427
        %v2521 = vunpack.c.l.b16 %v1430
        %v2522 = vunpack.c.l.b16 %v1434
        %v2523 = vunpack.c.l.b16 %v1437
        %v2524 = vunpack.c.l.b16 %v1441
        %v2525 = vunpack.c.l.b16 %v1444
        %v2526 = vunpack.c.l.b16 %v1448
        %v2527 = vunpack.c.l.b16 %v1451
        %v2528 = vunpack.c.l.b16 %v1455
        %v2529 = vunpack.c.l.b16 %v1458
        %v2530 = vunpack.c.l.b16 %v1462
        %v2531 = vunpack.c.l.b16 %v1465
        %v2532 = vunpack.c.l.b16 %v1469
        %v2533 = vunpack.c.l.b16 %v1472
        %v2534 = vunpack.c.l.b16 %v1476
        %v2535 = vunpack.c.l.b16 %v1479
        %v2536 = vunpack.c.l.b16 %v1483
        %v2537 = vunpack.c.l.b16 %v1486
        %v2538 = vunpack.c.l.b16 %v1490
        %v2539 = vunpack.c.l.b16 %v1493
        %v2540 = vunpack.c.l.b16 %v1497
        %v2541 = vunpack.c.l.b16 %v1500
        %v2542 = vpack.c.b16 %v2511, %v2510
        %v2543 = vpack.c.b16 %v2513, %v2512
        %v2544 = vpack.c.b16 %v2515, %v2514
        %v2545 = vpack.c.b16 %v2517, %v2516
        %v2546 = vpack.c.b16 %v2519, %v2518
        %v2547 = vpack.c.b16 %v2521, %v2520
        %v2548 = vpack.c.b16 %v2523, %v2522
        %v2549 = vpack.c.b16 %v2525, %v2524
        %v2550 = vpack.c.b16 %v2527, %v2526
        %v2551 = vpack.c.b16 %v2529, %v2528
        %v2552 = vpack.c.b16 %v2531, %v2530
        %v2553 = vpack.c.b16 %v2533, %v2532
        %v2554 = vpack.c.b16 %v2535, %v2534
        %v2555 = vpack.c.b16 %v2537, %v2536
        %v2556 = vpack.c.b16 %v2539, %v2538
        %v2557 = vpack.c.b16 %v2541, %v2540
        %2558 = vrot.lane.b32.xlu0 %v2542, 20
        %v2559 = vpop.permute.xlu0 %2558
        %2560 = vrot.lane.b32.xlu0 %v2543, 20
        %v2561 = vpop.permute.xlu0 %2560
        %2562 = vrot.lane.b32.xlu0 %v2544, 20
        %v2563 = vpop.permute.xlu0 %2562
        %2564 = vrot.lane.b32.xlu0 %v2545, 20
        %v2565 = vpop.permute.xlu0 %2564
        %2566 = vrot.lane.b32.xlu0 %v2546, 20
        %v2567 = vpop.permute.xlu0 %2566
        %2568 = vrot.lane.b32.xlu0 %v2547, 20
        %v2569 = vpop.permute.xlu0 %2568
        %2570 = vrot.lane.b32.xlu0 %v2548, 20
        %v2571 = vpop.permute.xlu0 %2570
        %2572 = vrot.lane.b32.xlu0 %v2549, 20
        %v2573 = vpop.permute.xlu0 %2572
        %2574 = vrot.lane.b32.xlu0 %v2550, 20
        %v2575 = vpop.permute.xlu0 %2574
        %2576 = vrot.lane.b32.xlu0 %v2551, 20
        %v2577 = vpop.permute.xlu0 %2576
        %2578 = vrot.lane.b32.xlu0 %v2552, 20
        %v2579 = vpop.permute.xlu0 %2578
        %2580 = vrot.lane.b32.xlu0 %v2553, 20
        %v2581 = vpop.permute.xlu0 %2580
        %2582 = vrot.lane.b32.xlu0 %v2554, 20
        %v2583 = vpop.permute.xlu0 %2582
        %2584 = vrot.lane.b32.xlu0 %v2555, 20
        %v2585 = vpop.permute.xlu0 %2584
        %2586 = vrot.lane.b32.xlu0 %v2556, 20
        %v2587 = vpop.permute.xlu0 %2586
        %2588 = vrot.lane.b32.xlu0 %v2557, 20
        %v2589 = vpop.permute.xlu0 %2588
        %v2606 = vunpack.c.l.b16 %v1502
        %v2607 = vunpack.c.l.b16 %v1503
        %v2608 = vunpack.c.l.b16 %v1504
        %v2609 = vunpack.c.l.b16 %v1505
        %v2610 = vunpack.c.l.b16 %v1506
        %v2611 = vunpack.c.l.b16 %v1507
        %v2612 = vunpack.c.l.b16 %v1508
        %v2613 = vunpack.c.l.b16 %v1509
        %v2614 = vunpack.c.l.b16 %v1510
        %v2615 = vunpack.c.l.b16 %v1511
        %v2616 = vunpack.c.l.b16 %v1512
        %v2617 = vunpack.c.l.b16 %v1513
        %v2618 = vunpack.c.l.b16 %v1514
        %v2619 = vunpack.c.l.b16 %v1515
        %v2620 = vunpack.c.l.b16 %v1516
        %v2621 = vunpack.c.l.b16 %v1517
        %v2622 = vunpack.c.l.b16 %v1518
        %v2623 = vunpack.c.l.b16 %v1519
        %v2624 = vunpack.c.l.b16 %v1520
        %v2625 = vunpack.c.l.b16 %v1521
        %v2626 = vunpack.c.l.b16 %v1522
        %v2627 = vunpack.c.l.b16 %v1523
        %v2628 = vunpack.c.l.b16 %v1524
        %v2629 = vunpack.c.l.b16 %v1525
        %v2630 = vunpack.c.l.b16 %v1526
        %v2631 = vunpack.c.l.b16 %v1527
        %v2632 = vunpack.c.l.b16 %v1528
        %v2633 = vunpack.c.l.b16 %v1529
        %v2634 = vunpack.c.l.b16 %v1530
        %v2635 = vunpack.c.l.b16 %v1531
        %v2636 = vunpack.c.l.b16 %v1532
        %v2637 = vunpack.c.l.b16 %v1533
        %v2638 = vpack.c.b16 %v2607, %v2606
        %v2639 = vpack.c.b16 %v2609, %v2608
        %v2640 = vpack.c.b16 %v2611, %v2610
        %v2641 = vpack.c.b16 %v2613, %v2612
        %v2642 = vpack.c.b16 %v2615, %v2614
        %v2643 = vpack.c.b16 %v2617, %v2616
        %v2644 = vpack.c.b16 %v2619, %v2618
        %v2645 = vpack.c.b16 %v2621, %v2620
        %v2646 = vpack.c.b16 %v2623, %v2622
        %v2647 = vpack.c.b16 %v2625, %v2624
        %v2648 = vpack.c.b16 %v2627, %v2626
        %v2649 = vpack.c.b16 %v2629, %v2628
        %v2650 = vpack.c.b16 %v2631, %v2630
        %v2651 = vpack.c.b16 %v2633, %v2632
        %v2652 = vpack.c.b16 %v2635, %v2634
        %v2653 = vpack.c.b16 %v2637, %v2636
        %2654 = vrot.lane.b32.xlu0 %v2638, 24
        %v2655 = vpop.permute.xlu0 %2654
        %2656 = vrot.lane.b32.xlu0 %v2639, 24
        %v2657 = vpop.permute.xlu0 %2656
        %2658 = vrot.lane.b32.xlu0 %v2640, 24
        %v2659 = vpop.permute.xlu0 %2658
        %2660 = vrot.lane.b32.xlu0 %v2641, 24
        %v2661 = vpop.permute.xlu0 %2660
        %2662 = vrot.lane.b32.xlu0 %v2642, 24
        %v2663 = vpop.permute.xlu0 %2662
        %2664 = vrot.lane.b32.xlu0 %v2643, 24
        %v2665 = vpop.permute.xlu0 %2664
        %2666 = vrot.lane.b32.xlu0 %v2644, 24
        %v2667 = vpop.permute.xlu0 %2666
        %2668 = vrot.lane.b32.xlu0 %v2645, 24
        %v2669 = vpop.permute.xlu0 %2668
        %2670 = vrot.lane.b32.xlu0 %v2646, 24
        %v2671 = vpop.permute.xlu0 %2670
        %2672 = vrot.lane.b32.xlu0 %v2647, 24
        %v2673 = vpop.permute.xlu0 %2672
        %2674 = vrot.lane.b32.xlu0 %v2648, 24
        %v2675 = vpop.permute.xlu0 %2674
        %2676 = vrot.lane.b32.xlu0 %v2649, 24
        %v2677 = vpop.permute.xlu0 %2676
        %2678 = vrot.lane.b32.xlu0 %v2650, 24
        %v2679 = vpop.permute.xlu0 %2678
        %2680 = vrot.lane.b32.xlu0 %v2651, 24
        %v2681 = vpop.permute.xlu0 %2680
        %2682 = vrot.lane.b32.xlu0 %v2652, 24
        %v2683 = vpop.permute.xlu0 %2682
        %2684 = vrot.lane.b32.xlu0 %v2653, 24
        %v2685 = vpop.permute.xlu0 %2684
        %v2686 = vunpack.c.l.b16 %v1563
        %v2687 = vunpack.c.l.b16 %v1573
        %v2688 = vunpack.c.l.b16 %v1587
        %v2689 = vunpack.c.l.b16 %v1597
        %v2690 = vunpack.c.l.b16 %v1611
        %v2691 = vunpack.c.l.b16 %v1621
        %v2692 = vunpack.c.l.b16 %v1635
        %v2693 = vunpack.c.l.b16 %v1645
        %v2694 = vunpack.c.l.b16 %v1659
        %v2695 = vunpack.c.l.b16 %v1669
        %v2696 = vunpack.c.l.b16 %v1683
        %v2697 = vunpack.c.l.b16 %v1693
        %v2698 = vunpack.c.l.b16 %v1707
        %v2699 = vunpack.c.l.b16 %v1717
        %v2700 = vunpack.c.l.b16 %v1731
        %v2701 = vunpack.c.l.b16 %v1741
        %v2702 = vunpack.c.l.b16 %v1755
        %v2703 = vunpack.c.l.b16 %v1765
        %v2704 = vunpack.c.l.b16 %v1779
        %v2705 = vunpack.c.l.b16 %v1789
        %v2706 = vunpack.c.l.b16 %v1803
        %v2707 = vunpack.c.l.b16 %v1813
        %v2708 = vunpack.c.l.b16 %v1827
        %v2709 = vunpack.c.l.b16 %v1837
        %v2710 = vunpack.c.l.b16 %v1851
        %v2711 = vunpack.c.l.b16 %v1861
        %v2712 = vunpack.c.l.b16 %v1875
        %v2713 = vunpack.c.l.b16 %v1885
        %v2714 = vunpack.c.l.b16 %v1899
        %v2715 = vunpack.c.l.b16 %v1909
        %v2716 = vunpack.c.l.b16 %v1923
        %v2717 = vunpack.c.l.b16 %v1933
        %v2718 = vpack.c.b16 %v2687, %v2686
        %v2719 = vpack.c.b16 %v2689, %v2688
        %v2720 = vpack.c.b16 %v2691, %v2690
        %v2721 = vpack.c.b16 %v2693, %v2692
        %v2722 = vpack.c.b16 %v2695, %v2694
        %v2723 = vpack.c.b16 %v2697, %v2696
        %v2724 = vpack.c.b16 %v2699, %v2698
        %v2725 = vpack.c.b16 %v2701, %v2700
        %v2726 = vpack.c.b16 %v2703, %v2702
        %v2727 = vpack.c.b16 %v2705, %v2704
        %v2728 = vpack.c.b16 %v2707, %v2706
        %v2729 = vpack.c.b16 %v2709, %v2708
        %v2730 = vpack.c.b16 %v2711, %v2710
        %v2731 = vpack.c.b16 %v2713, %v2712
        %v2732 = vpack.c.b16 %v2715, %v2714
        %v2733 = vpack.c.b16 %v2717, %v2716
        %2734 = vrot.lane.b32.xlu0 %v2718, 28
        %v2735 = vpop.permute.xlu0 %2734
        %2736 = vrot.lane.b32.xlu0 %v2719, 28
        %v2737 = vpop.permute.xlu0 %2736
        %2738 = vrot.lane.b32.xlu0 %v2720, 28
        %v2739 = vpop.permute.xlu0 %2738
        %2740 = vrot.lane.b32.xlu0 %v2721, 28
        %v2741 = vpop.permute.xlu0 %2740
        %2742 = vrot.lane.b32.xlu0 %v2722, 28
        %v2743 = vpop.permute.xlu0 %2742
        %2744 = vrot.lane.b32.xlu0 %v2723, 28
        %v2745 = vpop.permute.xlu0 %2744
        %2746 = vrot.lane.b32.xlu0 %v2724, 28
        %v2747 = vpop.permute.xlu0 %2746
        %2748 = vrot.lane.b32.xlu0 %v2725, 28
        %v2749 = vpop.permute.xlu0 %2748
        %2750 = vrot.lane.b32.xlu0 %v2726, 28
        %v2751 = vpop.permute.xlu0 %2750
        %2752 = vrot.lane.b32.xlu0 %v2727, 28
        %v2753 = vpop.permute.xlu0 %2752
        %2754 = vrot.lane.b32.xlu0 %v2728, 28
        %v2755 = vpop.permute.xlu0 %2754
        %2756 = vrot.lane.b32.xlu0 %v2729, 28
        %v2757 = vpop.permute.xlu0 %2756
        %2758 = vrot.lane.b32.xlu0 %v2730, 28
        %v2759 = vpop.permute.xlu0 %2758
        %2760 = vrot.lane.b32.xlu0 %v2731, 28
        %v2761 = vpop.permute.xlu0 %2760
        %2762 = vrot.lane.b32.xlu0 %v2732, 28
        %v2763 = vpop.permute.xlu0 %2762
        %2764 = vrot.lane.b32.xlu0 %v2733, 28
        %v2765 = vpop.permute.xlu0 %2764
        %v2766 = vunpack.c.l.b16 %v2001
        %v2767 = vunpack.c.l.b16 %v2004
        %v2768 = vunpack.c.l.b16 %v2008
        %v2769 = vunpack.c.l.b16 %v2011
        %v2770 = vunpack.c.l.b16 %v2015
        %v2771 = vunpack.c.l.b16 %v2018
        %v2772 = vunpack.c.l.b16 %v2022
        %v2773 = vunpack.c.l.b16 %v2025
        %v2774 = vunpack.c.l.b16 %v2029
        %v2775 = vunpack.c.l.b16 %v2032
        %v2776 = vunpack.c.l.b16 %v2036
        %v2777 = vunpack.c.l.b16 %v2039
        %v2778 = vunpack.c.l.b16 %v2043
        %v2779 = vunpack.c.l.b16 %v2046
        %v2780 = vunpack.c.l.b16 %v2050
        %v2781 = vunpack.c.l.b16 %v2053
        %v2782 = vunpack.c.l.b16 %v2057
        %v2783 = vunpack.c.l.b16 %v2060
        %v2784 = vunpack.c.l.b16 %v2064
        %v2785 = vunpack.c.l.b16 %v2067
        %v2786 = vunpack.c.l.b16 %v2071
        %v2787 = vunpack.c.l.b16 %v2074
        %v2788 = vunpack.c.l.b16 %v2078
        %v2789 = vunpack.c.l.b16 %v2081
        %v2790 = vunpack.c.l.b16 %v2085
        %v2791 = vunpack.c.l.b16 %v2088
        %v2792 = vunpack.c.l.b16 %v2092
        %v2793 = vunpack.c.l.b16 %v2095
        %v2794 = vunpack.c.l.b16 %v2099
        %v2795 = vunpack.c.l.b16 %v2102
        %v2796 = vunpack.c.l.b16 %v2106
        %v2797 = vunpack.c.l.b16 %v2109
        %v2798 = vpack.c.b16 %v2767, %v2766
        %v2799 = vpack.c.b16 %v2769, %v2768
        %v2800 = vpack.c.b16 %v2771, %v2770
        %v2801 = vpack.c.b16 %v2773, %v2772
        %v2802 = vpack.c.b16 %v2775, %v2774
        %v2803 = vpack.c.b16 %v2777, %v2776
        %v2804 = vpack.c.b16 %v2779, %v2778
        %v2805 = vpack.c.b16 %v2781, %v2780
        %v2806 = vpack.c.b16 %v2783, %v2782
        %v2807 = vpack.c.b16 %v2785, %v2784
        %v2808 = vpack.c.b16 %v2787, %v2786
        %v2809 = vpack.c.b16 %v2789, %v2788
        %v2810 = vpack.c.b16 %v2791, %v2790
        %v2811 = vpack.c.b16 %v2793, %v2792
        %v2812 = vpack.c.b16 %v2795, %v2794
        %v2813 = vpack.c.b16 %v2797, %v2796
        %2814 = vrot.lane.b32.xlu0 %v2798, 32
        %v2815 = vpop.permute.xlu0 %2814
        %2816 = vrot.lane.b32.xlu0 %v2799, 32
        %v2817 = vpop.permute.xlu0 %2816
        %2818 = vrot.lane.b32.xlu0 %v2800, 32
        %v2819 = vpop.permute.xlu0 %2818
        %2820 = vrot.lane.b32.xlu0 %v2801, 32
        %v2821 = vpop.permute.xlu0 %2820
        %2822 = vrot.lane.b32.xlu0 %v2802, 32
        %v2823 = vpop.permute.xlu0 %2822
        %2824 = vrot.lane.b32.xlu0 %v2803, 32
        %v2825 = vpop.permute.xlu0 %2824
        %2826 = vrot.lane.b32.xlu0 %v2804, 32
        %v2827 = vpop.permute.xlu0 %2826
        %2828 = vrot.lane.b32.xlu0 %v2805, 32
        %v2829 = vpop.permute.xlu0 %2828
        %2830 = vrot.lane.b32.xlu0 %v2806, 32
        %v2831 = vpop.permute.xlu0 %2830
        %2832 = vrot.lane.b32.xlu0 %v2807, 32
        %v2833 = vpop.permute.xlu0 %2832
        %2834 = vrot.lane.b32.xlu0 %v2808, 32
        %v2835 = vpop.permute.xlu0 %2834
        %2836 = vrot.lane.b32.xlu0 %v2809, 32
        %v2837 = vpop.permute.xlu0 %2836
        %2838 = vrot.lane.b32.xlu0 %v2810, 32
        %v2839 = vpop.permute.xlu0 %2838
        %2840 = vrot.lane.b32.xlu0 %v2811, 32
        %v2841 = vpop.permute.xlu0 %2840
        %2842 = vrot.lane.b32.xlu0 %v2812, 32
        %v2843 = vpop.permute.xlu0 %2842
        %2844 = vrot.lane.b32.xlu0 %v2813, 32
        %v2845 = vpop.permute.xlu0 %2844
        %vm2846 = vcmask 31744
        %v2849 = vsel %vm2846, %v2158, %v2223
        %v2852 = vsel %vm2846, %v2159, %v2225
        %v2855 = vsel %vm2846, %v2160, %v2227
        %v2858 = vsel %vm2846, %v2161, %v2229
        %v2861 = vsel %vm2846, %v2162, %v2231
        %v2864 = vsel %vm2846, %v2163, %v2233
        %v2867 = vsel %vm2846, %v2164, %v2235
        %v2870 = vsel %vm2846, %v2165, %v2237
        %v2873 = vsel %vm2846, %v2166, %v2239
        %v2876 = vsel %vm2846, %v2167, %v2241
        %v2879 = vsel %vm2846, %v2168, %v2243
        %v2882 = vsel %vm2846, %v2169, %v2245
        %v2885 = vsel %vm2846, %v2170, %v2247
        %v2888 = vsel %vm2846, %v2171, %v2249
        %v2891 = vsel %vm2846, %v2172, %v2251
        %v2894 = vsel %vm2846, %v2173, %v2253
        %vm2895 = vcmask 64512
        %v2897 = vsel %vm2895, %v2849, %v2303
        %v2899 = vsel %vm2895, %v2852, %v2305
        %v2901 = vsel %vm2895, %v2855, %v2307
        %v2903 = vsel %vm2895, %v2858, %v2309
        %v2905 = vsel %vm2895, %v2861, %v2311
        %v2907 = vsel %vm2895, %v2864, %v2313
        %v2909 = vsel %vm2895, %v2867, %v2315
        %v2911 = vsel %vm2895, %v2870, %v2317
        %v2913 = vsel %vm2895, %v2873, %v2319
        %v2915 = vsel %vm2895, %v2876, %v2321
        %v2917 = vsel %vm2895, %v2879, %v2323
        %v2919 = vsel %vm2895, %v2882, %v2325
        %v2921 = vsel %vm2895, %v2885, %v2327
        %v2923 = vsel %vm2895, %v2888, %v2329
        %v2925 = vsel %vm2895, %v2891, %v2331
        %v2927 = vsel %vm2895, %v2894, %v2333
        %vm2928 = vcmask 97280
        %v2930 = vsel %vm2928, %v2897, %v2399
        %v2932 = vsel %vm2928, %v2899, %v2401
        %v2934 = vsel %vm2928, %v2901, %v2403
        %v2936 = vsel %vm2928, %v2903, %v2405
        %v2938 = vsel %vm2928, %v2905, %v2407
        %v2940 = vsel %vm2928, %v2907, %v2409
        %v2942 = vsel %vm2928, %v2909, %v2411
        %v2944 = vsel %vm2928, %v2911, %v2413
        %v2946 = vsel %vm2928, %v2913, %v2415
        %v2948 = vsel %vm2928, %v2915, %v2417
        %v2950 = vsel %vm2928, %v2917, %v2419
        %v2952 = vsel %vm2928, %v2919, %v2421
        %v2954 = vsel %vm2928, %v2921, %v2423
        %v2956 = vsel %vm2928, %v2923, %v2425
        %v2958 = vsel %vm2928, %v2925, %v2427
        %v2960 = vsel %vm2928, %v2927, %v2429
        %vm2961 = vcmask 130048
        %v2963 = vsel %vm2961, %v2930, %v2479
        %v2965 = vsel %vm2961, %v2932, %v2481
        %v2967 = vsel %vm2961, %v2934, %v2483
        %v2969 = vsel %vm2961, %v2936, %v2485
        %v2971 = vsel %vm2961, %v2938, %v2487
        %v2973 = vsel %vm2961, %v2940, %v2489
        %v2975 = vsel %vm2961, %v2942, %v2491
        %v2977 = vsel %vm2961, %v2944, %v2493
        %v2979 = vsel %vm2961, %v2946, %v2495
        %v2981 = vsel %vm2961, %v2948, %v2497
        %v2983 = vsel %vm2961, %v2950, %v2499
        %v2985 = vsel %vm2961, %v2952, %v2501
        %v2987 = vsel %vm2961, %v2954, %v2503
        %v2989 = vsel %vm2961, %v2956, %v2505
        %v2991 = vsel %vm2961, %v2958, %v2507
        %v2993 = vsel %vm2961, %v2960, %v2509
        %vm2994 = vcmask 162816
        %v2996 = vsel %vm2994, %v2963, %v2559
        %v2998 = vsel %vm2994, %v2965, %v2561
        %v3000 = vsel %vm2994, %v2967, %v2563
        %v3002 = vsel %vm2994, %v2969, %v2565
        %v3004 = vsel %vm2994, %v2971, %v2567
        %v3006 = vsel %vm2994, %v2973, %v2569
        %v3008 = vsel %vm2994, %v2975, %v2571
        %v3010 = vsel %vm2994, %v2977, %v2573
        %v3012 = vsel %vm2994, %v2979, %v2575
        %v3014 = vsel %vm2994, %v2981, %v2577
        %v3016 = vsel %vm2994, %v2983, %v2579
        %v3018 = vsel %vm2994, %v2985, %v2581
        %v3020 = vsel %vm2994, %v2987, %v2583
        %v3022 = vsel %vm2994, %v2989, %v2585
        %v3024 = vsel %vm2994, %v2991, %v2587
        %v3026 = vsel %vm2994, %v2993, %v2589
        %vm3027 = vcmask 195584
        %v3029 = vsel %vm3027, %v2996, %v2655
        %v3031 = vsel %vm3027, %v2998, %v2657
        %v3033 = vsel %vm3027, %v3000, %v2659
        %v3035 = vsel %vm3027, %v3002, %v2661
        %v3037 = vsel %vm3027, %v3004, %v2663
        %v3039 = vsel %vm3027, %v3006, %v2665
        %v3041 = vsel %vm3027, %v3008, %v2667
        %v3043 = vsel %vm3027, %v3010, %v2669
        %v3045 = vsel %vm3027, %v3012, %v2671
        %v3047 = vsel %vm3027, %v3014, %v2673
        %v3049 = vsel %vm3027, %v3016, %v2675
        %v3051 = vsel %vm3027, %v3018, %v2677
        %v3053 = vsel %vm3027, %v3020, %v2679
        %v3055 = vsel %vm3027, %v3022, %v2681
        %v3057 = vsel %vm3027, %v3024, %v2683
        %v3059 = vsel %vm3027, %v3026, %v2685
        %vm3060 = vcmask 228352
        %v3062 = vsel %vm3060, %v3029, %v2735
        %v3064 = vsel %vm3060, %v3031, %v2737
        %v3066 = vsel %vm3060, %v3033, %v2739
        %v3068 = vsel %vm3060, %v3035, %v2741
        %v3070 = vsel %vm3060, %v3037, %v2743
        %v3072 = vsel %vm3060, %v3039, %v2745
        %v3074 = vsel %vm3060, %v3041, %v2747
        %v3076 = vsel %vm3060, %v3043, %v2749
        %v3078 = vsel %vm3060, %v3045, %v2751
        %v3080 = vsel %vm3060, %v3047, %v2753
        %v3082 = vsel %vm3060, %v3049, %v2755
        %v3084 = vsel %vm3060, %v3051, %v2757
        %v3086 = vsel %vm3060, %v3053, %v2759
        %v3088 = vsel %vm3060, %v3055, %v2761
        %v3090 = vsel %vm3060, %v3057, %v2763
        %v3092 = vsel %vm3060, %v3059, %v2765
        %vm3093 = vcmask 261120
        %v3095 = vsel %vm3093, %v3062, %v2815
        %v3097 = vsel %vm3093, %v3064, %v2817
        %v3099 = vsel %vm3093, %v3066, %v2819
        %v3101 = vsel %vm3093, %v3068, %v2821
        %v3103 = vsel %vm3093, %v3070, %v2823
        %v3105 = vsel %vm3093, %v3072, %v2825
        %v3107 = vsel %vm3093, %v3074, %v2827
        %v3109 = vsel %vm3093, %v3076, %v2829
        %v3111 = vsel %vm3093, %v3078, %v2831
        %v3113 = vsel %vm3093, %v3080, %v2833
        %v3115 = vsel %vm3093, %v3082, %v2835
        %v3117 = vsel %vm3093, %v3084, %v2837
        %v3119 = vsel %vm3093, %v3086, %v2839
        %v3121 = vsel %vm3093, %v3088, %v2841
        %v3123 = vsel %vm3093, %v3090, %v2843
        %v3125 = vsel %vm3093, %v3092, %v2845
        %v3126 = vld [vmem:[%s1] sm:$0xff]
        %v3127 = vld [vmem:[%s1 + $0x8] sm:$0xff]
        %v3128 = vld [vmem:[%s1 + $0x10] sm:$0xff]
        %v3129 = vld [vmem:[%s1 + $0x18] sm:$0xff]
        %v3130 = vld [vmem:[%s1 + $0x20] sm:$0x33]
        %v3136 = vunpack.c.l.b16 %v3126
        %v3137 = vunpack.c.h.b16 %v3126
        %v3138 = vunpack.c.l.b16 %v3127
        %v3139 = vunpack.c.h.b16 %v3127
        %v3140 = vunpack.c.l.b16 %v3128
        %v3141 = vunpack.c.h.b16 %v3128
        %v3142 = vunpack.c.l.b16 %v3129
        %v3143 = vunpack.c.h.b16 %v3129
        %v3144 = vunpack.c.l.b16 %v3130
        %v3145 = vunpack.c.h.b16 %v3130
        %v3146 = vpack.c.b16 %v3138, %v3136
        %v3147 = vpack.c.b16 %v3139, %v3137
        %v3148 = vpack.c.b16 %v3142, %v3140
        %v3149 = vpack.c.b16 %v3143, %v3141
        %v3150 = vpack.c.b16 %v3144, %v3144
        %v3151 = vpack.c.b16 %v3145, %v3145
        %vm3156 = vcmask 293888
        %v3157 = vsel %vm3156, %v3095, 0
        %v3159 = vsel %vm3156, %v3097, 0
        %v3161 = vsel %vm3156, %v3099, 0
        %v3163 = vsel %vm3156, %v3101, 0
        %v3165 = vsel %vm3156, %v3103, 0
        %v3167 = vsel %vm3156, %v3105, 0
        %v3169 = vsel %vm3156, %v3107, 0
        %v3171 = vsel %vm3156, %v3109, 0
        %v3173 = vsel %vm3156, %v3111, 0
        %v3175 = vsel %vm3156, %v3113, 0
        %v3177 = vsel %vm3156, %v3115, 0
        %v3179 = vsel %vm3156, %v3117, 0
        %v3181 = vsel %vm3156, %v3119, 0
        %v3183 = vsel %vm3156, %v3121, 0
        %v3185 = vsel %vm3156, %v3123, 0
        %v3187 = vsel %vm3156, %v3125, 0
        %vm3189 = vcmask 1041408
        %v3191 = vsel %vm3189, %v3150, 0
        %v3194 = vsel %vm3189, %v3151, 0
        %3196 = vmatpush.bf16.msra.mxu0 0
        %3197 = vmatpush.bf16.msra.mxu0 0
        %3198 = vmatpush.bf16.msra.mxu0 0
        %3199 = vmatpush.bf16.msra.mxu0 0
        %3200 = vmatpush.bf16.msra.mxu0 0
        %3201 = vmatpush.bf16.msra.mxu0 %v3191
        %3202 = vmatpush.bf16.msra.mxu0 %v3148
        %3203 = vmatpush.bf16.msra.mxu0 %v3146
        %3204 = vmatmul.bf16.gmra.mxu0 %v3157
        %v3205 = vpop.f32.mrf.mxu0
        %v3206 = vadd.f32 0.0, %v3205
        %v3207 = vpop.f32.mrf.mxu0
        %v3208 = vadd.f32 0.0, %v3207
        %3209 = vmatmul.bf16.gmra.mxu0 %v3159
        %v3210 = vpop.f32.mrf.mxu0
        %v3211 = vadd.f32 0.0, %v3210
        %v3212 = vpop.f32.mrf.mxu0
        %v3213 = vadd.f32 0.0, %v3212
        %3214 = vmatmul.bf16.gmra.mxu0 %v3161
        %v3215 = vpop.f32.mrf.mxu0
        %v3216 = vadd.f32 0.0, %v3215
        %v3217 = vpop.f32.mrf.mxu0
        %v3218 = vadd.f32 0.0, %v3217
        %3219 = vmatmul.bf16.gmra.mxu0 %v3163
        %v3220 = vpop.f32.mrf.mxu0
        %v3221 = vadd.f32 0.0, %v3220
        %v3222 = vpop.f32.mrf.mxu0
        %v3223 = vadd.f32 0.0, %v3222
        %3224 = vmatmul.bf16.gmra.mxu0 %v3165
        %v3225 = vpop.f32.mrf.mxu0
        %v3226 = vadd.f32 0.0, %v3225
        %v3227 = vpop.f32.mrf.mxu0
        %v3228 = vadd.f32 0.0, %v3227
        %3229 = vmatmul.bf16.gmra.mxu0 %v3167
        %v3230 = vpop.f32.mrf.mxu0
        %v3231 = vadd.f32 0.0, %v3230
        %v3232 = vpop.f32.mrf.mxu0
        %v3233 = vadd.f32 0.0, %v3232
        %3234 = vmatmul.bf16.gmra.mxu0 %v3169
        %v3235 = vpop.f32.mrf.mxu0
        %v3236 = vadd.f32 0.0, %v3235
        %v3237 = vpop.f32.mrf.mxu0
        %v3238 = vadd.f32 0.0, %v3237
        %3239 = vmatmul.bf16.gmra.mxu0 %v3171
        %v3240 = vpop.f32.mrf.mxu0
        %v3241 = vadd.f32 0.0, %v3240
        %v3242 = vpop.f32.mrf.mxu0
        %v3243 = vadd.f32 0.0, %v3242
        %3244 = vmatmul.bf16.gmra.mxu0 %v3173
        %v3245 = vpop.f32.mrf.mxu0
        %v3246 = vadd.f32 0.0, %v3245
        %v3247 = vpop.f32.mrf.mxu0
        %v3248 = vadd.f32 0.0, %v3247
        %3249 = vmatmul.bf16.gmra.mxu0 %v3175
        %v3250 = vpop.f32.mrf.mxu0
        %v3251 = vadd.f32 0.0, %v3250
        %v3252 = vpop.f32.mrf.mxu0
        %v3253 = vadd.f32 0.0, %v3252
        %3254 = vmatmul.bf16.gmra.mxu0 %v3177
        %v3255 = vpop.f32.mrf.mxu0
        %v3256 = vadd.f32 0.0, %v3255
        %v3257 = vpop.f32.mrf.mxu0
        %v3258 = vadd.f32 0.0, %v3257
        %3259 = vmatmul.bf16.gmra.mxu0 %v3179
        %v3260 = vpop.f32.mrf.mxu0
        %v3261 = vadd.f32 0.0, %v3260
        %v3262 = vpop.f32.mrf.mxu0
        %v3263 = vadd.f32 0.0, %v3262
        %3264 = vmatmul.bf16.gmra.mxu0 %v3181
        %v3265 = vpop.f32.mrf.mxu0
        %v3266 = vadd.f32 0.0, %v3265
        %v3267 = vpop.f32.mrf.mxu0
        %v3268 = vadd.f32 0.0, %v3267
        %3269 = vmatmul.bf16.gmra.mxu0 %v3183
        %v3270 = vpop.f32.mrf.mxu0
        %v3271 = vadd.f32 0.0, %v3270
        %v3272 = vpop.f32.mrf.mxu0
        %v3273 = vadd.f32 0.0, %v3272
        %3274 = vmatmul.bf16.gmra.mxu0 %v3185
        %v3275 = vpop.f32.mrf.mxu0
        %v3276 = vadd.f32 0.0, %v3275
        %v3277 = vpop.f32.mrf.mxu0
        %v3278 = vadd.f32 0.0, %v3277
        %3279 = vmatmul.bf16.gmra.mxu0 %v3187
        %v3280 = vpop.f32.mrf.mxu0
        %v3281 = vadd.f32 0.0, %v3280
        %v3282 = vpop.f32.mrf.mxu0
        %v3283 = vadd.f32 0.0, %v3282
        %3284 = vdwg.mxu0
        %3285 = vmatpush.bf16.msra.mxu0 0
        %3286 = vmatpush.bf16.msra.mxu0 0
        %3287 = vmatpush.bf16.msra.mxu0 0
        %3288 = vmatpush.bf16.msra.mxu0 0
        %3289 = vmatpush.bf16.msra.mxu0 0
        %3290 = vmatpush.bf16.msra.mxu0 %v3194
        %3291 = vmatpush.bf16.msra.mxu0 %v3149
        %3292 = vmatpush.bf16.msra.mxu0 %v3147
        %3293 = vmatmul.bf16.gmra.mxu0 %v3157
        %v3294 = vpop.f32.mrf.mxu0
        %v3295 = vadd.f32 0.0, %v3294
        %v3296 = vpop.f32.mrf.mxu0
        %v3297 = vadd.f32 0.0, %v3296
        %3298 = vmatmul.bf16.gmra.mxu0 %v3159
        %v3299 = vpop.f32.mrf.mxu0
        %v3300 = vadd.f32 0.0, %v3299
        %v3301 = vpop.f32.mrf.mxu0
        %v3302 = vadd.f32 0.0, %v3301
        %3303 = vmatmul.bf16.gmra.mxu0 %v3161
        %v3304 = vpop.f32.mrf.mxu0
        %v3305 = vadd.f32 0.0, %v3304
        %v3306 = vpop.f32.mrf.mxu0
        %v3307 = vadd.f32 0.0, %v3306
        %3308 = vmatmul.bf16.gmra.mxu0 %v3163
        %v3309 = vpop.f32.mrf.mxu0
        %v3310 = vadd.f32 0.0, %v3309
        %v3311 = vpop.f32.mrf.mxu0
        %v3312 = vadd.f32 0.0, %v3311
        %3313 = vmatmul.bf16.gmra.mxu0 %v3165
        %v3314 = vpop.f32.mrf.mxu0
        %v3315 = vadd.f32 0.0, %v3314
        %v3316 = vpop.f32.mrf.mxu0
        %v3317 = vadd.f32 0.0, %v3316
        %3318 = vmatmul.bf16.gmra.mxu0 %v3167
        %v3319 = vpop.f32.mrf.mxu0
        %v3320 = vadd.f32 0.0, %v3319
        %v3321 = vpop.f32.mrf.mxu0
        %v3322 = vadd.f32 0.0, %v3321
        %3323 = vmatmul.bf16.gmra.mxu0 %v3169
        %v3324 = vpop.f32.mrf.mxu0
        %v3325 = vadd.f32 0.0, %v3324
        %v3326 = vpop.f32.mrf.mxu0
        %v3327 = vadd.f32 0.0, %v3326
        %3328 = vmatmul.bf16.gmra.mxu0 %v3171
        %v3329 = vpop.f32.mrf.mxu0
        %v3330 = vadd.f32 0.0, %v3329
        %v3331 = vpop.f32.mrf.mxu0
        %v3332 = vadd.f32 0.0, %v3331
        %3333 = vmatmul.bf16.gmra.mxu0 %v3173
        %v3334 = vpop.f32.mrf.mxu0
        %v3335 = vadd.f32 0.0, %v3334
        %v3336 = vpop.f32.mrf.mxu0
        %v3337 = vadd.f32 0.0, %v3336
        %3338 = vmatmul.bf16.gmra.mxu0 %v3175
        %v3339 = vpop.f32.mrf.mxu0
        %v3340 = vadd.f32 0.0, %v3339
        %v3341 = vpop.f32.mrf.mxu0
        %v3342 = vadd.f32 0.0, %v3341
        %3343 = vmatmul.bf16.gmra.mxu0 %v3177
        %v3344 = vpop.f32.mrf.mxu0
        %v3345 = vadd.f32 0.0, %v3344
        %v3346 = vpop.f32.mrf.mxu0
        %v3347 = vadd.f32 0.0, %v3346
        %3348 = vmatmul.bf16.gmra.mxu0 %v3179
        %v3349 = vpop.f32.mrf.mxu0
        %v3350 = vadd.f32 0.0, %v3349
        %v3351 = vpop.f32.mrf.mxu0
        %v3352 = vadd.f32 0.0, %v3351
        %3353 = vmatmul.bf16.gmra.mxu0 %v3181
        %v3354 = vpop.f32.mrf.mxu0
        %v3355 = vadd.f32 0.0, %v3354
        %v3356 = vpop.f32.mrf.mxu0
        %v3357 = vadd.f32 0.0, %v3356
        %3358 = vmatmul.bf16.gmra.mxu0 %v3183
        %v3359 = vpop.f32.mrf.mxu0
        %v3360 = vadd.f32 0.0, %v3359
        %v3361 = vpop.f32.mrf.mxu0
        %v3362 = vadd.f32 0.0, %v3361
        %3363 = vmatmul.bf16.gmra.mxu0 %v3185
        %v3364 = vpop.f32.mrf.mxu0
        %v3365 = vadd.f32 0.0, %v3364
        %v3366 = vpop.f32.mrf.mxu0
        %v3367 = vadd.f32 0.0, %v3366
        %3368 = vmatmul.bf16.gmra.mxu0 %v3187
        %v3369 = vpop.f32.mrf.mxu0
        %v3370 = vadd.f32 0.0, %v3369
        %v3371 = vpop.f32.mrf.mxu0
        %v3372 = vadd.f32 0.0, %v3371
        %3373 = vdwg.mxu0
        %v3374 = vpack.c.bf16 %v3206, %v3206
        %v3375 = vpack.c.bf16 %v3208, %v3208
        %v3376 = vpack.c.bf16 %v3211, %v3211
        %v3377 = vpack.c.bf16 %v3213, %v3213
        %v3378 = vpack.c.bf16 %v3216, %v3216
        %v3379 = vpack.c.bf16 %v3218, %v3218
        %v3380 = vpack.c.bf16 %v3221, %v3221
        %v3381 = vpack.c.bf16 %v3223, %v3223
        %v3382 = vpack.c.bf16 %v3226, %v3226
        %v3383 = vpack.c.bf16 %v3228, %v3228
        %v3384 = vpack.c.bf16 %v3231, %v3231
        %v3385 = vpack.c.bf16 %v3233, %v3233
        %v3386 = vpack.c.bf16 %v3236, %v3236
        %v3387 = vpack.c.bf16 %v3238, %v3238
        %v3388 = vpack.c.bf16 %v3241, %v3241
        %v3389 = vpack.c.bf16 %v3243, %v3243
        %v3390 = vpack.c.bf16 %v3246, %v3246
        %v3391 = vpack.c.bf16 %v3248, %v3248
        %v3392 = vpack.c.bf16 %v3251, %v3251
        %v3393 = vpack.c.bf16 %v3253, %v3253
        %v3394 = vpack.c.bf16 %v3256, %v3256
        %v3395 = vpack.c.bf16 %v3258, %v3258
        %v3396 = vpack.c.bf16 %v3261, %v3261
        %v3397 = vpack.c.bf16 %v3263, %v3263
        %v3398 = vpack.c.bf16 %v3266, %v3266
        %v3399 = vpack.c.bf16 %v3268, %v3268
        %v3400 = vpack.c.bf16 %v3271, %v3271
        %v3401 = vpack.c.bf16 %v3273, %v3273
        %v3402 = vpack.c.bf16 %v3276, %v3276
        %v3403 = vpack.c.bf16 %v3278, %v3278
        %v3404 = vpack.c.bf16 %v3281, %v3281
        %v3405 = vpack.c.bf16 %v3283, %v3283
        %3406 = vst [vmem:[%s271] sm:$0xf] %v3374
        %3407 = vst [vmem:[%s271 + $0x4] sm:$0xf] %v3375
        %3408 = vst [vmem:[%s271 + $0x8] sm:$0xf] %v3376
        %3409 = vst [vmem:[%s271 + $0xc] sm:$0xf] %v3377
        %3410 = vst [vmem:[%s271 + $0x10] sm:$0xf] %v3378
        %3411 = vst [vmem:[%s271 + $0x14] sm:$0xf] %v3379
        %3412 = vst [vmem:[%s271 + $0x18] sm:$0xf] %v3380
        %3413 = vst [vmem:[%s271 + $0x1c] sm:$0xf] %v3381
        %3414 = vst [vmem:[%s271 + $0x20] sm:$0xf] %v3382
        %3415 = vst [vmem:[%s271 + $0x24] sm:$0xf] %v3383
        %3416 = vst [vmem:[%s271 + $0x28] sm:$0xf] %v3384
        %3417 = vst [vmem:[%s271 + $0x2c] sm:$0xf] %v3385
        %3418 = vst [vmem:[%s271 + $0x30] sm:$0xf] %v3386
        %3419 = vst [vmem:[%s271 + $0x34] sm:$0xf] %v3387
        %3420 = vst [vmem:[%s271 + $0x38] sm:$0xf] %v3388
        %3421 = vst [vmem:[%s271 + $0x3c] sm:$0xf] %v3389
        %3422 = vst [vmem:[%s271 + $0x40] sm:$0xf] %v3390
        %3423 = vst [vmem:[%s271 + $0x44] sm:$0xf] %v3391
        %3424 = vst [vmem:[%s271 + $0x48] sm:$0xf] %v3392
        %3425 = vst [vmem:[%s271 + $0x4c] sm:$0xf] %v3393
        %3426 = vst [vmem:[%s271 + $0x50] sm:$0xf] %v3394
        %3427 = vst [vmem:[%s271 + $0x54] sm:$0xf] %v3395
        %3428 = vst [vmem:[%s271 + $0x58] sm:$0xf] %v3396
        %3429 = vst [vmem:[%s271 + $0x5c] sm:$0xf] %v3397
        %3430 = vst [vmem:[%s271 + $0x60] sm:$0xf] %v3398
        %3431 = vst [vmem:[%s271 + $0x64] sm:$0xf] %v3399
        %3432 = vst [vmem:[%s271 + $0x68] sm:$0xf] %v3400
        %3433 = vst [vmem:[%s271 + $0x6c] sm:$0xf] %v3401
        %3434 = vst [vmem:[%s271 + $0x70] sm:$0xf] %v3402
        %3435 = vst [vmem:[%s271 + $0x74] sm:$0xf] %v3403
        %3436 = vst [vmem:[%s271 + $0x78] sm:$0xf] %v3404
        %3437 = vst [vmem:[%s271 + $0x7c] sm:$0xf] %v3405
        %v3438 = vld [vmem:[%s2] sm:$0x1]
        %v3440 = vperm.slane %v3438, 0
        %v3442 = vmul.f32 %v3295, %v3440
        %v3443 = vmul.f32 %v3297, %v3440
        %v3444 = vmul.f32 %v3300, %v3440
        %v3445 = vmul.f32 %v3302, %v3440
        %v3446 = vmul.f32 %v3305, %v3440
        %v3447 = vmul.f32 %v3307, %v3440
        %v3448 = vmul.f32 %v3310, %v3440
        %v3449 = vmul.f32 %v3312, %v3440
        %v3450 = vmul.f32 %v3315, %v3440
        %v3451 = vmul.f32 %v3317, %v3440
        %v3452 = vmul.f32 %v3320, %v3440
        %v3453 = vmul.f32 %v3322, %v3440
        %v3454 = vmul.f32 %v3325, %v3440
        %v3455 = vmul.f32 %v3327, %v3440
        %v3456 = vmul.f32 %v3330, %v3440
        %v3457 = vmul.f32 %v3332, %v3440
        %v3458 = vmul.f32 %v3335, %v3440
        %v3459 = vmul.f32 %v3337, %v3440
        %v3460 = vmul.f32 %v3340, %v3440
        %v3461 = vmul.f32 %v3342, %v3440
        %v3462 = vmul.f32 %v3345, %v3440
        %v3463 = vmul.f32 %v3347, %v3440
        %v3464 = vmul.f32 %v3350, %v3440
        %v3465 = vmul.f32 %v3352, %v3440
        %v3466 = vmul.f32 %v3355, %v3440
        %v3467 = vmul.f32 %v3357, %v3440
        %v3468 = vmul.f32 %v3360, %v3440
        %v3469 = vmul.f32 %v3362, %v3440
        %v3470 = vmul.f32 %v3365, %v3440
        %v3471 = vmul.f32 %v3367, %v3440
        %v3472 = vmul.f32 %v3370, %v3440
        %v3473 = vmul.f32 %v3372, %v3440
        %v3474 = vld [vmem:[%s3] sm:$0x1]
        %v3476 = vperm.slane %v3474, 0
        %v3478 = vadd.f32 %v3442, %v3476
        %v3479 = vadd.f32 %v3443, %v3476
        %v3480 = vadd.f32 %v3444, %v3476
        %v3481 = vadd.f32 %v3445, %v3476
        %v3482 = vadd.f32 %v3446, %v3476
        %v3483 = vadd.f32 %v3447, %v3476
        %v3484 = vadd.f32 %v3448, %v3476
        %v3485 = vadd.f32 %v3449, %v3476
        %v3486 = vadd.f32 %v3450, %v3476
        %v3487 = vadd.f32 %v3451, %v3476
        %v3488 = vadd.f32 %v3452, %v3476
        %v3489 = vadd.f32 %v3453, %v3476
        %v3490 = vadd.f32 %v3454, %v3476
        %v3491 = vadd.f32 %v3455, %v3476
        %v3492 = vadd.f32 %v3456, %v3476
        %v3493 = vadd.f32 %v3457, %v3476
        %v3494 = vadd.f32 %v3458, %v3476
        %v3495 = vadd.f32 %v3459, %v3476
        %v3496 = vadd.f32 %v3460, %v3476
        %v3497 = vadd.f32 %v3461, %v3476
        %v3498 = vadd.f32 %v3462, %v3476
        %v3499 = vadd.f32 %v3463, %v3476
        %v3500 = vadd.f32 %v3464, %v3476
        %v3501 = vadd.f32 %v3465, %v3476
        %v3502 = vadd.f32 %v3466, %v3476
        %v3503 = vadd.f32 %v3467, %v3476
        %v3504 = vadd.f32 %v3468, %v3476
        %v3505 = vadd.f32 %v3469, %v3476
        %v3506 = vadd.f32 %v3470, %v3476
        %v3507 = vadd.f32 %v3471, %v3476
        %v3508 = vadd.f32 %v3472, %v3476
        %v3509 = vadd.f32 %v3473, %v3476
        %v3510 = vmax.f32 %v3478, 0.0
        %v3511 = vmax.f32 %v3479, 0.0
        %v3512 = vmax.f32 %v3480, 0.0
        %v3513 = vmax.f32 %v3481, 0.0
        %v3514 = vmax.f32 %v3482, 0.0
        %v3515 = vmax.f32 %v3483, 0.0
        %v3516 = vmax.f32 %v3484, 0.0
        %v3517 = vmax.f32 %v3485, 0.0
        %v3518 = vmax.f32 %v3486, 0.0
        %v3519 = vmax.f32 %v3487, 0.0
        %v3520 = vmax.f32 %v3488, 0.0
        %v3521 = vmax.f32 %v3489, 0.0
        %v3522 = vmax.f32 %v3490, 0.0
        %v3523 = vmax.f32 %v3491, 0.0
        %v3524 = vmax.f32 %v3492, 0.0
        %v3525 = vmax.f32 %v3493, 0.0
        %v3526 = vmax.f32 %v3494, 0.0
        %v3527 = vmax.f32 %v3495, 0.0
        %v3528 = vmax.f32 %v3496, 0.0
        %v3529 = vmax.f32 %v3497, 0.0
        %v3530 = vmax.f32 %v3498, 0.0
        %v3531 = vmax.f32 %v3499, 0.0
        %v3532 = vmax.f32 %v3500, 0.0
        %v3533 = vmax.f32 %v3501, 0.0
        %v3534 = vmax.f32 %v3502, 0.0
        %v3535 = vmax.f32 %v3503, 0.0
        %v3536 = vmax.f32 %v3504, 0.0
        %v3537 = vmax.f32 %v3505, 0.0
        %v3538 = vmax.f32 %v3506, 0.0
        %v3539 = vmax.f32 %v3507, 0.0
        %v3540 = vmax.f32 %v3508, 0.0
        %v3541 = vmax.f32 %v3509, 0.0
        %vm3542 = vcmask 60416
        %3543 = vst.msk [vmem:[#allocation2] sm:$0xf] %vm3542, 0
        %3544 = vst.msk [vmem:[#allocation2 + $0x4] sm:$0xf] %vm3542, 0
        %3545 = vst.msk [vmem:[#allocation2 + $0x8] sm:$0xf] %vm3542, 0
        %3546 = vst.msk [vmem:[#allocation2 + $0xc] sm:$0xf] %vm3542, 0
        %s3547 = scalar_lea.vmem [#allocation2], 272
        %3548 = vst.msk [vmem:[%s3547] sm:$0xf] %vm3542, 0
        %3549 = vst.msk [vmem:[%s3547 + $0x4] sm:$0xf] %vm3542, 0
        %3550 = vst.msk [vmem:[%s3547 + $0x8] sm:$0xf] %vm3542, 0
        %3551 = vst.msk [vmem:[%s3547 + $0xc] sm:$0xf] %vm3542, 0
        %s3552 = scalar_lea.vmem [#allocation2], 16
        %3553 = vst.msk [vmem:[%s3552] sm:$0xf] %vm3542, 0
        %3554 = vst.msk [vmem:[%s3552 + $0x10] sm:$0xf] %vm3542, 0
        %3555 = vst.msk [vmem:[%s3552 + $0x20] sm:$0xf] %vm3542, 0
        %3556 = vst.msk [vmem:[%s3552 + $0x30] sm:$0xf] %vm3542, 0
        %3557 = vst.msk [vmem:[%s3552 + $0x40] sm:$0xf] %vm3542, 0
        %3558 = vst.msk [vmem:[%s3552 + $0x50] sm:$0xf] %vm3542, 0
        %3559 = vst.msk [vmem:[%s3552 + $0x60] sm:$0xf] %vm3542, 0
        %3560 = vst.msk [vmem:[%s3552 + $0x70] sm:$0xf] %vm3542, 0
        %3561 = vst.msk [vmem:[%s3552 + $0x80] sm:$0xf] %vm3542, 0
        %3562 = vst.msk [vmem:[%s3552 + $0x90] sm:$0xf] %vm3542, 0
        %3563 = vst.msk [vmem:[%s3552 + $0xa0] sm:$0xf] %vm3542, 0
        %3564 = vst.msk [vmem:[%s3552 + $0xb0] sm:$0xf] %vm3542, 0
        %3565 = vst.msk [vmem:[%s3552 + $0xc0] sm:$0xf] %vm3542, 0
        %3566 = vst.msk [vmem:[%s3552 + $0xd0] sm:$0xf] %vm3542, 0
        %3567 = vst.msk [vmem:[%s3552 + $0xe0] sm:$0xf] %vm3542, 0
        %3568 = vst.msk [vmem:[%s3552 + $0xf0] sm:$0xf] %vm3542, 0
        %3569 = vst.msk [vmem:[%s3552 + $0xc] sm:$0xf] %vm3542, 0
        %3570 = vst.msk [vmem:[%s3552 + $0x1c] sm:$0xf] %vm3542, 0
        %3571 = vst.msk [vmem:[%s3552 + $0x2c] sm:$0xf] %vm3542, 0
        %3572 = vst.msk [vmem:[%s3552 + $0x3c] sm:$0xf] %vm3542, 0
        %3573 = vst.msk [vmem:[%s3552 + $0x4c] sm:$0xf] %vm3542, 0
        %3574 = vst.msk [vmem:[%s3552 + $0x5c] sm:$0xf] %vm3542, 0
        %3575 = vst.msk [vmem:[%s3552 + $0x6c] sm:$0xf] %vm3542, 0
        %3576 = vst.msk [vmem:[%s3552 + $0x7c] sm:$0xf] %vm3542, 0
        %3577 = vst.msk [vmem:[%s3552 + $0x8c] sm:$0xf] %vm3542, 0
        %3578 = vst.msk [vmem:[%s3552 + $0x9c] sm:$0xf] %vm3542, 0
        %3579 = vst.msk [vmem:[%s3552 + $0xac] sm:$0xf] %vm3542, 0
        %3580 = vst.msk [vmem:[%s3552 + $0xbc] sm:$0xf] %vm3542, 0
        %3581 = vst.msk [vmem:[%s3552 + $0xcc] sm:$0xf] %vm3542, 0
        %3582 = vst.msk [vmem:[%s3552 + $0xdc] sm:$0xf] %vm3542, 0
        %3583 = vst.msk [vmem:[%s3552 + $0xec] sm:$0xf] %vm3542, 0
        %3584 = vst.msk [vmem:[%s3552 + $0xfc] sm:$0xf] %vm3542, 0
        %v3585 = vpack.c.bf16 %v3510, %v3510
        %v3586 = vpack.c.bf16 %v3511, %v3511
        %v3587 = vpack.c.bf16 %v3512, %v3512
        %v3588 = vpack.c.bf16 %v3513, %v3513
        %v3589 = vpack.c.bf16 %v3514, %v3514
        %v3590 = vpack.c.bf16 %v3515, %v3515
        %v3591 = vpack.c.bf16 %v3516, %v3516
        %v3592 = vpack.c.bf16 %v3517, %v3517
        %v3593 = vpack.c.bf16 %v3518, %v3518
        %v3594 = vpack.c.bf16 %v3519, %v3519
        %v3595 = vpack.c.bf16 %v3520, %v3520
        %v3596 = vpack.c.bf16 %v3521, %v3521
        %v3597 = vpack.c.bf16 %v3522, %v3522
        %v3598 = vpack.c.bf16 %v3523, %v3523
        %v3599 = vpack.c.bf16 %v3524, %v3524
        %v3600 = vpack.c.bf16 %v3525, %v3525
        %v3601 = vpack.c.bf16 %v3526, %v3526
        %v3602 = vpack.c.bf16 %v3527, %v3527
        %v3603 = vpack.c.bf16 %v3528, %v3528
        %v3604 = vpack.c.bf16 %v3529, %v3529
        %v3605 = vpack.c.bf16 %v3530, %v3530
        %v3606 = vpack.c.bf16 %v3531, %v3531
        %v3607 = vpack.c.bf16 %v3532, %v3532
        %v3608 = vpack.c.bf16 %v3533, %v3533
        %v3609 = vpack.c.bf16 %v3534, %v3534
        %v3610 = vpack.c.bf16 %v3535, %v3535
        %v3611 = vpack.c.bf16 %v3536, %v3536
        %v3612 = vpack.c.bf16 %v3537, %v3537
        %v3613 = vpack.c.bf16 %v3538, %v3538
        %v3614 = vpack.c.bf16 %v3539, %v3539
        %v3615 = vpack.c.bf16 %v3540, %v3540
        %v3616 = vpack.c.bf16 %v3541, %v3541
        %3617 = vst.msk [vmem:[%s3552 + $0x4] sm:$0xf] %vm3542, %v3585
        %3618 = vst.msk [vmem:[%s3552 + $0x8] sm:$0xf] %vm3542, %v3586
        %3619 = vst.msk [vmem:[%s3552 + $0x14] sm:$0xf] %vm3542, %v3587
        %3620 = vst.msk [vmem:[%s3552 + $0x18] sm:$0xf] %vm3542, %v3588
        %3621 = vst.msk [vmem:[%s3552 + $0x24] sm:$0xf] %vm3542, %v3589
        %3622 = vst.msk [vmem:[%s3552 + $0x28] sm:$0xf] %vm3542, %v3590
        %3623 = vst.msk [vmem:[%s3552 + $0x34] sm:$0xf] %vm3542, %v3591
        %3624 = vst.msk [vmem:[%s3552 + $0x38] sm:$0xf] %vm3542, %v3592
        %3625 = vst.msk [vmem:[%s3552 + $0x44] sm:$0xf] %vm3542, %v3593
        %3626 = vst.msk [vmem:[%s3552 + $0x48] sm:$0xf] %vm3542, %v3594
        %3627 = vst.msk [vmem:[%s3552 + $0x54] sm:$0xf] %vm3542, %v3595
        %3628 = vst.msk [vmem:[%s3552 + $0x58] sm:$0xf] %vm3542, %v3596
        %3629 = vst.msk [vmem:[%s3552 + $0x64] sm:$0xf] %vm3542, %v3597
        %3630 = vst.msk [vmem:[%s3552 + $0x68] sm:$0xf] %vm3542, %v3598
        %3631 = vst.msk [vmem:[%s3552 + $0x74] sm:$0xf] %vm3542, %v3599
        %3632 = vst.msk [vmem:[%s3552 + $0x78] sm:$0xf] %vm3542, %v3600
        %3633 = vst.msk [vmem:[%s3552 + $0x84] sm:$0xf] %vm3542, %v3601
        %3634 = vst.msk [vmem:[%s3552 + $0x88] sm:$0xf] %vm3542, %v3602
        %3635 = vst.msk [vmem:[%s3552 + $0x94] sm:$0xf] %vm3542, %v3603
        %3636 = vst.msk [vmem:[%s3552 + $0x98] sm:$0xf] %vm3542, %v3604
        %3637 = vst.msk [vmem:[%s3552 + $0xa4] sm:$0xf] %vm3542, %v3605
        %3638 = vst.msk [vmem:[%s3552 + $0xa8] sm:$0xf] %vm3542, %v3606
        %3639 = vst.msk [vmem:[%s3552 + $0xb4] sm:$0xf] %vm3542, %v3607
        %3640 = vst.msk [vmem:[%s3552 + $0xb8] sm:$0xf] %vm3542, %v3608
        %3641 = vst.msk [vmem:[%s3552 + $0xc4] sm:$0xf] %vm3542, %v3609
        %3642 = vst.msk [vmem:[%s3552 + $0xc8] sm:$0xf] %vm3542, %v3610
        %3643 = vst.msk [vmem:[%s3552 + $0xd4] sm:$0xf] %vm3542, %v3611
        %3644 = vst.msk [vmem:[%s3552 + $0xd8] sm:$0xf] %vm3542, %v3612
        %3645 = vst.msk [vmem:[%s3552 + $0xe4] sm:$0xf] %vm3542, %v3613
        %3646 = vst.msk [vmem:[%s3552 + $0xe8] sm:$0xf] %vm3542, %v3614
        %3647 = vst.msk [vmem:[%s3552 + $0xf4] sm:$0xf] %vm3542, %v3615
        %3648 = vst.msk [vmem:[%s3552 + $0xf8] sm:$0xf] %vm3542, %v3616
        %v3649 = vld [vmem:[#allocation2] sm:$0x8]
        %v3650 = vld [vmem:[#allocation2 + $0x4] sm:$0xf]
        %v3651 = vld [vmem:[#allocation2 + $0x8] sm:$0xf]
        %v3652 = vld [vmem:[#allocation2 + $0x10] sm:$0x8]
        %v3653 = vld [vmem:[#allocation2 + $0x14] sm:$0xf]
        %v3654 = vld [vmem:[#allocation2 + $0x18] sm:$0xf]
        %v3655 = vld [vmem:[#allocation2 + $0x20] sm:$0x8]
        %v3656 = vld [vmem:[#allocation2 + $0x24] sm:$0xf]
        %v3657 = vld [vmem:[#allocation2 + $0x28] sm:$0xf]
        %v3658 = vld [vmem:[#allocation2 + $0x30] sm:$0x8]
        %v3659 = vld [vmem:[#allocation2 + $0x34] sm:$0xf]
        %v3660 = vld [vmem:[#allocation2 + $0x38] sm:$0xf]
        %v3661 = vld [vmem:[#allocation2 + $0x40] sm:$0x8]
        %v3662 = vld [vmem:[#allocation2 + $0x44] sm:$0xf]
        %v3663 = vld [vmem:[#allocation2 + $0x48] sm:$0xf]
        %v3664 = vld [vmem:[#allocation2 + $0x50] sm:$0x8]
        %v3665 = vld [vmem:[#allocation2 + $0x54] sm:$0xf]
        %v3666 = vld [vmem:[#allocation2 + $0x58] sm:$0xf]
        %v3667 = vld [vmem:[#allocation2 + $0x60] sm:$0x8]
        %v3668 = vld [vmem:[#allocation2 + $0x64] sm:$0xf]
        %v3669 = vld [vmem:[#allocation2 + $0x68] sm:$0xf]
        %v3670 = vld [vmem:[#allocation2 + $0x70] sm:$0x8]
        %v3671 = vld [vmem:[#allocation2 + $0x74] sm:$0xf]
        %v3672 = vld [vmem:[#allocation2 + $0x78] sm:$0xf]
        %v3673 = vld [vmem:[#allocation2 + $0x80] sm:$0x8]
        %v3674 = vld [vmem:[#allocation2 + $0x84] sm:$0xf]
        %v3675 = vld [vmem:[#allocation2 + $0x88] sm:$0xf]
        %v3676 = vld [vmem:[#allocation2 + $0x90] sm:$0x8]
        %v3677 = vld [vmem:[#allocation2 + $0x94] sm:$0xf]
        %v3678 = vld [vmem:[#allocation2 + $0x98] sm:$0xf]
        %v3679 = vld [vmem:[#allocation2 + $0xa0] sm:$0x8]
        %v3680 = vld [vmem:[#allocation2 + $0xa4] sm:$0xf]
        %v3681 = vld [vmem:[#allocation2 + $0xa8] sm:$0xf]
        %v3682 = vld [vmem:[#allocation2 + $0xb0] sm:$0x8]
        %v3683 = vld [vmem:[#allocation2 + $0xb4] sm:$0xf]
        %v3684 = vld [vmem:[#allocation2 + $0xb8] sm:$0xf]
        %v3685 = vld [vmem:[#allocation2 + $0xc0] sm:$0x8]
        %v3686 = vld [vmem:[#allocation2 + $0xc4] sm:$0xf]
        %v3687 = vld [vmem:[#allocation2 + $0xc8] sm:$0xf]
        %v3688 = vld [vmem:[#allocation2 + $0xd0] sm:$0x8]
        %v3689 = vld [vmem:[#allocation2 + $0xd4] sm:$0xf]
        %v3690 = vld [vmem:[#allocation2 + $0xd8] sm:$0xf]
        %v3691 = vld [vmem:[#allocation2 + $0xe0] sm:$0x8]
        %v3692 = vld [vmem:[#allocation2 + $0xe4] sm:$0xf]
        %v3693 = vld [vmem:[#allocation2 + $0xe8] sm:$0xf]
        %v3694 = vld [vmem:[#allocation2 + $0xf0] sm:$0x8]
        %v3695 = vld [vmem:[#allocation2 + $0xf4] sm:$0xf]
        %v3696 = vld [vmem:[#allocation2 + $0xf8] sm:$0xf]
        %vm3697 = vsmask.f32 256
        %vm3698 = vsmask.f32 4368
        %vm3699 = vmor %vm3697, %vm3698
        %v3701 = vshrl.u32 %v3649, 16
        %v3703 = vrot.slane %v3701, 7
        %v3704 = vrot.slane %v3703, 4
        %v3706 = vshrl.u32 %v3650, 16
        %v3708 = vrot.slane %v3706, 7
        %v3709 = vshll.u32 %v3650, 16
        %v3711 = vor.u32 %v3708, %v3709
        %v3712 = vsel %vm3699, %v3704, %v3711
        %v3713 = vrot.slane %v3708, 4
        %v3715 = vshrl.u32 %v3651, 16
        %v3717 = vrot.slane %v3715, 7
        %v3718 = vshll.u32 %v3651, 16
        %v3720 = vor.u32 %v3717, %v3718
        %v3721 = vsel %vm3699, %v3713, %v3720
        %v3723 = vshrl.u32 %v3652, 16
        %v3725 = vrot.slane %v3723, 7
        %v3726 = vrot.slane %v3725, 4
        %v3728 = vshrl.u32 %v3653, 16
        %v3730 = vrot.slane %v3728, 7
        %v3731 = vshll.u32 %v3653, 16
        %v3733 = vor.u32 %v3730, %v3731
        %v3734 = vsel %vm3699, %v3726, %v3733
        %v3735 = vrot.slane %v3730, 4
        %v3737 = vshrl.u32 %v3654, 16
        %v3739 = vrot.slane %v3737, 7
        %v3740 = vshll.u32 %v3654, 16
        %v3742 = vor.u32 %v3739, %v3740
        %v3743 = vsel %vm3699, %v3735, %v3742
        %v3745 = vshrl.u32 %v3655, 16
        %v3747 = vrot.slane %v3745, 7
        %v3748 = vrot.slane %v3747, 4
        %v3750 = vshrl.u32 %v3656, 16
        %v3752 = vrot.slane %v3750, 7
        %v3753 = vshll.u32 %v3656, 16
        %v3755 = vor.u32 %v3752, %v3753
        %v3756 = vsel %vm3699, %v3748, %v3755
        %v3757 = vrot.slane %v3752, 4
        %v3759 = vshrl.u32 %v3657, 16
        %v3761 = vrot.slane %v3759, 7
        %v3762 = vshll.u32 %v3657, 16
        %v3764 = vor.u32 %v3761, %v3762
        %v3765 = vsel %vm3699, %v3757, %v3764
        %v3767 = vshrl.u32 %v3658, 16
        %v3769 = vrot.slane %v3767, 7
        %v3770 = vrot.slane %v3769, 4
        %v3772 = vshrl.u32 %v3659, 16
        %v3774 = vrot.slane %v3772, 7
        %v3775 = vshll.u32 %v3659, 16
        %v3777 = vor.u32 %v3774, %v3775
        %v3778 = vsel %vm3699, %v3770, %v3777
        %v3779 = vrot.slane %v3774, 4
        %v3781 = vshrl.u32 %v3660, 16
        %v3783 = vrot.slane %v3781, 7
        %v3784 = vshll.u32 %v3660, 16
        %v3786 = vor.u32 %v3783, %v3784
        %v3787 = vsel %vm3699, %v3779, %v3786
        %v3789 = vshrl.u32 %v3661, 16
        %v3791 = vrot.slane %v3789, 7
        %v3792 = vrot.slane %v3791, 4
        %v3794 = vshrl.u32 %v3662, 16
        %v3796 = vrot.slane %v3794, 7
        %v3797 = vshll.u32 %v3662, 16
        %v3799 = vor.u32 %v3796, %v3797
        %v3800 = vsel %vm3699, %v3792, %v3799
        %v3801 = vrot.slane %v3796, 4
        %v3803 = vshrl.u32 %v3663, 16
        %v3805 = vrot.slane %v3803, 7
        %v3806 = vshll.u32 %v3663, 16
        %v3808 = vor.u32 %v3805, %v3806
        %v3809 = vsel %vm3699, %v3801, %v3808
        %v3811 = vshrl.u32 %v3664, 16
        %v3813 = vrot.slane %v3811, 7
        %v3814 = vrot.slane %v3813, 4
        %v3816 = vshrl.u32 %v3665, 16
        %v3818 = vrot.slane %v3816, 7
        %v3819 = vshll.u32 %v3665, 16
        %v3821 = vor.u32 %v3818, %v3819
        %v3822 = vsel %vm3699, %v3814, %v3821
        %v3823 = vrot.slane %v3818, 4
        %v3825 = vshrl.u32 %v3666, 16
        %v3827 = vrot.slane %v3825, 7
        %v3828 = vshll.u32 %v3666, 16
        %v3830 = vor.u32 %v3827, %v3828
        %v3831 = vsel %vm3699, %v3823, %v3830
        %v3833 = vshrl.u32 %v3667, 16
        %v3835 = vrot.slane %v3833, 7
        %v3836 = vrot.slane %v3835, 4
        %v3838 = vshrl.u32 %v3668, 16
        %v3840 = vrot.slane %v3838, 7
        %v3841 = vshll.u32 %v3668, 16
        %v3843 = vor.u32 %v3840, %v3841
        %v3844 = vsel %vm3699, %v3836, %v3843
        %v3845 = vrot.slane %v3840, 4
        %v3847 = vshrl.u32 %v3669, 16
        %v3849 = vrot.slane %v3847, 7
        %v3850 = vshll.u32 %v3669, 16
        %v3852 = vor.u32 %v3849, %v3850
        %v3853 = vsel %vm3699, %v3845, %v3852
        %v3855 = vshrl.u32 %v3670, 16
        %v3857 = vrot.slane %v3855, 7
        %v3858 = vrot.slane %v3857, 4
        %v3860 = vshrl.u32 %v3671, 16
        %v3862 = vrot.slane %v3860, 7
        %v3863 = vshll.u32 %v3671, 16
        %v3865 = vor.u32 %v3862, %v3863
        %v3866 = vsel %vm3699, %v3858, %v3865
        %v3867 = vrot.slane %v3862, 4
        %v3869 = vshrl.u32 %v3672, 16
        %v3871 = vrot.slane %v3869, 7
        %v3872 = vshll.u32 %v3672, 16
        %v3874 = vor.u32 %v3871, %v3872
        %v3875 = vsel %vm3699, %v3867, %v3874
        %v3877 = vshrl.u32 %v3673, 16
        %v3879 = vrot.slane %v3877, 7
        %v3880 = vrot.slane %v3879, 4
        %v3882 = vshrl.u32 %v3674, 16
        %v3884 = vrot.slane %v3882, 7
        %v3885 = vshll.u32 %v3674, 16
        %v3887 = vor.u32 %v3884, %v3885
        %v3888 = vsel %vm3699, %v3880, %v3887
        %v3889 = vrot.slane %v3884, 4
        %v3891 = vshrl.u32 %v3675, 16
        %v3893 = vrot.slane %v3891, 7
        %v3894 = vshll.u32 %v3675, 16
        %v3896 = vor.u32 %v3893, %v3894
        %v3897 = vsel %vm3699, %v3889, %v3896
        %v3899 = vshrl.u32 %v3676, 16
        %v3901 = vrot.slane %v3899, 7
        %v3902 = vrot.slane %v3901, 4
        %v3904 = vshrl.u32 %v3677, 16
        %v3906 = vrot.slane %v3904, 7
        %v3907 = vshll.u32 %v3677, 16
        %v3909 = vor.u32 %v3906, %v3907
        %v3910 = vsel %vm3699, %v3902, %v3909
        %v3911 = vrot.slane %v3906, 4
        %v3913 = vshrl.u32 %v3678, 16
        %v3915 = vrot.slane %v3913, 7
        %v3916 = vshll.u32 %v3678, 16
        %v3918 = vor.u32 %v3915, %v3916
        %v3919 = vsel %vm3699, %v3911, %v3918
        %v3921 = vshrl.u32 %v3679, 16
        %v3923 = vrot.slane %v3921, 7
        %v3924 = vrot.slane %v3923, 4
        %v3926 = vshrl.u32 %v3680, 16
        %v3928 = vrot.slane %v3926, 7
        %v3929 = vshll.u32 %v3680, 16
        %v3931 = vor.u32 %v3928, %v3929
        %v3932 = vsel %vm3699, %v3924, %v3931
        %v3933 = vrot.slane %v3928, 4
        %v3935 = vshrl.u32 %v3681, 16
        %v3937 = vrot.slane %v3935, 7
        %v3938 = vshll.u32 %v3681, 16
        %v3940 = vor.u32 %v3937, %v3938
        %v3941 = vsel %vm3699, %v3933, %v3940
        %v3943 = vshrl.u32 %v3682, 16
        %v3945 = vrot.slane %v3943, 7
        %v3946 = vrot.slane %v3945, 4
        %v3948 = vshrl.u32 %v3683, 16
        %v3950 = vrot.slane %v3948, 7
        %v3951 = vshll.u32 %v3683, 16
        %v3953 = vor.u32 %v3950, %v3951
        %v3954 = vsel %vm3699, %v3946, %v3953
        %v3955 = vrot.slane %v3950, 4
        %v3957 = vshrl.u32 %v3684, 16
        %v3959 = vrot.slane %v3957, 7
        %v3960 = vshll.u32 %v3684, 16
        %v3962 = vor.u32 %v3959, %v3960
        %v3963 = vsel %vm3699, %v3955, %v3962
        %v3965 = vshrl.u32 %v3685, 16
        %v3967 = vrot.slane %v3965, 7
        %v3968 = vrot.slane %v3967, 4
        %v3970 = vshrl.u32 %v3686, 16
        %v3972 = vrot.slane %v3970, 7
        %v3973 = vshll.u32 %v3686, 16
        %v3975 = vor.u32 %v3972, %v3973
        %v3976 = vsel %vm3699, %v3968, %v3975
        %v3977 = vrot.slane %v3972, 4
        %v3979 = vshrl.u32 %v3687, 16
        %v3981 = vrot.slane %v3979, 7
        %v3982 = vshll.u32 %v3687, 16
        %v3984 = vor.u32 %v3981, %v3982
        %v3985 = vsel %vm3699, %v3977, %v3984
        %v3987 = vshrl.u32 %v3688, 16
        %v3989 = vrot.slane %v3987, 7
        %v3990 = vrot.slane %v3989, 4
        %v3992 = vshrl.u32 %v3689, 16
        %v3994 = vrot.slane %v3992, 7
        %v3995 = vshll.u32 %v3689, 16
        %v3997 = vor.u32 %v3994, %v3995
        %v3998 = vsel %vm3699, %v3990, %v3997
        %v3999 = vrot.slane %v3994, 4
        %v4001 = vshrl.u32 %v3690, 16
        %v4003 = vrot.slane %v4001, 7
        %v4004 = vshll.u32 %v3690, 16
        %v4006 = vor.u32 %v4003, %v4004
        %v4007 = vsel %vm3699, %v3999, %v4006
        %v4009 = vshrl.u32 %v3691, 16
        %v4011 = vrot.slane %v4009, 7
        %v4012 = vrot.slane %v4011, 4
        %v4014 = vshrl.u32 %v3692, 16
        %v4016 = vrot.slane %v4014, 7
        %v4017 = vshll.u32 %v3692, 16
        %v4019 = vor.u32 %v4016, %v4017
        %v4020 = vsel %vm3699, %v4012, %v4019
        %v4021 = vrot.slane %v4016, 4
        %v4023 = vshrl.u32 %v3693, 16
        %v4025 = vrot.slane %v4023, 7
        %v4026 = vshll.u32 %v3693, 16
        %v4028 = vor.u32 %v4025, %v4026
        %v4029 = vsel %vm3699, %v4021, %v4028
        %v4031 = vshrl.u32 %v3694, 16
        %v4033 = vrot.slane %v4031, 7
        %v4034 = vrot.slane %v4033, 4
        %v4036 = vshrl.u32 %v3695, 16
        %v4038 = vrot.slane %v4036, 7
        %v4039 = vshll.u32 %v3695, 16
        %v4041 = vor.u32 %v4038, %v4039
        %v4042 = vsel %vm3699, %v4034, %v4041
        %v4043 = vrot.slane %v4038, 4
        %v4045 = vshrl.u32 %v3696, 16
        %v4047 = vrot.slane %v4045, 7
        %v4048 = vshll.u32 %v3696, 16
        %v4050 = vor.u32 %v4047, %v4048
        %v4051 = vsel %vm3699, %v4043, %v4050
        %v4052 = vld [vmem:[#allocation2 + $0xc] sm:$0x1]
        %v4053 = vld [vmem:[#allocation2 + $0x1c] sm:$0x1]
        %v4054 = vld [vmem:[#allocation2 + $0x2c] sm:$0x1]
        %v4055 = vld [vmem:[#allocation2 + $0x3c] sm:$0x1]
        %v4056 = vld [vmem:[#allocation2 + $0x4c] sm:$0x1]
        %v4057 = vld [vmem:[#allocation2 + $0x5c] sm:$0x1]
        %v4058 = vld [vmem:[#allocation2 + $0x6c] sm:$0x1]
        %v4059 = vld [vmem:[#allocation2 + $0x7c] sm:$0x1]
        %v4060 = vld [vmem:[#allocation2 + $0x8c] sm:$0x1]
        %v4061 = vld [vmem:[#allocation2 + $0x9c] sm:$0x1]
        %v4062 = vld [vmem:[#allocation2 + $0xac] sm:$0x1]
        %v4063 = vld [vmem:[#allocation2 + $0xbc] sm:$0x1]
        %v4064 = vld [vmem:[#allocation2 + $0xcc] sm:$0x1]
        %v4065 = vld [vmem:[#allocation2 + $0xdc] sm:$0x1]
        %v4066 = vld [vmem:[#allocation2 + $0xec] sm:$0x1]
        %v4067 = vld [vmem:[#allocation2 + $0xfc] sm:$0x1]
        %v4068 = vrot.slane %v3706, 4
        %v4069 = vrot.slane %v3709, 5
        %v4070 = vor.u32 %v4068, %v4069
        %v4071 = vrot.slane %v4070, 4
        %v4072 = vrot.slane %v3718, 5
        %v4073 = vsel %vm328, %v4071, %v4072
        %v4074 = vrot.slane %v3715, 4
        %v4075 = vor.u32 %v4074, %v4072
        %v4076 = vrot.slane %v4075, 4
        %v4078 = vshll.u32 %v4052, 16
        %v4080 = vrot.slane %v4078, 5
        %v4081 = vsel %vm328, %v4076, %v4080
        %v4082 = vrot.slane %v3728, 4
        %v4083 = vrot.slane %v3731, 5
        %v4084 = vor.u32 %v4082, %v4083
        %v4085 = vrot.slane %v4084, 4
        %v4086 = vrot.slane %v3740, 5
        %v4087 = vsel %vm328, %v4085, %v4086
        %v4088 = vrot.slane %v3737, 4
        %v4089 = vor.u32 %v4088, %v4086
        %v4090 = vrot.slane %v4089, 4
        %v4092 = vshll.u32 %v4053, 16
        %v4094 = vrot.slane %v4092, 5
        %v4095 = vsel %vm328, %v4090, %v4094
        %v4096 = vrot.slane %v3750, 4
        %v4097 = vrot.slane %v3753, 5
        %v4098 = vor.u32 %v4096, %v4097
        %v4099 = vrot.slane %v4098, 4
        %v4100 = vrot.slane %v3762, 5
        %v4101 = vsel %vm328, %v4099, %v4100
        %v4102 = vrot.slane %v3759, 4
        %v4103 = vor.u32 %v4102, %v4100
        %v4104 = vrot.slane %v4103, 4
        %v4106 = vshll.u32 %v4054, 16
        %v4108 = vrot.slane %v4106, 5
        %v4109 = vsel %vm328, %v4104, %v4108
        %v4110 = vrot.slane %v3772, 4
        %v4111 = vrot.slane %v3775, 5
        %v4112 = vor.u32 %v4110, %v4111
        %v4113 = vrot.slane %v4112, 4
        %v4114 = vrot.slane %v3784, 5
        %v4115 = vsel %vm328, %v4113, %v4114
        %v4116 = vrot.slane %v3781, 4
        %v4117 = vor.u32 %v4116, %v4114
        %v4118 = vrot.slane %v4117, 4
        %v4120 = vshll.u32 %v4055, 16
        %v4122 = vrot.slane %v4120, 5
        %v4123 = vsel %vm328, %v4118, %v4122
        %v4124 = vrot.slane %v3794, 4
        %v4125 = vrot.slane %v3797, 5
        %v4126 = vor.u32 %v4124, %v4125
        %v4127 = vrot.slane %v4126, 4
        %v4128 = vrot.slane %v3806, 5
        %v4129 = vsel %vm328, %v4127, %v4128
        %v4130 = vrot.slane %v3803, 4
        %v4131 = vor.u32 %v4130, %v4128
        %v4132 = vrot.slane %v4131, 4
        %v4134 = vshll.u32 %v4056, 16
        %v4136 = vrot.slane %v4134, 5
        %v4137 = vsel %vm328, %v4132, %v4136
        %v4138 = vrot.slane %v3816, 4
        %v4139 = vrot.slane %v3819, 5
        %v4140 = vor.u32 %v4138, %v4139
        %v4141 = vrot.slane %v4140, 4
        %v4142 = vrot.slane %v3828, 5
        %v4143 = vsel %vm328, %v4141, %v4142
        %v4144 = vrot.slane %v3825, 4
        %v4145 = vor.u32 %v4144, %v4142
        %v4146 = vrot.slane %v4145, 4
        %v4148 = vshll.u32 %v4057, 16
        %v4150 = vrot.slane %v4148, 5
        %v4151 = vsel %vm328, %v4146, %v4150
        %v4152 = vrot.slane %v3838, 4
        %v4153 = vrot.slane %v3841, 5
        %v4154 = vor.u32 %v4152, %v4153
        %v4155 = vrot.slane %v4154, 4
        %v4156 = vrot.slane %v3850, 5
        %v4157 = vsel %vm328, %v4155, %v4156
        %v4158 = vrot.slane %v3847, 4
        %v4159 = vor.u32 %v4158, %v4156
        %v4160 = vrot.slane %v4159, 4
        %v4162 = vshll.u32 %v4058, 16
        %v4164 = vrot.slane %v4162, 5
        %v4165 = vsel %vm328, %v4160, %v4164
        %v4166 = vrot.slane %v3860, 4
        %v4167 = vrot.slane %v3863, 5
        %v4168 = vor.u32 %v4166, %v4167
        %v4169 = vrot.slane %v4168, 4
        %v4170 = vrot.slane %v3872, 5
        %v4171 = vsel %vm328, %v4169, %v4170
        %v4172 = vrot.slane %v3869, 4
        %v4173 = vor.u32 %v4172, %v4170
        %v4174 = vrot.slane %v4173, 4
        %v4176 = vshll.u32 %v4059, 16
        %v4178 = vrot.slane %v4176, 5
        %v4179 = vsel %vm328, %v4174, %v4178
        %v4180 = vrot.slane %v3882, 4
        %v4181 = vrot.slane %v3885, 5
        %v4182 = vor.u32 %v4180, %v4181
        %v4183 = vrot.slane %v4182, 4
        %v4184 = vrot.slane %v3894, 5
        %v4185 = vsel %vm328, %v4183, %v4184
        %v4186 = vrot.slane %v3891, 4
        %v4187 = vor.u32 %v4186, %v4184
        %v4188 = vrot.slane %v4187, 4
        %v4190 = vshll.u32 %v4060, 16
        %v4192 = vrot.slane %v4190, 5
        %v4193 = vsel %vm328, %v4188, %v4192
        %v4194 = vrot.slane %v3904, 4
        %v4195 = vrot.slane %v3907, 5
        %v4196 = vor.u32 %v4194, %v4195
        %v4197 = vrot.slane %v4196, 4
        %v4198 = vrot.slane %v3916, 5
        %v4199 = vsel %vm328, %v4197, %v4198
        %v4200 = vrot.slane %v3913, 4
        %v4201 = vor.u32 %v4200, %v4198
        %v4202 = vrot.slane %v4201, 4
        %v4204 = vshll.u32 %v4061, 16
        %v4206 = vrot.slane %v4204, 5
        %v4207 = vsel %vm328, %v4202, %v4206
        %v4208 = vrot.slane %v3926, 4
        %v4209 = vrot.slane %v3929, 5
        %v4210 = vor.u32 %v4208, %v4209
        %v4211 = vrot.slane %v4210, 4
        %v4212 = vrot.slane %v3938, 5
        %v4213 = vsel %vm328, %v4211, %v4212
        %v4214 = vrot.slane %v3935, 4
        %v4215 = vor.u32 %v4214, %v4212
        %v4216 = vrot.slane %v4215, 4
        %v4218 = vshll.u32 %v4062, 16
        %v4220 = vrot.slane %v4218, 5
        %v4221 = vsel %vm328, %v4216, %v4220
        %v4222 = vrot.slane %v3948, 4
        %v4223 = vrot.slane %v3951, 5
        %v4224 = vor.u32 %v4222, %v4223
        %v4225 = vrot.slane %v4224, 4
        %v4226 = vrot.slane %v3960, 5
        %v4227 = vsel %vm328, %v4225, %v4226
        %v4228 = vrot.slane %v3957, 4
        %v4229 = vor.u32 %v4228, %v4226
        %v4230 = vrot.slane %v4229, 4
        %v4232 = vshll.u32 %v4063, 16
        %v4234 = vrot.slane %v4232, 5
        %v4235 = vsel %vm328, %v4230, %v4234
        %v4236 = vrot.slane %v3970, 4
        %v4237 = vrot.slane %v3973, 5
        %v4238 = vor.u32 %v4236, %v4237
        %v4239 = vrot.slane %v4238, 4
        %v4240 = vrot.slane %v3982, 5
        %v4241 = vsel %vm328, %v4239, %v4240
        %v4242 = vrot.slane %v3979, 4
        %v4243 = vor.u32 %v4242, %v4240
        %v4244 = vrot.slane %v4243, 4
        %v4246 = vshll.u32 %v4064, 16
        %v4248 = vrot.slane %v4246, 5
        %v4249 = vsel %vm328, %v4244, %v4248
        %v4250 = vrot.slane %v3992, 4
        %v4251 = vrot.slane %v3995, 5
        %v4252 = vor.u32 %v4250, %v4251
        %v4253 = vrot.slane %v4252, 4
        %v4254 = vrot.slane %v4004, 5
        %v4255 = vsel %vm328, %v4253, %v4254
        %v4256 = vrot.slane %v4001, 4
        %v4257 = vor.u32 %v4256, %v4254
        %v4258 = vrot.slane %v4257, 4
        %v4260 = vshll.u32 %v4065, 16
        %v4262 = vrot.slane %v4260, 5
        %v4263 = vsel %vm328, %v4258, %v4262
        %v4264 = vrot.slane %v4014, 4
        %v4265 = vrot.slane %v4017, 5
        %v4266 = vor.u32 %v4264, %v4265
        %v4267 = vrot.slane %v4266, 4
        %v4268 = vrot.slane %v4026, 5
        %v4269 = vsel %vm328, %v4267, %v4268
        %v4270 = vrot.slane %v4023, 4
        %v4271 = vor.u32 %v4270, %v4268
        %v4272 = vrot.slane %v4271, 4
        %v4274 = vshll.u32 %v4066, 16
        %v4276 = vrot.slane %v4274, 5
        %v4277 = vsel %vm328, %v4272, %v4276
        %v4278 = vrot.slane %v4036, 4
        %v4279 = vrot.slane %v4039, 5
        %v4280 = vor.u32 %v4278, %v4279
        %v4281 = vrot.slane %v4280, 4
        %v4282 = vrot.slane %v4048, 5
        %v4283 = vsel %vm328, %v4281, %v4282
        %v4284 = vrot.slane %v4045, 4
        %v4285 = vor.u32 %v4284, %v4282
        %v4286 = vrot.slane %v4285, 4
        %v4288 = vshll.u32 %v4067, 16
        %v4290 = vrot.slane %v4288, 5
        %v4291 = vsel %vm328, %v4286, %v4290
        %v4292 = vunpack.c.l.b16 %v3712
        %v4293 = vunpack.c.l.b16 %v3721
        %v4294 = vunpack.c.l.b16 %v3734
        %v4295 = vunpack.c.l.b16 %v3743
        %v4296 = vunpack.c.l.b16 %v3756
        %v4297 = vunpack.c.l.b16 %v3765
        %v4298 = vunpack.c.l.b16 %v3778
        %v4299 = vunpack.c.l.b16 %v3787
        %v4300 = vunpack.c.l.b16 %v3800
        %v4301 = vunpack.c.l.b16 %v3809
        %v4302 = vunpack.c.l.b16 %v3822
        %v4303 = vunpack.c.l.b16 %v3831
        %v4304 = vunpack.c.l.b16 %v3844
        %v4305 = vunpack.c.l.b16 %v3853
        %v4306 = vunpack.c.l.b16 %v3866
        %v4307 = vunpack.c.l.b16 %v3875
        %v4308 = vunpack.c.l.b16 %v3888
        %v4309 = vunpack.c.l.b16 %v3897
        %v4310 = vunpack.c.l.b16 %v3910
        %v4311 = vunpack.c.l.b16 %v3919
        %v4312 = vunpack.c.l.b16 %v3932
        %v4313 = vunpack.c.l.b16 %v3941
        %v4314 = vunpack.c.l.b16 %v3954
        %v4315 = vunpack.c.l.b16 %v3963
        %v4316 = vunpack.c.l.b16 %v3976
        %v4317 = vunpack.c.l.b16 %v3985
        %v4318 = vunpack.c.l.b16 %v3998
        %v4319 = vunpack.c.l.b16 %v4007
        %v4320 = vunpack.c.l.b16 %v4020
        %v4321 = vunpack.c.l.b16 %v4029
        %v4322 = vunpack.c.l.b16 %v4042
        %v4323 = vunpack.c.l.b16 %v4051
        %v4324 = vpack.c.b16 %v4293, %v4292
        %v4325 = vpack.c.b16 %v4295, %v4294
        %v4326 = vpack.c.b16 %v4297, %v4296
        %v4327 = vpack.c.b16 %v4299, %v4298
        %v4328 = vpack.c.b16 %v4301, %v4300
        %v4329 = vpack.c.b16 %v4303, %v4302
        %v4330 = vpack.c.b16 %v4305, %v4304
        %v4331 = vpack.c.b16 %v4307, %v4306
        %v4332 = vpack.c.b16 %v4309, %v4308
        %v4333 = vpack.c.b16 %v4311, %v4310
        %v4334 = vpack.c.b16 %v4313, %v4312
        %v4335 = vpack.c.b16 %v4315, %v4314
        %v4336 = vpack.c.b16 %v4317, %v4316
        %v4337 = vpack.c.b16 %v4319, %v4318
        %v4338 = vpack.c.b16 %v4321, %v4320
        %v4339 = vpack.c.b16 %v4323, %v4322
        %v4372 = vunpack.c.l.b16 %v3650
        %v4373 = vunpack.c.l.b16 %v3651
        %v4374 = vunpack.c.l.b16 %v3653
        %v4375 = vunpack.c.l.b16 %v3654
        %v4376 = vunpack.c.l.b16 %v3656
        %v4377 = vunpack.c.l.b16 %v3657
        %v4378 = vunpack.c.l.b16 %v3659
        %v4379 = vunpack.c.l.b16 %v3660
        %v4380 = vunpack.c.l.b16 %v3662
        %v4381 = vunpack.c.l.b16 %v3663
        %v4382 = vunpack.c.l.b16 %v3665
        %v4383 = vunpack.c.l.b16 %v3666
        %v4384 = vunpack.c.l.b16 %v3668
        %v4385 = vunpack.c.l.b16 %v3669
        %v4386 = vunpack.c.l.b16 %v3671
        %v4387 = vunpack.c.l.b16 %v3672
        %v4388 = vunpack.c.l.b16 %v3674
        %v4389 = vunpack.c.l.b16 %v3675
        %v4390 = vunpack.c.l.b16 %v3677
        %v4391 = vunpack.c.l.b16 %v3678
        %v4392 = vunpack.c.l.b16 %v3680
        %v4393 = vunpack.c.l.b16 %v3681
        %v4394 = vunpack.c.l.b16 %v3683
        %v4395 = vunpack.c.l.b16 %v3684
        %v4396 = vunpack.c.l.b16 %v3686
        %v4397 = vunpack.c.l.b16 %v3687
        %v4398 = vunpack.c.l.b16 %v3689
        %v4399 = vunpack.c.l.b16 %v3690
        %v4400 = vunpack.c.l.b16 %v3692
        %v4401 = vunpack.c.l.b16 %v3693
        %v4402 = vunpack.c.l.b16 %v3695
        %v4403 = vunpack.c.l.b16 %v3696
        %v4404 = vpack.c.b16 %v4373, %v4372
        %v4405 = vpack.c.b16 %v4375, %v4374
        %v4406 = vpack.c.b16 %v4377, %v4376
        %v4407 = vpack.c.b16 %v4379, %v4378
        %v4408 = vpack.c.b16 %v4381, %v4380
        %v4409 = vpack.c.b16 %v4383, %v4382
        %v4410 = vpack.c.b16 %v4385, %v4384
        %v4411 = vpack.c.b16 %v4387, %v4386
        %v4412 = vpack.c.b16 %v4389, %v4388
        %v4413 = vpack.c.b16 %v4391, %v4390
        %v4414 = vpack.c.b16 %v4393, %v4392
        %v4415 = vpack.c.b16 %v4395, %v4394
        %v4416 = vpack.c.b16 %v4397, %v4396
        %v4417 = vpack.c.b16 %v4399, %v4398
        %v4418 = vpack.c.b16 %v4401, %v4400
        %v4419 = vpack.c.b16 %v4403, %v4402
        %4420 = vrot.lane.b32.xlu0 %v4404, 8
        %v4421 = vpop.permute.xlu0 %4420
        %4422 = vrot.lane.b32.xlu0 %v4405, 8
        %v4423 = vpop.permute.xlu0 %4422
        %4424 = vrot.lane.b32.xlu0 %v4406, 8
        %v4425 = vpop.permute.xlu0 %4424
        %4426 = vrot.lane.b32.xlu0 %v4407, 8
        %v4427 = vpop.permute.xlu0 %4426
        %4428 = vrot.lane.b32.xlu0 %v4408, 8
        %v4429 = vpop.permute.xlu0 %4428
        %4430 = vrot.lane.b32.xlu0 %v4409, 8
        %v4431 = vpop.permute.xlu0 %4430
        %4432 = vrot.lane.b32.xlu0 %v4410, 8
        %v4433 = vpop.permute.xlu0 %4432
        %4434 = vrot.lane.b32.xlu0 %v4411, 8
        %v4435 = vpop.permute.xlu0 %4434
        %4436 = vrot.lane.b32.xlu0 %v4412, 8
        %v4437 = vpop.permute.xlu0 %4436
        %4438 = vrot.lane.b32.xlu0 %v4413, 8
        %v4439 = vpop.permute.xlu0 %4438
        %4440 = vrot.lane.b32.xlu0 %v4414, 8
        %v4441 = vpop.permute.xlu0 %4440
        %4442 = vrot.lane.b32.xlu0 %v4415, 8
        %v4443 = vpop.permute.xlu0 %4442
        %4444 = vrot.lane.b32.xlu0 %v4416, 8
        %v4445 = vpop.permute.xlu0 %4444
        %4446 = vrot.lane.b32.xlu0 %v4417, 8
        %v4447 = vpop.permute.xlu0 %4446
        %4448 = vrot.lane.b32.xlu0 %v4418, 8
        %v4449 = vpop.permute.xlu0 %4448
        %4450 = vrot.lane.b32.xlu0 %v4419, 8
        %v4451 = vpop.permute.xlu0 %4450
        %v4452 = vunpack.c.l.b16 %v4073
        %v4453 = vunpack.c.l.b16 %v4081
        %v4454 = vunpack.c.l.b16 %v4087
        %v4455 = vunpack.c.l.b16 %v4095
        %v4456 = vunpack.c.l.b16 %v4101
        %v4457 = vunpack.c.l.b16 %v4109
        %v4458 = vunpack.c.l.b16 %v4115
        %v4459 = vunpack.c.l.b16 %v4123
        %v4460 = vunpack.c.l.b16 %v4129
        %v4461 = vunpack.c.l.b16 %v4137
        %v4462 = vunpack.c.l.b16 %v4143
        %v4463 = vunpack.c.l.b16 %v4151
        %v4464 = vunpack.c.l.b16 %v4157
        %v4465 = vunpack.c.l.b16 %v4165
        %v4466 = vunpack.c.l.b16 %v4171
        %v4467 = vunpack.c.l.b16 %v4179
        %v4468 = vunpack.c.l.b16 %v4185
        %v4469 = vunpack.c.l.b16 %v4193
        %v4470 = vunpack.c.l.b16 %v4199
        %v4471 = vunpack.c.l.b16 %v4207
        %v4472 = vunpack.c.l.b16 %v4213
        %v4473 = vunpack.c.l.b16 %v4221
        %v4474 = vunpack.c.l.b16 %v4227
        %v4475 = vunpack.c.l.b16 %v4235
        %v4476 = vunpack.c.l.b16 %v4241
        %v4477 = vunpack.c.l.b16 %v4249
        %v4478 = vunpack.c.l.b16 %v4255
        %v4479 = vunpack.c.l.b16 %v4263
        %v4480 = vunpack.c.l.b16 %v4269
        %v4481 = vunpack.c.l.b16 %v4277
        %v4482 = vunpack.c.l.b16 %v4283
        %v4483 = vunpack.c.l.b16 %v4291
        %v4484 = vpack.c.b16 %v4453, %v4452
        %v4485 = vpack.c.b16 %v4455, %v4454
        %v4486 = vpack.c.b16 %v4457, %v4456
        %v4487 = vpack.c.b16 %v4459, %v4458
        %v4488 = vpack.c.b16 %v4461, %v4460
        %v4489 = vpack.c.b16 %v4463, %v4462
        %v4490 = vpack.c.b16 %v4465, %v4464
        %v4491 = vpack.c.b16 %v4467, %v4466
        %v4492 = vpack.c.b16 %v4469, %v4468
        %v4493 = vpack.c.b16 %v4471, %v4470
        %v4494 = vpack.c.b16 %v4473, %v4472
        %v4495 = vpack.c.b16 %v4475, %v4474
        %v4496 = vpack.c.b16 %v4477, %v4476
        %v4497 = vpack.c.b16 %v4479, %v4478
        %v4498 = vpack.c.b16 %v4481, %v4480
        %v4499 = vpack.c.b16 %v4483, %v4482
        %4500 = vrot.lane.b32.xlu0 %v4484, 16
        %v4501 = vpop.permute.xlu0 %4500
        %4502 = vrot.lane.b32.xlu0 %v4485, 16
        %v4503 = vpop.permute.xlu0 %4502
        %4504 = vrot.lane.b32.xlu0 %v4486, 16
        %v4505 = vpop.permute.xlu0 %4504
        %4506 = vrot.lane.b32.xlu0 %v4487, 16
        %v4507 = vpop.permute.xlu0 %4506
        %4508 = vrot.lane.b32.xlu0 %v4488, 16
        %v4509 = vpop.permute.xlu0 %4508
        %4510 = vrot.lane.b32.xlu0 %v4489, 16
        %v4511 = vpop.permute.xlu0 %4510
        %4512 = vrot.lane.b32.xlu0 %v4490, 16
        %v4513 = vpop.permute.xlu0 %4512
        %4514 = vrot.lane.b32.xlu0 %v4491, 16
        %v4515 = vpop.permute.xlu0 %4514
        %4516 = vrot.lane.b32.xlu0 %v4492, 16
        %v4517 = vpop.permute.xlu0 %4516
        %4518 = vrot.lane.b32.xlu0 %v4493, 16
        %v4519 = vpop.permute.xlu0 %4518
        %4520 = vrot.lane.b32.xlu0 %v4494, 16
        %v4521 = vpop.permute.xlu0 %4520
        %4522 = vrot.lane.b32.xlu0 %v4495, 16
        %v4523 = vpop.permute.xlu0 %4522
        %4524 = vrot.lane.b32.xlu0 %v4496, 16
        %v4525 = vpop.permute.xlu0 %4524
        %4526 = vrot.lane.b32.xlu0 %v4497, 16
        %v4527 = vpop.permute.xlu0 %4526
        %4528 = vrot.lane.b32.xlu0 %v4498, 16
        %v4529 = vpop.permute.xlu0 %4528
        %4530 = vrot.lane.b32.xlu0 %v4499, 16
        %v4531 = vpop.permute.xlu0 %4530
        %v4534 = vsel %vm2895, %v4324, %v4421
        %v4537 = vsel %vm2895, %v4325, %v4423
        %v4540 = vsel %vm2895, %v4326, %v4425
        %v4543 = vsel %vm2895, %v4327, %v4427
        %v4546 = vsel %vm2895, %v4328, %v4429
        %v4549 = vsel %vm2895, %v4329, %v4431
        %v4552 = vsel %vm2895, %v4330, %v4433
        %v4555 = vsel %vm2895, %v4331, %v4435
        %v4558 = vsel %vm2895, %v4332, %v4437
        %v4561 = vsel %vm2895, %v4333, %v4439
        %v4564 = vsel %vm2895, %v4334, %v4441
        %v4567 = vsel %vm2895, %v4335, %v4443
        %v4570 = vsel %vm2895, %v4336, %v4445
        %v4573 = vsel %vm2895, %v4337, %v4447
        %v4576 = vsel %vm2895, %v4338, %v4449
        %v4579 = vsel %vm2895, %v4339, %v4451
        %v4581 = vsel %vm2961, %v4534, %v4501
        %v4583 = vsel %vm2961, %v4537, %v4503
        %v4585 = vsel %vm2961, %v4540, %v4505
        %v4587 = vsel %vm2961, %v4543, %v4507
        %v4589 = vsel %vm2961, %v4546, %v4509
        %v4591 = vsel %vm2961, %v4549, %v4511
        %v4593 = vsel %vm2961, %v4552, %v4513
        %v4595 = vsel %vm2961, %v4555, %v4515
        %v4597 = vsel %vm2961, %v4558, %v4517
        %v4599 = vsel %vm2961, %v4561, %v4519
        %v4601 = vsel %vm2961, %v4564, %v4521
        %v4603 = vsel %vm2961, %v4567, %v4523
        %v4605 = vsel %vm2961, %v4570, %v4525
        %v4607 = vsel %vm2961, %v4573, %v4527
        %v4609 = vsel %vm2961, %v4576, %v4529
        %v4611 = vsel %vm2961, %v4579, %v4531
        %v4612 = vld [vmem:[%s4] sm:$0xf]
        %v4613 = vld [vmem:[%s4 + $0x4] sm:$0xf]
        %v4614 = vld [vmem:[%s4 + $0x8] sm:$0xf]
        %v4615 = vld [vmem:[%s3552] sm:$0x8]
        %v4616 = vld [vmem:[%s3552 + $0x4] sm:$0xf]
        %v4617 = vld [vmem:[%s3552 + $0x8] sm:$0xf]
        %v4618 = vld [vmem:[%s3552 + $0x10] sm:$0x8]
        %v4619 = vld [vmem:[%s3552 + $0x14] sm:$0xf]
        %v4620 = vld [vmem:[%s3552 + $0x18] sm:$0xf]
        %v4621 = vld [vmem:[%s3552 + $0x20] sm:$0x8]
        %v4622 = vld [vmem:[%s3552 + $0x24] sm:$0xf]
        %v4623 = vld [vmem:[%s3552 + $0x28] sm:$0xf]
        %v4624 = vld [vmem:[%s3552 + $0x30] sm:$0x8]
        %v4625 = vld [vmem:[%s3552 + $0x34] sm:$0xf]
        %v4626 = vld [vmem:[%s3552 + $0x38] sm:$0xf]
        %v4627 = vld [vmem:[%s3552 + $0x40] sm:$0x8]
        %v4628 = vld [vmem:[%s3552 + $0x44] sm:$0xf]
        %v4629 = vld [vmem:[%s3552 + $0x48] sm:$0xf]
        %v4630 = vld [vmem:[%s3552 + $0x50] sm:$0x8]
        %v4631 = vld [vmem:[%s3552 + $0x54] sm:$0xf]
        %v4632 = vld [vmem:[%s3552 + $0x58] sm:$0xf]
        %v4633 = vld [vmem:[%s3552 + $0x60] sm:$0x8]
        %v4634 = vld [vmem:[%s3552 + $0x64] sm:$0xf]
        %v4635 = vld [vmem:[%s3552 + $0x68] sm:$0xf]
        %v4636 = vld [vmem:[%s3552 + $0x70] sm:$0x8]
        %v4637 = vld [vmem:[%s3552 + $0x74] sm:$0xf]
        %v4638 = vld [vmem:[%s3552 + $0x78] sm:$0xf]
        %v4639 = vld [vmem:[%s3552 + $0x80] sm:$0x8]
        %v4640 = vld [vmem:[%s3552 + $0x84] sm:$0xf]
        %v4641 = vld [vmem:[%s3552 + $0x88] sm:$0xf]
        %v4642 = vld [vmem:[%s3552 + $0x90] sm:$0x8]
        %v4643 = vld [vmem:[%s3552 + $0x94] sm:$0xf]
        %v4644 = vld [vmem:[%s3552 + $0x98] sm:$0xf]
        %v4645 = vld [vmem:[%s3552 + $0xa0] sm:$0x8]
        %v4646 = vld [vmem:[%s3552 + $0xa4] sm:$0xf]
        %v4647 = vld [vmem:[%s3552 + $0xa8] sm:$0xf]
        %v4648 = vld [vmem:[%s3552 + $0xb0] sm:$0x8]
        %v4649 = vld [vmem:[%s3552 + $0xb4] sm:$0xf]
        %v4650 = vld [vmem:[%s3552 + $0xb8] sm:$0xf]
        %v4651 = vld [vmem:[%s3552 + $0xc0] sm:$0x8]
        %v4652 = vld [vmem:[%s3552 + $0xc4] sm:$0xf]
        %v4653 = vld [vmem:[%s3552 + $0xc8] sm:$0xf]
        %v4654 = vld [vmem:[%s3552 + $0xd0] sm:$0x8]
        %v4655 = vld [vmem:[%s3552 + $0xd4] sm:$0xf]
        %v4656 = vld [vmem:[%s3552 + $0xd8] sm:$0xf]
        %v4657 = vld [vmem:[%s3552 + $0xe0] sm:$0x8]
        %v4658 = vld [vmem:[%s3552 + $0xe4] sm:$0xf]
        %v4659 = vld [vmem:[%s3552 + $0xe8] sm:$0xf]
        %v4660 = vld [vmem:[%s3552 + $0xf0] sm:$0x8]
        %v4661 = vld [vmem:[%s3552 + $0xf4] sm:$0xf]
        %v4662 = vld [vmem:[%s3552 + $0xf8] sm:$0xf]
        %v4664 = vshrl.u32 %v4615, 16
        %v4666 = vrot.slane %v4664, 7
        %v4667 = vrot.slane %v4666, 4
        %v4669 = vshrl.u32 %v4616, 16
        %v4671 = vrot.slane %v4669, 7
        %v4672 = vshll.u32 %v4616, 16
        %v4674 = vor.u32 %v4671, %v4672
        %v4675 = vsel %vm3699, %v4667, %v4674
        %v4676 = vrot.slane %v4671, 4
        %v4678 = vshrl.u32 %v4617, 16
        %v4680 = vrot.slane %v4678, 7
        %v4681 = vshll.u32 %v4617, 16
        %v4683 = vor.u32 %v4680, %v4681
        %v4684 = vsel %vm3699, %v4676, %v4683
        %v4686 = vshrl.u32 %v4618, 16
        %v4688 = vrot.slane %v4686, 7
        %v4689 = vrot.slane %v4688, 4
        %v4691 = vshrl.u32 %v4619, 16
        %v4693 = vrot.slane %v4691, 7
        %v4694 = vshll.u32 %v4619, 16
        %v4696 = vor.u32 %v4693, %v4694
        %v4697 = vsel %vm3699, %v4689, %v4696
        %v4698 = vrot.slane %v4693, 4
        %v4700 = vshrl.u32 %v4620, 16
        %v4702 = vrot.slane %v4700, 7
        %v4703 = vshll.u32 %v4620, 16
        %v4705 = vor.u32 %v4702, %v4703
        %v4706 = vsel %vm3699, %v4698, %v4705
        %v4708 = vshrl.u32 %v4621, 16
        %v4710 = vrot.slane %v4708, 7
        %v4711 = vrot.slane %v4710, 4
        %v4713 = vshrl.u32 %v4622, 16
        %v4715 = vrot.slane %v4713, 7
        %v4716 = vshll.u32 %v4622, 16
        %v4718 = vor.u32 %v4715, %v4716
        %v4719 = vsel %vm3699, %v4711, %v4718
        %v4720 = vrot.slane %v4715, 4
        %v4722 = vshrl.u32 %v4623, 16
        %v4724 = vrot.slane %v4722, 7
        %v4725 = vshll.u32 %v4623, 16
        %v4727 = vor.u32 %v4724, %v4725
        %v4728 = vsel %vm3699, %v4720, %v4727
        %v4730 = vshrl.u32 %v4624, 16
        %v4732 = vrot.slane %v4730, 7
        %v4733 = vrot.slane %v4732, 4
        %v4735 = vshrl.u32 %v4625, 16
        %v4737 = vrot.slane %v4735, 7
        %v4738 = vshll.u32 %v4625, 16
        %v4740 = vor.u32 %v4737, %v4738
        %v4741 = vsel %vm3699, %v4733, %v4740
        %v4742 = vrot.slane %v4737, 4
        %v4744 = vshrl.u32 %v4626, 16
        %v4746 = vrot.slane %v4744, 7
        %v4747 = vshll.u32 %v4626, 16
        %v4749 = vor.u32 %v4746, %v4747
        %v4750 = vsel %vm3699, %v4742, %v4749
        %v4752 = vshrl.u32 %v4627, 16
        %v4754 = vrot.slane %v4752, 7
        %v4755 = vrot.slane %v4754, 4
        %v4757 = vshrl.u32 %v4628, 16
        %v4759 = vrot.slane %v4757, 7
        %v4760 = vshll.u32 %v4628, 16
        %v4762 = vor.u32 %v4759, %v4760
        %v4763 = vsel %vm3699, %v4755, %v4762
        %v4764 = vrot.slane %v4759, 4
        %v4766 = vshrl.u32 %v4629, 16
        %v4768 = vrot.slane %v4766, 7
        %v4769 = vshll.u32 %v4629, 16
        %v4771 = vor.u32 %v4768, %v4769
        %v4772 = vsel %vm3699, %v4764, %v4771
        %v4774 = vshrl.u32 %v4630, 16
        %v4776 = vrot.slane %v4774, 7
        %v4777 = vrot.slane %v4776, 4
        %v4779 = vshrl.u32 %v4631, 16
        %v4781 = vrot.slane %v4779, 7
        %v4782 = vshll.u32 %v4631, 16
        %v4784 = vor.u32 %v4781, %v4782
        %v4785 = vsel %vm3699, %v4777, %v4784
        %v4786 = vrot.slane %v4781, 4
        %v4788 = vshrl.u32 %v4632, 16
        %v4790 = vrot.slane %v4788, 7
        %v4791 = vshll.u32 %v4632, 16
        %v4793 = vor.u32 %v4790, %v4791
        %v4794 = vsel %vm3699, %v4786, %v4793
        %v4796 = vshrl.u32 %v4633, 16
        %v4798 = vrot.slane %v4796, 7
        %v4799 = vrot.slane %v4798, 4
        %v4801 = vshrl.u32 %v4634, 16
        %v4803 = vrot.slane %v4801, 7
        %v4804 = vshll.u32 %v4634, 16
        %v4806 = vor.u32 %v4803, %v4804
        %v4807 = vsel %vm3699, %v4799, %v4806
        %v4808 = vrot.slane %v4803, 4
        %v4810 = vshrl.u32 %v4635, 16
        %v4812 = vrot.slane %v4810, 7
        %v4813 = vshll.u32 %v4635, 16
        %v4815 = vor.u32 %v4812, %v4813
        %v4816 = vsel %vm3699, %v4808, %v4815
        %v4818 = vshrl.u32 %v4636, 16
        %v4820 = vrot.slane %v4818, 7
        %v4821 = vrot.slane %v4820, 4
        %v4823 = vshrl.u32 %v4637, 16
        %v4825 = vrot.slane %v4823, 7
        %v4826 = vshll.u32 %v4637, 16
        %v4828 = vor.u32 %v4825, %v4826
        %v4829 = vsel %vm3699, %v4821, %v4828
        %v4830 = vrot.slane %v4825, 4
        %v4832 = vshrl.u32 %v4638, 16
        %v4834 = vrot.slane %v4832, 7
        %v4835 = vshll.u32 %v4638, 16
        %v4837 = vor.u32 %v4834, %v4835
        %v4838 = vsel %vm3699, %v4830, %v4837
        %v4840 = vshrl.u32 %v4639, 16
        %v4842 = vrot.slane %v4840, 7
        %v4843 = vrot.slane %v4842, 4
        %v4845 = vshrl.u32 %v4640, 16
        %v4847 = vrot.slane %v4845, 7
        %v4848 = vshll.u32 %v4640, 16
        %v4850 = vor.u32 %v4847, %v4848
        %v4851 = vsel %vm3699, %v4843, %v4850
        %v4852 = vrot.slane %v4847, 4
        %v4854 = vshrl.u32 %v4641, 16
        %v4856 = vrot.slane %v4854, 7
        %v4857 = vshll.u32 %v4641, 16
        %v4859 = vor.u32 %v4856, %v4857
        %v4860 = vsel %vm3699, %v4852, %v4859
        %v4862 = vshrl.u32 %v4642, 16
        %v4864 = vrot.slane %v4862, 7
        %v4865 = vrot.slane %v4864, 4
        %v4867 = vshrl.u32 %v4643, 16
        %v4869 = vrot.slane %v4867, 7
        %v4870 = vshll.u32 %v4643, 16
        %v4872 = vor.u32 %v4869, %v4870
        %v4873 = vsel %vm3699, %v4865, %v4872
        %v4874 = vrot.slane %v4869, 4
        %v4876 = vshrl.u32 %v4644, 16
        %v4878 = vrot.slane %v4876, 7
        %v4879 = vshll.u32 %v4644, 16
        %v4881 = vor.u32 %v4878, %v4879
        %v4882 = vsel %vm3699, %v4874, %v4881
        %v4884 = vshrl.u32 %v4645, 16
        %v4886 = vrot.slane %v4884, 7
        %v4887 = vrot.slane %v4886, 4
        %v4889 = vshrl.u32 %v4646, 16
        %v4891 = vrot.slane %v4889, 7
        %v4892 = vshll.u32 %v4646, 16
        %v4894 = vor.u32 %v4891, %v4892
        %v4895 = vsel %vm3699, %v4887, %v4894
        %v4896 = vrot.slane %v4891, 4
        %v4898 = vshrl.u32 %v4647, 16
        %v4900 = vrot.slane %v4898, 7
        %v4901 = vshll.u32 %v4647, 16
        %v4903 = vor.u32 %v4900, %v4901
        %v4904 = vsel %vm3699, %v4896, %v4903
        %v4906 = vshrl.u32 %v4648, 16
        %v4908 = vrot.slane %v4906, 7
        %v4909 = vrot.slane %v4908, 4
        %v4911 = vshrl.u32 %v4649, 16
        %v4913 = vrot.slane %v4911, 7
        %v4914 = vshll.u32 %v4649, 16
        %v4916 = vor.u32 %v4913, %v4914
        %v4917 = vsel %vm3699, %v4909, %v4916
        %v4918 = vrot.slane %v4913, 4
        %v4920 = vshrl.u32 %v4650, 16
        %v4922 = vrot.slane %v4920, 7
        %v4923 = vshll.u32 %v4650, 16
        %v4925 = vor.u32 %v4922, %v4923
        %v4926 = vsel %vm3699, %v4918, %v4925
        %v4928 = vshrl.u32 %v4651, 16
        %v4930 = vrot.slane %v4928, 7
        %v4931 = vrot.slane %v4930, 4
        %v4933 = vshrl.u32 %v4652, 16
        %v4935 = vrot.slane %v4933, 7
        %v4936 = vshll.u32 %v4652, 16
        %v4938 = vor.u32 %v4935, %v4936
        %v4939 = vsel %vm3699, %v4931, %v4938
        %v4940 = vrot.slane %v4935, 4
        %v4942 = vshrl.u32 %v4653, 16
        %v4944 = vrot.slane %v4942, 7
        %v4945 = vshll.u32 %v4653, 16
        %v4947 = vor.u32 %v4944, %v4945
        %v4948 = vsel %vm3699, %v4940, %v4947
        %v4950 = vshrl.u32 %v4654, 16
        %v4952 = vrot.slane %v4950, 7
        %v4953 = vrot.slane %v4952, 4
        %v4955 = vshrl.u32 %v4655, 16
        %v4957 = vrot.slane %v4955, 7
        %v4958 = vshll.u32 %v4655, 16
        %v4960 = vor.u32 %v4957, %v4958
        %v4961 = vsel %vm3699, %v4953, %v4960
        %v4962 = vrot.slane %v4957, 4
        %v4964 = vshrl.u32 %v4656, 16
        %v4966 = vrot.slane %v4964, 7
        %v4967 = vshll.u32 %v4656, 16
        %v4969 = vor.u32 %v4966, %v4967
        %v4970 = vsel %vm3699, %v4962, %v4969
        %v4972 = vshrl.u32 %v4657, 16
        %v4974 = vrot.slane %v4972, 7
        %v4975 = vrot.slane %v4974, 4
        %v4977 = vshrl.u32 %v4658, 16
        %v4979 = vrot.slane %v4977, 7
        %v4980 = vshll.u32 %v4658, 16
        %v4982 = vor.u32 %v4979, %v4980
        %v4983 = vsel %vm3699, %v4975, %v4982
        %v4984 = vrot.slane %v4979, 4
        %v4986 = vshrl.u32 %v4659, 16
        %v4988 = vrot.slane %v4986, 7
        %v4989 = vshll.u32 %v4659, 16
        %v4991 = vor.u32 %v4988, %v4989
        %v4992 = vsel %vm3699, %v4984, %v4991
        %v4994 = vshrl.u32 %v4660, 16
        %v4996 = vrot.slane %v4994, 7
        %v4997 = vrot.slane %v4996, 4
        %v4999 = vshrl.u32 %v4661, 16
        %v5001 = vrot.slane %v4999, 7
        %v5002 = vshll.u32 %v4661, 16
        %v5004 = vor.u32 %v5001, %v5002
        %v5005 = vsel %vm3699, %v4997, %v5004
        %v5006 = vrot.slane %v5001, 4
        %v5008 = vshrl.u32 %v4662, 16
        %v5010 = vrot.slane %v5008, 7
        %v5011 = vshll.u32 %v4662, 16
        %v5013 = vor.u32 %v5010, %v5011
        %v5014 = vsel %vm3699, %v5006, %v5013
        %v5015 = vld [vmem:[%s3552 + $0xc] sm:$0x1]
        %v5016 = vld [vmem:[%s3552 + $0x1c] sm:$0x1]
        %v5017 = vld [vmem:[%s3552 + $0x2c] sm:$0x1]
        %v5018 = vld [vmem:[%s3552 + $0x3c] sm:$0x1]
        %v5019 = vld [vmem:[%s3552 + $0x4c] sm:$0x1]
        %v5020 = vld [vmem:[%s3552 + $0x5c] sm:$0x1]
        %v5021 = vld [vmem:[%s3552 + $0x6c] sm:$0x1]
        %v5022 = vld [vmem:[%s3552 + $0x7c] sm:$0x1]
        %v5023 = vld [vmem:[%s3552 + $0x8c] sm:$0x1]
        %v5024 = vld [vmem:[%s3552 + $0x9c] sm:$0x1]
        %v5025 = vld [vmem:[%s3552 + $0xac] sm:$0x1]
        %v5026 = vld [vmem:[%s3552 + $0xbc] sm:$0x1]
        %v5027 = vld [vmem:[%s3552 + $0xcc] sm:$0x1]
        %v5028 = vld [vmem:[%s3552 + $0xdc] sm:$0x1]
        %v5029 = vld [vmem:[%s3552 + $0xec] sm:$0x1]
        %v5030 = vld [vmem:[%s3552 + $0xfc] sm:$0x1]
        %v5031 = vrot.slane %v4669, 4
        %v5032 = vrot.slane %v4672, 5
        %v5033 = vor.u32 %v5031, %v5032
        %v5034 = vrot.slane %v5033, 4
        %v5035 = vrot.slane %v4681, 5
        %v5036 = vsel %vm328, %v5034, %v5035
        %v5037 = vrot.slane %v4678, 4
        %v5038 = vor.u32 %v5037, %v5035
        %v5039 = vrot.slane %v5038, 4
        %v5041 = vshll.u32 %v5015, 16
        %v5043 = vrot.slane %v5041, 5
        %v5044 = vsel %vm328, %v5039, %v5043
        %v5045 = vrot.slane %v4691, 4
        %v5046 = vrot.slane %v4694, 5
        %v5047 = vor.u32 %v5045, %v5046
        %v5048 = vrot.slane %v5047, 4
        %v5049 = vrot.slane %v4703, 5
        %v5050 = vsel %vm328, %v5048, %v5049
        %v5051 = vrot.slane %v4700, 4
        %v5052 = vor.u32 %v5051, %v5049
        %v5053 = vrot.slane %v5052, 4
        %v5055 = vshll.u32 %v5016, 16
        %v5057 = vrot.slane %v5055, 5
        %v5058 = vsel %vm328, %v5053, %v5057
        %v5059 = vrot.slane %v4713, 4
        %v5060 = vrot.slane %v4716, 5
        %v5061 = vor.u32 %v5059, %v5060
        %v5062 = vrot.slane %v5061, 4
        %v5063 = vrot.slane %v4725, 5
        %v5064 = vsel %vm328, %v5062, %v5063
        %v5065 = vrot.slane %v4722, 4
        %v5066 = vor.u32 %v5065, %v5063
        %v5067 = vrot.slane %v5066, 4
        %v5069 = vshll.u32 %v5017, 16
        %v5071 = vrot.slane %v5069, 5
        %v5072 = vsel %vm328, %v5067, %v5071
        %v5073 = vrot.slane %v4735, 4
        %v5074 = vrot.slane %v4738, 5
        %v5075 = vor.u32 %v5073, %v5074
        %v5076 = vrot.slane %v5075, 4
        %v5077 = vrot.slane %v4747, 5
        %v5078 = vsel %vm328, %v5076, %v5077
        %v5079 = vrot.slane %v4744, 4
        %v5080 = vor.u32 %v5079, %v5077
        %v5081 = vrot.slane %v5080, 4
        %v5083 = vshll.u32 %v5018, 16
        %v5085 = vrot.slane %v5083, 5
        %v5086 = vsel %vm328, %v5081, %v5085
        %v5087 = vrot.slane %v4757, 4
        %v5088 = vrot.slane %v4760, 5
        %v5089 = vor.u32 %v5087, %v5088
        %v5090 = vrot.slane %v5089, 4
        %v5091 = vrot.slane %v4769, 5
        %v5092 = vsel %vm328, %v5090, %v5091
        %v5093 = vrot.slane %v4766, 4
        %v5094 = vor.u32 %v5093, %v5091
        %v5095 = vrot.slane %v5094, 4
        %v5097 = vshll.u32 %v5019, 16
        %v5099 = vrot.slane %v5097, 5
        %v5100 = vsel %vm328, %v5095, %v5099
        %v5101 = vrot.slane %v4779, 4
        %v5102 = vrot.slane %v4782, 5
        %v5103 = vor.u32 %v5101, %v5102
        %v5104 = vrot.slane %v5103, 4
        %v5105 = vrot.slane %v4791, 5
        %v5106 = vsel %vm328, %v5104, %v5105
        %v5107 = vrot.slane %v4788, 4
        %v5108 = vor.u32 %v5107, %v5105
        %v5109 = vrot.slane %v5108, 4
        %v5111 = vshll.u32 %v5020, 16
        %v5113 = vrot.slane %v5111, 5
        %v5114 = vsel %vm328, %v5109, %v5113
        %v5115 = vrot.slane %v4801, 4
        %v5116 = vrot.slane %v4804, 5
        %v5117 = vor.u32 %v5115, %v5116
        %v5118 = vrot.slane %v5117, 4
        %v5119 = vrot.slane %v4813, 5
        %v5120 = vsel %vm328, %v5118, %v5119
        %v5121 = vrot.slane %v4810, 4
        %v5122 = vor.u32 %v5121, %v5119
        %v5123 = vrot.slane %v5122, 4
        %v5125 = vshll.u32 %v5021, 16
        %v5127 = vrot.slane %v5125, 5
        %v5128 = vsel %vm328, %v5123, %v5127
        %v5129 = vrot.slane %v4823, 4
        %v5130 = vrot.slane %v4826, 5
        %v5131 = vor.u32 %v5129, %v5130
        %v5132 = vrot.slane %v5131, 4
        %v5133 = vrot.slane %v4835, 5
        %v5134 = vsel %vm328, %v5132, %v5133
        %v5135 = vrot.slane %v4832, 4
        %v5136 = vor.u32 %v5135, %v5133
        %v5137 = vrot.slane %v5136, 4
        %v5139 = vshll.u32 %v5022, 16
        %v5141 = vrot.slane %v5139, 5
        %v5142 = vsel %vm328, %v5137, %v5141
        %v5143 = vrot.slane %v4845, 4
        %v5144 = vrot.slane %v4848, 5
        %v5145 = vor.u32 %v5143, %v5144
        %v5146 = vrot.slane %v5145, 4
        %v5147 = vrot.slane %v4857, 5
        %v5148 = vsel %vm328, %v5146, %v5147
        %v5149 = vrot.slane %v4854, 4
        %v5150 = vor.u32 %v5149, %v5147
        %v5151 = vrot.slane %v5150, 4
        %v5153 = vshll.u32 %v5023, 16
        %v5155 = vrot.slane %v5153, 5
        %v5156 = vsel %vm328, %v5151, %v5155
        %v5157 = vrot.slane %v4867, 4
        %v5158 = vrot.slane %v4870, 5
        %v5159 = vor.u32 %v5157, %v5158
        %v5160 = vrot.slane %v5159, 4
        %v5161 = vrot.slane %v4879, 5
        %v5162 = vsel %vm328, %v5160, %v5161
        %v5163 = vrot.slane %v4876, 4
        %v5164 = vor.u32 %v5163, %v5161
        %v5165 = vrot.slane %v5164, 4
        %v5167 = vshll.u32 %v5024, 16
        %v5169 = vrot.slane %v5167, 5
        %v5170 = vsel %vm328, %v5165, %v5169
        %v5171 = vrot.slane %v4889, 4
        %v5172 = vrot.slane %v4892, 5
        %v5173 = vor.u32 %v5171, %v5172
        %v5174 = vrot.slane %v5173, 4
        %v5175 = vrot.slane %v4901, 5
        %v5176 = vsel %vm328, %v5174, %v5175
        %v5177 = vrot.slane %v4898, 4
        %v5178 = vor.u32 %v5177, %v5175
        %v5179 = vrot.slane %v5178, 4
        %v5181 = vshll.u32 %v5025, 16
        %v5183 = vrot.slane %v5181, 5
        %v5184 = vsel %vm328, %v5179, %v5183
        %v5185 = vrot.slane %v4911, 4
        %v5186 = vrot.slane %v4914, 5
        %v5187 = vor.u32 %v5185, %v5186
        %v5188 = vrot.slane %v5187, 4
        %v5189 = vrot.slane %v4923, 5
        %v5190 = vsel %vm328, %v5188, %v5189
        %v5191 = vrot.slane %v4920, 4
        %v5192 = vor.u32 %v5191, %v5189
        %v5193 = vrot.slane %v5192, 4
        %v5195 = vshll.u32 %v5026, 16
        %v5197 = vrot.slane %v5195, 5
        %v5198 = vsel %vm328, %v5193, %v5197
        %v5199 = vrot.slane %v4933, 4
        %v5200 = vrot.slane %v4936, 5
        %v5201 = vor.u32 %v5199, %v5200
        %v5202 = vrot.slane %v5201, 4
        %v5203 = vrot.slane %v4945, 5
        %v5204 = vsel %vm328, %v5202, %v5203
        %v5205 = vrot.slane %v4942, 4
        %v5206 = vor.u32 %v5205, %v5203
        %v5207 = vrot.slane %v5206, 4
        %v5209 = vshll.u32 %v5027, 16
        %v5211 = vrot.slane %v5209, 5
        %v5212 = vsel %vm328, %v5207, %v5211
        %v5213 = vrot.slane %v4955, 4
        %v5214 = vrot.slane %v4958, 5
        %v5215 = vor.u32 %v5213, %v5214
        %v5216 = vrot.slane %v5215, 4
        %v5217 = vrot.slane %v4967, 5
        %v5218 = vsel %vm328, %v5216, %v5217
        %v5219 = vrot.slane %v4964, 4
        %v5220 = vor.u32 %v5219, %v5217
        %v5221 = vrot.slane %v5220, 4
        %v5223 = vshll.u32 %v5028, 16
        %v5225 = vrot.slane %v5223, 5
        %v5226 = vsel %vm328, %v5221, %v5225
        %v5227 = vrot.slane %v4977, 4
        %v5228 = vrot.slane %v4980, 5
        %v5229 = vor.u32 %v5227, %v5228
        %v5230 = vrot.slane %v5229, 4
        %v5231 = vrot.slane %v4989, 5
        %v5232 = vsel %vm328, %v5230, %v5231
        %v5233 = vrot.slane %v4986, 4
        %v5234 = vor.u32 %v5233, %v5231
        %v5235 = vrot.slane %v5234, 4
        %v5237 = vshll.u32 %v5029, 16
        %v5239 = vrot.slane %v5237, 5
        %v5240 = vsel %vm328, %v5235, %v5239
        %v5241 = vrot.slane %v4999, 4
        %v5242 = vrot.slane %v5002, 5
        %v5243 = vor.u32 %v5241, %v5242
        %v5244 = vrot.slane %v5243, 4
        %v5245 = vrot.slane %v5011, 5
        %v5246 = vsel %vm328, %v5244, %v5245
        %v5247 = vrot.slane %v5008, 4
        %v5248 = vor.u32 %v5247, %v5245
        %v5249 = vrot.slane %v5248, 4
        %v5251 = vshll.u32 %v5030, 16
        %v5253 = vrot.slane %v5251, 5
        %v5254 = vsel %vm328, %v5249, %v5253
        %v5255 = vunpack.c.l.b16 %v4675
        %v5256 = vunpack.c.l.b16 %v4684
        %v5257 = vunpack.c.l.b16 %v4697
        %v5258 = vunpack.c.l.b16 %v4706
        %v5259 = vunpack.c.l.b16 %v4719
        %v5260 = vunpack.c.l.b16 %v4728
        %v5261 = vunpack.c.l.b16 %v4741
        %v5262 = vunpack.c.l.b16 %v4750
        %v5263 = vunpack.c.l.b16 %v4763
        %v5264 = vunpack.c.l.b16 %v4772
        %v5265 = vunpack.c.l.b16 %v4785
        %v5266 = vunpack.c.l.b16 %v4794
        %v5267 = vunpack.c.l.b16 %v4807
        %v5268 = vunpack.c.l.b16 %v4816
        %v5269 = vunpack.c.l.b16 %v4829
        %v5270 = vunpack.c.l.b16 %v4838
        %v5271 = vunpack.c.l.b16 %v4851
        %v5272 = vunpack.c.l.b16 %v4860
        %v5273 = vunpack.c.l.b16 %v4873
        %v5274 = vunpack.c.l.b16 %v4882
        %v5275 = vunpack.c.l.b16 %v4895
        %v5276 = vunpack.c.l.b16 %v4904
        %v5277 = vunpack.c.l.b16 %v4917
        %v5278 = vunpack.c.l.b16 %v4926
        %v5279 = vunpack.c.l.b16 %v4939
        %v5280 = vunpack.c.l.b16 %v4948
        %v5281 = vunpack.c.l.b16 %v4961
        %v5282 = vunpack.c.l.b16 %v4970
        %v5283 = vunpack.c.l.b16 %v4983
        %v5284 = vunpack.c.l.b16 %v4992
        %v5285 = vunpack.c.l.b16 %v5005
        %v5286 = vunpack.c.l.b16 %v5014
        %v5287 = vpack.c.b16 %v5256, %v5255
        %v5288 = vpack.c.b16 %v5258, %v5257
        %v5289 = vpack.c.b16 %v5260, %v5259
        %v5290 = vpack.c.b16 %v5262, %v5261
        %v5291 = vpack.c.b16 %v5264, %v5263
        %v5292 = vpack.c.b16 %v5266, %v5265
        %v5293 = vpack.c.b16 %v5268, %v5267
        %v5294 = vpack.c.b16 %v5270, %v5269
        %v5295 = vpack.c.b16 %v5272, %v5271
        %v5296 = vpack.c.b16 %v5274, %v5273
        %v5297 = vpack.c.b16 %v5276, %v5275
        %v5298 = vpack.c.b16 %v5278, %v5277
        %v5299 = vpack.c.b16 %v5280, %v5279
        %v5300 = vpack.c.b16 %v5282, %v5281
        %v5301 = vpack.c.b16 %v5284, %v5283
        %v5302 = vpack.c.b16 %v5286, %v5285
        %v5335 = vunpack.c.l.b16 %v4616
        %v5336 = vunpack.c.l.b16 %v4617
        %v5337 = vunpack.c.l.b16 %v4619
        %v5338 = vunpack.c.l.b16 %v4620
        %v5339 = vunpack.c.l.b16 %v4622
        %v5340 = vunpack.c.l.b16 %v4623
        %v5341 = vunpack.c.l.b16 %v4625
        %v5342 = vunpack.c.l.b16 %v4626
        %v5343 = vunpack.c.l.b16 %v4628
        %v5344 = vunpack.c.l.b16 %v4629
        %v5345 = vunpack.c.l.b16 %v4631
        %v5346 = vunpack.c.l.b16 %v4632
        %v5347 = vunpack.c.l.b16 %v4634
        %v5348 = vunpack.c.l.b16 %v4635
        %v5349 = vunpack.c.l.b16 %v4637
        %v5350 = vunpack.c.l.b16 %v4638
        %v5351 = vunpack.c.l.b16 %v4640
        %v5352 = vunpack.c.l.b16 %v4641
        %v5353 = vunpack.c.l.b16 %v4643
        %v5354 = vunpack.c.l.b16 %v4644
        %v5355 = vunpack.c.l.b16 %v4646
        %v5356 = vunpack.c.l.b16 %v4647
        %v5357 = vunpack.c.l.b16 %v4649
        %v5358 = vunpack.c.l.b16 %v4650
        %v5359 = vunpack.c.l.b16 %v4652
        %v5360 = vunpack.c.l.b16 %v4653
        %v5361 = vunpack.c.l.b16 %v4655
        %v5362 = vunpack.c.l.b16 %v4656
        %v5363 = vunpack.c.l.b16 %v4658
        %v5364 = vunpack.c.l.b16 %v4659
        %v5365 = vunpack.c.l.b16 %v4661
        %v5366 = vunpack.c.l.b16 %v4662
        %v5367 = vpack.c.b16 %v5336, %v5335
        %v5368 = vpack.c.b16 %v5338, %v5337
        %v5369 = vpack.c.b16 %v5340, %v5339
        %v5370 = vpack.c.b16 %v5342, %v5341
        %v5371 = vpack.c.b16 %v5344, %v5343
        %v5372 = vpack.c.b16 %v5346, %v5345
        %v5373 = vpack.c.b16 %v5348, %v5347
        %v5374 = vpack.c.b16 %v5350, %v5349
        %v5375 = vpack.c.b16 %v5352, %v5351
        %v5376 = vpack.c.b16 %v5354, %v5353
        %v5377 = vpack.c.b16 %v5356, %v5355
        %v5378 = vpack.c.b16 %v5358, %v5357
        %v5379 = vpack.c.b16 %v5360, %v5359
        %v5380 = vpack.c.b16 %v5362, %v5361
        %v5381 = vpack.c.b16 %v5364, %v5363
        %v5382 = vpack.c.b16 %v5366, %v5365
        %5383 = vrot.lane.b32.xlu0 %v5367, 8
        %v5384 = vpop.permute.xlu0 %5383
        %5385 = vrot.lane.b32.xlu0 %v5368, 8
        %v5386 = vpop.permute.xlu0 %5385
        %5387 = vrot.lane.b32.xlu0 %v5369, 8
        %v5388 = vpop.permute.xlu0 %5387
        %5389 = vrot.lane.b32.xlu0 %v5370, 8
        %v5390 = vpop.permute.xlu0 %5389
        %5391 = vrot.lane.b32.xlu0 %v5371, 8
        %v5392 = vpop.permute.xlu0 %5391
        %5393 = vrot.lane.b32.xlu0 %v5372, 8
        %v5394 = vpop.permute.xlu0 %5393
        %5395 = vrot.lane.b32.xlu0 %v5373, 8
        %v5396 = vpop.permute.xlu0 %5395
        %5397 = vrot.lane.b32.xlu0 %v5374, 8
        %v5398 = vpop.permute.xlu0 %5397
        %5399 = vrot.lane.b32.xlu0 %v5375, 8
        %v5400 = vpop.permute.xlu0 %5399
        %5401 = vrot.lane.b32.xlu0 %v5376, 8
        %v5402 = vpop.permute.xlu0 %5401
        %5403 = vrot.lane.b32.xlu0 %v5377, 8
        %v5404 = vpop.permute.xlu0 %5403
        %5405 = vrot.lane.b32.xlu0 %v5378, 8
        %v5406 = vpop.permute.xlu0 %5405
        %5407 = vrot.lane.b32.xlu0 %v5379, 8
        %v5408 = vpop.permute.xlu0 %5407
        %5409 = vrot.lane.b32.xlu0 %v5380, 8
        %v5410 = vpop.permute.xlu0 %5409
        %5411 = vrot.lane.b32.xlu0 %v5381, 8
        %v5412 = vpop.permute.xlu0 %5411
        %5413 = vrot.lane.b32.xlu0 %v5382, 8
        %v5414 = vpop.permute.xlu0 %5413
        %v5415 = vunpack.c.l.b16 %v5036
        %v5416 = vunpack.c.l.b16 %v5044
        %v5417 = vunpack.c.l.b16 %v5050
        %v5418 = vunpack.c.l.b16 %v5058
        %v5419 = vunpack.c.l.b16 %v5064
        %v5420 = vunpack.c.l.b16 %v5072
        %v5421 = vunpack.c.l.b16 %v5078
        %v5422 = vunpack.c.l.b16 %v5086
        %v5423 = vunpack.c.l.b16 %v5092
        %v5424 = vunpack.c.l.b16 %v5100
        %v5425 = vunpack.c.l.b16 %v5106
        %v5426 = vunpack.c.l.b16 %v5114
        %v5427 = vunpack.c.l.b16 %v5120
        %v5428 = vunpack.c.l.b16 %v5128
        %v5429 = vunpack.c.l.b16 %v5134
        %v5430 = vunpack.c.l.b16 %v5142
        %v5431 = vunpack.c.l.b16 %v5148
        %v5432 = vunpack.c.l.b16 %v5156
        %v5433 = vunpack.c.l.b16 %v5162
        %v5434 = vunpack.c.l.b16 %v5170
        %v5435 = vunpack.c.l.b16 %v5176
        %v5436 = vunpack.c.l.b16 %v5184
        %v5437 = vunpack.c.l.b16 %v5190
        %v5438 = vunpack.c.l.b16 %v5198
        %v5439 = vunpack.c.l.b16 %v5204
        %v5440 = vunpack.c.l.b16 %v5212
        %v5441 = vunpack.c.l.b16 %v5218
        %v5442 = vunpack.c.l.b16 %v5226
        %v5443 = vunpack.c.l.b16 %v5232
        %v5444 = vunpack.c.l.b16 %v5240
        %v5445 = vunpack.c.l.b16 %v5246
        %v5446 = vunpack.c.l.b16 %v5254
        %v5447 = vpack.c.b16 %v5416, %v5415
        %v5448 = vpack.c.b16 %v5418, %v5417
        %v5449 = vpack.c.b16 %v5420, %v5419
        %v5450 = vpack.c.b16 %v5422, %v5421
        %v5451 = vpack.c.b16 %v5424, %v5423
        %v5452 = vpack.c.b16 %v5426, %v5425
        %v5453 = vpack.c.b16 %v5428, %v5427
        %v5454 = vpack.c.b16 %v5430, %v5429
        %v5455 = vpack.c.b16 %v5432, %v5431
        %v5456 = vpack.c.b16 %v5434, %v5433
        %v5457 = vpack.c.b16 %v5436, %v5435
        %v5458 = vpack.c.b16 %v5438, %v5437
        %v5459 = vpack.c.b16 %v5440, %v5439
        %v5460 = vpack.c.b16 %v5442, %v5441
        %v5461 = vpack.c.b16 %v5444, %v5443
        %v5462 = vpack.c.b16 %v5446, %v5445
        %5463 = vrot.lane.b32.xlu0 %v5447, 16
        %v5464 = vpop.permute.xlu0 %5463
        %5465 = vrot.lane.b32.xlu0 %v5448, 16
        %v5466 = vpop.permute.xlu0 %5465
        %5467 = vrot.lane.b32.xlu0 %v5449, 16
        %v5468 = vpop.permute.xlu0 %5467
        %5469 = vrot.lane.b32.xlu0 %v5450, 16
        %v5470 = vpop.permute.xlu0 %5469
        %5471 = vrot.lane.b32.xlu0 %v5451, 16
        %v5472 = vpop.permute.xlu0 %5471
        %5473 = vrot.lane.b32.xlu0 %v5452, 16
        %v5474 = vpop.permute.xlu0 %5473
        %5475 = vrot.lane.b32.xlu0 %v5453, 16
        %v5476 = vpop.permute.xlu0 %5475
        %5477 = vrot.lane.b32.xlu0 %v5454, 16
        %v5478 = vpop.permute.xlu0 %5477
        %5479 = vrot.lane.b32.xlu0 %v5455, 16
        %v5480 = vpop.permute.xlu0 %5479
        %5481 = vrot.lane.b32.xlu0 %v5456, 16
        %v5482 = vpop.permute.xlu0 %5481
        %5483 = vrot.lane.b32.xlu0 %v5457, 16
        %v5484 = vpop.permute.xlu0 %5483
        %5485 = vrot.lane.b32.xlu0 %v5458, 16
        %v5486 = vpop.permute.xlu0 %5485
        %5487 = vrot.lane.b32.xlu0 %v5459, 16
        %v5488 = vpop.permute.xlu0 %5487
        %5489 = vrot.lane.b32.xlu0 %v5460, 16
        %v5490 = vpop.permute.xlu0 %5489
        %5491 = vrot.lane.b32.xlu0 %v5461, 16
        %v5492 = vpop.permute.xlu0 %5491
        %5493 = vrot.lane.b32.xlu0 %v5462, 16
        %v5494 = vpop.permute.xlu0 %5493
        %v5497 = vsel %vm2895, %v5287, %v5384
        %v5500 = vsel %vm2895, %v5288, %v5386
        %v5503 = vsel %vm2895, %v5289, %v5388
        %v5506 = vsel %vm2895, %v5290, %v5390
        %v5509 = vsel %vm2895, %v5291, %v5392
        %v5512 = vsel %vm2895, %v5292, %v5394
        %v5515 = vsel %vm2895, %v5293, %v5396
        %v5518 = vsel %vm2895, %v5294, %v5398
        %v5521 = vsel %vm2895, %v5295, %v5400
        %v5524 = vsel %vm2895, %v5296, %v5402
        %v5527 = vsel %vm2895, %v5297, %v5404
        %v5530 = vsel %vm2895, %v5298, %v5406
        %v5533 = vsel %vm2895, %v5299, %v5408
        %v5536 = vsel %vm2895, %v5300, %v5410
        %v5539 = vsel %vm2895, %v5301, %v5412
        %v5542 = vsel %vm2895, %v5302, %v5414
        %v5544 = vsel %vm2961, %v5497, %v5464
        %v5546 = vsel %vm2961, %v5500, %v5466
        %v5548 = vsel %vm2961, %v5503, %v5468
        %v5550 = vsel %vm2961, %v5506, %v5470
        %v5552 = vsel %vm2961, %v5509, %v5472
        %v5554 = vsel %vm2961, %v5512, %v5474
        %v5556 = vsel %vm2961, %v5515, %v5476
        %v5558 = vsel %vm2961, %v5518, %v5478
        %v5560 = vsel %vm2961, %v5521, %v5480
        %v5562 = vsel %vm2961, %v5524, %v5482
        %v5564 = vsel %vm2961, %v5527, %v5484
        %v5566 = vsel %vm2961, %v5530, %v5486
        %v5568 = vsel %vm2961, %v5533, %v5488
        %v5570 = vsel %vm2961, %v5536, %v5490
        %v5572 = vsel %vm2961, %v5539, %v5492
        %v5574 = vsel %vm2961, %v5542, %v5494
        %s5575 = scalar_lea.vmem %s4, 12
        %v5576 = vld [vmem:[%s5575] sm:$0xf]
        %v5577 = vld [vmem:[%s5575 + $0x4] sm:$0xf]
        %v5578 = vld [vmem:[%s5575 + $0x8] sm:$0xf]
        %v5582 = vunpack.c.l.b16 %v5576
        %v5583 = vunpack.c.l.b16 %v5577
        %v5584 = vunpack.c.l.b16 %v5578
        %v5585 = vpack.c.b16 %v5583, %v5582
        %v5586 = vpack.c.b16 %v5584, %v5584
        %v5588 = vsel %vm3027, %v5544, 0
        %v5590 = vsel %vm3027, %v5546, 0
        %v5592 = vsel %vm3027, %v5548, 0
        %v5594 = vsel %vm3027, %v5550, 0
        %v5596 = vsel %vm3027, %v5552, 0
        %v5598 = vsel %vm3027, %v5554, 0
        %v5600 = vsel %vm3027, %v5556, 0
        %v5602 = vsel %vm3027, %v5558, 0
        %v5604 = vsel %vm3027, %v5560, 0
        %v5606 = vsel %vm3027, %v5562, 0
        %v5608 = vsel %vm3027, %v5564, 0
        %v5610 = vsel %vm3027, %v5566, 0
        %v5612 = vsel %vm3027, %v5568, 0
        %v5614 = vsel %vm3027, %v5570, 0
        %v5616 = vsel %vm3027, %v5572, 0
        %v5618 = vsel %vm3027, %v5574, 0
        %vm5620 = vcmask 1043456
        %v5622 = vsel %vm5620, %v5586, 0
        %5624 = vmatpush.bf16.msra.mxu0 0
        %5625 = vmatpush.bf16.msra.mxu0 0
        %5626 = vmatpush.bf16.msra.mxu0 0
        %5627 = vmatpush.bf16.msra.mxu0 0
        %5628 = vmatpush.bf16.msra.mxu0 0
        %5629 = vmatpush.bf16.msra.mxu0 0
        %5630 = vmatpush.bf16.msra.mxu0 %v5622
        %5631 = vmatpush.bf16.msra.mxu0 %v5585
        %5632 = vmatmul.bf16.gmra.mxu0 %v5588
        %v5633 = vpop.f32.mrf.mxu0
        %v5634 = vadd.f32 0.0, %v5633
        %v5635 = vpop.f32.mrf.mxu0
        %v5636 = vadd.f32 0.0, %v5635
        %5637 = vmatmul.bf16.gmra.mxu0 %v5590
        %v5638 = vpop.f32.mrf.mxu0
        %v5639 = vadd.f32 0.0, %v5638
        %v5640 = vpop.f32.mrf.mxu0
        %v5641 = vadd.f32 0.0, %v5640
        %5642 = vmatmul.bf16.gmra.mxu0 %v5592
        %v5643 = vpop.f32.mrf.mxu0
        %v5644 = vadd.f32 0.0, %v5643
        %v5645 = vpop.f32.mrf.mxu0
        %v5646 = vadd.f32 0.0, %v5645
        %5647 = vmatmul.bf16.gmra.mxu0 %v5594
        %v5648 = vpop.f32.mrf.mxu0
        %v5649 = vadd.f32 0.0, %v5648
        %v5650 = vpop.f32.mrf.mxu0
        %v5651 = vadd.f32 0.0, %v5650
        %5652 = vmatmul.bf16.gmra.mxu0 %v5596
        %v5653 = vpop.f32.mrf.mxu0
        %v5654 = vadd.f32 0.0, %v5653
        %v5655 = vpop.f32.mrf.mxu0
        %v5656 = vadd.f32 0.0, %v5655
        %5657 = vmatmul.bf16.gmra.mxu0 %v5598
        %v5658 = vpop.f32.mrf.mxu0
        %v5659 = vadd.f32 0.0, %v5658
        %v5660 = vpop.f32.mrf.mxu0
        %v5661 = vadd.f32 0.0, %v5660
        %5662 = vmatmul.bf16.gmra.mxu0 %v5600
        %v5663 = vpop.f32.mrf.mxu0
        %v5664 = vadd.f32 0.0, %v5663
        %v5665 = vpop.f32.mrf.mxu0
        %v5666 = vadd.f32 0.0, %v5665
        %5667 = vmatmul.bf16.gmra.mxu0 %v5602
        %v5668 = vpop.f32.mrf.mxu0
        %v5669 = vadd.f32 0.0, %v5668
        %v5670 = vpop.f32.mrf.mxu0
        %v5671 = vadd.f32 0.0, %v5670
        %5672 = vmatmul.bf16.gmra.mxu0 %v5604
        %v5673 = vpop.f32.mrf.mxu0
        %v5674 = vadd.f32 0.0, %v5673
        %v5675 = vpop.f32.mrf.mxu0
        %v5676 = vadd.f32 0.0, %v5675
        %5677 = vmatmul.bf16.gmra.mxu0 %v5606
        %v5678 = vpop.f32.mrf.mxu0
        %v5679 = vadd.f32 0.0, %v5678
        %v5680 = vpop.f32.mrf.mxu0
        %v5681 = vadd.f32 0.0, %v5680
        %5682 = vmatmul.bf16.gmra.mxu0 %v5608
        %v5683 = vpop.f32.mrf.mxu0
        %v5684 = vadd.f32 0.0, %v5683
        %v5685 = vpop.f32.mrf.mxu0
        %v5686 = vadd.f32 0.0, %v5685
        %5687 = vmatmul.bf16.gmra.mxu0 %v5610
        %v5688 = vpop.f32.mrf.mxu0
        %v5689 = vadd.f32 0.0, %v5688
        %v5690 = vpop.f32.mrf.mxu0
        %v5691 = vadd.f32 0.0, %v5690
        %5692 = vmatmul.bf16.gmra.mxu0 %v5612
        %v5693 = vpop.f32.mrf.mxu0
        %v5694 = vadd.f32 0.0, %v5693
        %v5695 = vpop.f32.mrf.mxu0
        %v5696 = vadd.f32 0.0, %v5695
        %5697 = vmatmul.bf16.gmra.mxu0 %v5614
        %v5698 = vpop.f32.mrf.mxu0
        %v5699 = vadd.f32 0.0, %v5698
        %v5700 = vpop.f32.mrf.mxu0
        %v5701 = vadd.f32 0.0, %v5700
        %5702 = vmatmul.bf16.gmra.mxu0 %v5616
        %v5703 = vpop.f32.mrf.mxu0
        %v5704 = vadd.f32 0.0, %v5703
        %v5705 = vpop.f32.mrf.mxu0
        %v5706 = vadd.f32 0.0, %v5705
        %5707 = vmatmul.bf16.gmra.mxu0 %v5618
        %v5708 = vpop.f32.mrf.mxu0
        %v5709 = vadd.f32 0.0, %v5708
        %v5710 = vpop.f32.mrf.mxu0
        %v5711 = vadd.f32 0.0, %v5710
        %5712 = vdwg.mxu0
        %v5716 = vunpack.c.l.b16 %v4612
        %v5717 = vunpack.c.l.b16 %v4613
        %v5718 = vunpack.c.l.b16 %v4614
        %v5719 = vpack.c.b16 %v5717, %v5716
        %v5720 = vpack.c.b16 %v5718, %v5718
        %v5722 = vsel %vm3027, %v4581, 0
        %v5724 = vsel %vm3027, %v4583, 0
        %v5726 = vsel %vm3027, %v4585, 0
        %v5728 = vsel %vm3027, %v4587, 0
        %v5730 = vsel %vm3027, %v4589, 0
        %v5732 = vsel %vm3027, %v4591, 0
        %v5734 = vsel %vm3027, %v4593, 0
        %v5736 = vsel %vm3027, %v4595, 0
        %v5738 = vsel %vm3027, %v4597, 0
        %v5740 = vsel %vm3027, %v4599, 0
        %v5742 = vsel %vm3027, %v4601, 0
        %v5744 = vsel %vm3027, %v4603, 0
        %v5746 = vsel %vm3027, %v4605, 0
        %v5748 = vsel %vm3027, %v4607, 0
        %v5750 = vsel %vm3027, %v4609, 0
        %v5752 = vsel %vm3027, %v4611, 0
        %v5755 = vsel %vm5620, %v5720, 0
        %5757 = vmatpush.bf16.msra.mxu0 0
        %5758 = vmatpush.bf16.msra.mxu0 0
        %5759 = vmatpush.bf16.msra.mxu0 0
        %5760 = vmatpush.bf16.msra.mxu0 0
        %5761 = vmatpush.bf16.msra.mxu0 0
        %5762 = vmatpush.bf16.msra.mxu0 0
        %5763 = vmatpush.bf16.msra.mxu0 %v5755
        %5764 = vmatpush.bf16.msra.mxu0 %v5719
        %5765 = vmatmul.bf16.gmra.mxu0 %v5722
        %v5766 = vpop.f32.mrf.mxu0
        %v5767 = vadd.f32 %v5634, %v5766
        %v5768 = vpop.f32.mrf.mxu0
        %v5769 = vadd.f32 %v5636, %v5768
        %5770 = vmatmul.bf16.gmra.mxu0 %v5724
        %v5771 = vpop.f32.mrf.mxu0
        %v5772 = vadd.f32 %v5639, %v5771
        %v5773 = vpop.f32.mrf.mxu0
        %v5774 = vadd.f32 %v5641, %v5773
        %5775 = vmatmul.bf16.gmra.mxu0 %v5726
        %v5776 = vpop.f32.mrf.mxu0
        %v5777 = vadd.f32 %v5644, %v5776
        %v5778 = vpop.f32.mrf.mxu0
        %v5779 = vadd.f32 %v5646, %v5778
        %5780 = vmatmul.bf16.gmra.mxu0 %v5728
        %v5781 = vpop.f32.mrf.mxu0
        %v5782 = vadd.f32 %v5649, %v5781
        %v5783 = vpop.f32.mrf.mxu0
        %v5784 = vadd.f32 %v5651, %v5783
        %5785 = vmatmul.bf16.gmra.mxu0 %v5730
        %v5786 = vpop.f32.mrf.mxu0
        %v5787 = vadd.f32 %v5654, %v5786
        %v5788 = vpop.f32.mrf.mxu0
        %v5789 = vadd.f32 %v5656, %v5788
        %5790 = vmatmul.bf16.gmra.mxu0 %v5732
        %v5791 = vpop.f32.mrf.mxu0
        %v5792 = vadd.f32 %v5659, %v5791
        %v5793 = vpop.f32.mrf.mxu0
        %v5794 = vadd.f32 %v5661, %v5793
        %5795 = vmatmul.bf16.gmra.mxu0 %v5734
        %v5796 = vpop.f32.mrf.mxu0
        %v5797 = vadd.f32 %v5664, %v5796
        %v5798 = vpop.f32.mrf.mxu0
        %v5799 = vadd.f32 %v5666, %v5798
        %5800 = vmatmul.bf16.gmra.mxu0 %v5736
        %v5801 = vpop.f32.mrf.mxu0
        %v5802 = vadd.f32 %v5669, %v5801
        %v5803 = vpop.f32.mrf.mxu0
        %v5804 = vadd.f32 %v5671, %v5803
        %5805 = vmatmul.bf16.gmra.mxu0 %v5738
        %v5806 = vpop.f32.mrf.mxu0
        %v5807 = vadd.f32 %v5674, %v5806
        %v5808 = vpop.f32.mrf.mxu0
        %v5809 = vadd.f32 %v5676, %v5808
        %5810 = vmatmul.bf16.gmra.mxu0 %v5740
        %v5811 = vpop.f32.mrf.mxu0
        %v5812 = vadd.f32 %v5679, %v5811
        %v5813 = vpop.f32.mrf.mxu0
        %v5814 = vadd.f32 %v5681, %v5813
        %5815 = vmatmul.bf16.gmra.mxu0 %v5742
        %v5816 = vpop.f32.mrf.mxu0
        %v5817 = vadd.f32 %v5684, %v5816
        %v5818 = vpop.f32.mrf.mxu0
        %v5819 = vadd.f32 %v5686, %v5818
        %5820 = vmatmul.bf16.gmra.mxu0 %v5744
        %v5821 = vpop.f32.mrf.mxu0
        %v5822 = vadd.f32 %v5689, %v5821
        %v5823 = vpop.f32.mrf.mxu0
        %v5824 = vadd.f32 %v5691, %v5823
        %5825 = vmatmul.bf16.gmra.mxu0 %v5746
        %v5826 = vpop.f32.mrf.mxu0
        %v5827 = vadd.f32 %v5694, %v5826
        %v5828 = vpop.f32.mrf.mxu0
        %v5829 = vadd.f32 %v5696, %v5828
        %5830 = vmatmul.bf16.gmra.mxu0 %v5748
        %v5831 = vpop.f32.mrf.mxu0
        %v5832 = vadd.f32 %v5699, %v5831
        %v5833 = vpop.f32.mrf.mxu0
        %v5834 = vadd.f32 %v5701, %v5833
        %5835 = vmatmul.bf16.gmra.mxu0 %v5750
        %v5836 = vpop.f32.mrf.mxu0
        %v5837 = vadd.f32 %v5704, %v5836
        %v5838 = vpop.f32.mrf.mxu0
        %v5839 = vadd.f32 %v5706, %v5838
        %5840 = vmatmul.bf16.gmra.mxu0 %v5752
        %v5841 = vpop.f32.mrf.mxu0
        %v5842 = vadd.f32 %v5709, %v5841
        %v5843 = vpop.f32.mrf.mxu0
        %v5844 = vadd.f32 %v5711, %v5843
        %5845 = vdwg.mxu0
        %s5846 = scalar_lea.vmem [#allocation2], 32
        %v5847 = vld [vmem:[%s5846] sm:$0x8]
        %v5848 = vld [vmem:[%s5846 + $0x4] sm:$0xf]
        %v5849 = vld [vmem:[%s5846 + $0x8] sm:$0xf]
        %v5850 = vld [vmem:[%s5846 + $0x10] sm:$0x8]
        %v5851 = vld [vmem:[%s5846 + $0x14] sm:$0xf]
        %v5852 = vld [vmem:[%s5846 + $0x18] sm:$0xf]
        %v5853 = vld [vmem:[%s5846 + $0x20] sm:$0x8]
        %v5854 = vld [vmem:[%s5846 + $0x24] sm:$0xf]
        %v5855 = vld [vmem:[%s5846 + $0x28] sm:$0xf]
        %v5856 = vld [vmem:[%s5846 + $0x30] sm:$0x8]
        %v5857 = vld [vmem:[%s5846 + $0x34] sm:$0xf]
        %v5858 = vld [vmem:[%s5846 + $0x38] sm:$0xf]
        %v5859 = vld [vmem:[%s5846 + $0x40] sm:$0x8]
        %v5860 = vld [vmem:[%s5846 + $0x44] sm:$0xf]
        %v5861 = vld [vmem:[%s5846 + $0x48] sm:$0xf]
        %v5862 = vld [vmem:[%s5846 + $0x50] sm:$0x8]
        %v5863 = vld [vmem:[%s5846 + $0x54] sm:$0xf]
        %v5864 = vld [vmem:[%s5846 + $0x58] sm:$0xf]
        %v5865 = vld [vmem:[%s5846 + $0x60] sm:$0x8]
        %v5866 = vld [vmem:[%s5846 + $0x64] sm:$0xf]
        %v5867 = vld [vmem:[%s5846 + $0x68] sm:$0xf]
        %v5868 = vld [vmem:[%s5846 + $0x70] sm:$0x8]
        %v5869 = vld [vmem:[%s5846 + $0x74] sm:$0xf]
        %v5870 = vld [vmem:[%s5846 + $0x78] sm:$0xf]
        %v5871 = vld [vmem:[%s5846 + $0x80] sm:$0x8]
        %v5872 = vld [vmem:[%s5846 + $0x84] sm:$0xf]
        %v5873 = vld [vmem:[%s5846 + $0x88] sm:$0xf]
        %v5874 = vld [vmem:[%s5846 + $0x90] sm:$0x8]
        %v5875 = vld [vmem:[%s5846 + $0x94] sm:$0xf]
        %v5876 = vld [vmem:[%s5846 + $0x98] sm:$0xf]
        %v5877 = vld [vmem:[%s5846 + $0xa0] sm:$0x8]
        %v5878 = vld [vmem:[%s5846 + $0xa4] sm:$0xf]
        %v5879 = vld [vmem:[%s5846 + $0xa8] sm:$0xf]
        %v5880 = vld [vmem:[%s5846 + $0xb0] sm:$0x8]
        %v5881 = vld [vmem:[%s5846 + $0xb4] sm:$0xf]
        %v5882 = vld [vmem:[%s5846 + $0xb8] sm:$0xf]
        %v5883 = vld [vmem:[%s5846 + $0xc0] sm:$0x8]
        %v5884 = vld [vmem:[%s5846 + $0xc4] sm:$0xf]
        %v5885 = vld [vmem:[%s5846 + $0xc8] sm:$0xf]
        %v5886 = vld [vmem:[%s5846 + $0xd0] sm:$0x8]
        %v5887 = vld [vmem:[%s5846 + $0xd4] sm:$0xf]
        %v5888 = vld [vmem:[%s5846 + $0xd8] sm:$0xf]
        %v5889 = vld [vmem:[%s5846 + $0xe0] sm:$0x8]
        %v5890 = vld [vmem:[%s5846 + $0xe4] sm:$0xf]
        %v5891 = vld [vmem:[%s5846 + $0xe8] sm:$0xf]
        %v5892 = vld [vmem:[%s5846 + $0xf0] sm:$0x8]
        %v5893 = vld [vmem:[%s5846 + $0xf4] sm:$0xf]
        %v5894 = vld [vmem:[%s5846 + $0xf8] sm:$0xf]
        %v5896 = vshrl.u32 %v5847, 16
        %v5898 = vrot.slane %v5896, 7
        %v5899 = vrot.slane %v5898, 4
        %v5901 = vshrl.u32 %v5848, 16
        %v5903 = vrot.slane %v5901, 7
        %v5904 = vshll.u32 %v5848, 16
        %v5906 = vor.u32 %v5903, %v5904
        %v5907 = vsel %vm3699, %v5899, %v5906
        %v5908 = vrot.slane %v5903, 4
        %v5910 = vshrl.u32 %v5849, 16
        %v5912 = vrot.slane %v5910, 7
        %v5913 = vshll.u32 %v5849, 16
        %v5915 = vor.u32 %v5912, %v5913
        %v5916 = vsel %vm3699, %v5908, %v5915
        %v5918 = vshrl.u32 %v5850, 16
        %v5920 = vrot.slane %v5918, 7
        %v5921 = vrot.slane %v5920, 4
        %v5923 = vshrl.u32 %v5851, 16
        %v5925 = vrot.slane %v5923, 7
        %v5926 = vshll.u32 %v5851, 16
        %v5928 = vor.u32 %v5925, %v5926
        %v5929 = vsel %vm3699, %v5921, %v5928
        %v5930 = vrot.slane %v5925, 4
        %v5932 = vshrl.u32 %v5852, 16
        %v5934 = vrot.slane %v5932, 7
        %v5935 = vshll.u32 %v5852, 16
        %v5937 = vor.u32 %v5934, %v5935
        %v5938 = vsel %vm3699, %v5930, %v5937
        %v5940 = vshrl.u32 %v5853, 16
        %v5942 = vrot.slane %v5940, 7
        %v5943 = vrot.slane %v5942, 4
        %v5945 = vshrl.u32 %v5854, 16
        %v5947 = vrot.slane %v5945, 7
        %v5948 = vshll.u32 %v5854, 16
        %v5950 = vor.u32 %v5947, %v5948
        %v5951 = vsel %vm3699, %v5943, %v5950
        %v5952 = vrot.slane %v5947, 4
        %v5954 = vshrl.u32 %v5855, 16
        %v5956 = vrot.slane %v5954, 7
        %v5957 = vshll.u32 %v5855, 16
        %v5959 = vor.u32 %v5956, %v5957
        %v5960 = vsel %vm3699, %v5952, %v5959
        %v5962 = vshrl.u32 %v5856, 16
        %v5964 = vrot.slane %v5962, 7
        %v5965 = vrot.slane %v5964, 4
        %v5967 = vshrl.u32 %v5857, 16
        %v5969 = vrot.slane %v5967, 7
        %v5970 = vshll.u32 %v5857, 16
        %v5972 = vor.u32 %v5969, %v5970
        %v5973 = vsel %vm3699, %v5965, %v5972
        %v5974 = vrot.slane %v5969, 4
        %v5976 = vshrl.u32 %v5858, 16
        %v5978 = vrot.slane %v5976, 7
        %v5979 = vshll.u32 %v5858, 16
        %v5981 = vor.u32 %v5978, %v5979
        %v5982 = vsel %vm3699, %v5974, %v5981
        %v5984 = vshrl.u32 %v5859, 16
        %v5986 = vrot.slane %v5984, 7
        %v5987 = vrot.slane %v5986, 4
        %v5989 = vshrl.u32 %v5860, 16
        %v5991 = vrot.slane %v5989, 7
        %v5992 = vshll.u32 %v5860, 16
        %v5994 = vor.u32 %v5991, %v5992
        %v5995 = vsel %vm3699, %v5987, %v5994
        %v5996 = vrot.slane %v5991, 4
        %v5998 = vshrl.u32 %v5861, 16
        %v6000 = vrot.slane %v5998, 7
        %v6001 = vshll.u32 %v5861, 16
        %v6003 = vor.u32 %v6000, %v6001
        %v6004 = vsel %vm3699, %v5996, %v6003
        %v6006 = vshrl.u32 %v5862, 16
        %v6008 = vrot.slane %v6006, 7
        %v6009 = vrot.slane %v6008, 4
        %v6011 = vshrl.u32 %v5863, 16
        %v6013 = vrot.slane %v6011, 7
        %v6014 = vshll.u32 %v5863, 16
        %v6016 = vor.u32 %v6013, %v6014
        %v6017 = vsel %vm3699, %v6009, %v6016
        %v6018 = vrot.slane %v6013, 4
        %v6020 = vshrl.u32 %v5864, 16
        %v6022 = vrot.slane %v6020, 7
        %v6023 = vshll.u32 %v5864, 16
        %v6025 = vor.u32 %v6022, %v6023
        %v6026 = vsel %vm3699, %v6018, %v6025
        %v6028 = vshrl.u32 %v5865, 16
        %v6030 = vrot.slane %v6028, 7
        %v6031 = vrot.slane %v6030, 4
        %v6033 = vshrl.u32 %v5866, 16
        %v6035 = vrot.slane %v6033, 7
        %v6036 = vshll.u32 %v5866, 16
        %v6038 = vor.u32 %v6035, %v6036
        %v6039 = vsel %vm3699, %v6031, %v6038
        %v6040 = vrot.slane %v6035, 4
        %v6042 = vshrl.u32 %v5867, 16
        %v6044 = vrot.slane %v6042, 7
        %v6045 = vshll.u32 %v5867, 16
        %v6047 = vor.u32 %v6044, %v6045
        %v6048 = vsel %vm3699, %v6040, %v6047
        %v6050 = vshrl.u32 %v5868, 16
        %v6052 = vrot.slane %v6050, 7
        %v6053 = vrot.slane %v6052, 4
        %v6055 = vshrl.u32 %v5869, 16
        %v6057 = vrot.slane %v6055, 7
        %v6058 = vshll.u32 %v5869, 16
        %v6060 = vor.u32 %v6057, %v6058
        %v6061 = vsel %vm3699, %v6053, %v6060
        %v6062 = vrot.slane %v6057, 4
        %v6064 = vshrl.u32 %v5870, 16
        %v6066 = vrot.slane %v6064, 7
        %v6067 = vshll.u32 %v5870, 16
        %v6069 = vor.u32 %v6066, %v6067
        %v6070 = vsel %vm3699, %v6062, %v6069
        %v6072 = vshrl.u32 %v5871, 16
        %v6074 = vrot.slane %v6072, 7
        %v6075 = vrot.slane %v6074, 4
        %v6077 = vshrl.u32 %v5872, 16
        %v6079 = vrot.slane %v6077, 7
        %v6080 = vshll.u32 %v5872, 16
        %v6082 = vor.u32 %v6079, %v6080
        %v6083 = vsel %vm3699, %v6075, %v6082
        %v6084 = vrot.slane %v6079, 4
        %v6086 = vshrl.u32 %v5873, 16
        %v6088 = vrot.slane %v6086, 7
        %v6089 = vshll.u32 %v5873, 16
        %v6091 = vor.u32 %v6088, %v6089
        %v6092 = vsel %vm3699, %v6084, %v6091
        %v6094 = vshrl.u32 %v5874, 16
        %v6096 = vrot.slane %v6094, 7
        %v6097 = vrot.slane %v6096, 4
        %v6099 = vshrl.u32 %v5875, 16
        %v6101 = vrot.slane %v6099, 7
        %v6102 = vshll.u32 %v5875, 16
        %v6104 = vor.u32 %v6101, %v6102
        %v6105 = vsel %vm3699, %v6097, %v6104
        %v6106 = vrot.slane %v6101, 4
        %v6108 = vshrl.u32 %v5876, 16
        %v6110 = vrot.slane %v6108, 7
        %v6111 = vshll.u32 %v5876, 16
        %v6113 = vor.u32 %v6110, %v6111
        %v6114 = vsel %vm3699, %v6106, %v6113
        %v6116 = vshrl.u32 %v5877, 16
        %v6118 = vrot.slane %v6116, 7
        %v6119 = vrot.slane %v6118, 4
        %v6121 = vshrl.u32 %v5878, 16
        %v6123 = vrot.slane %v6121, 7
        %v6124 = vshll.u32 %v5878, 16
        %v6126 = vor.u32 %v6123, %v6124
        %v6127 = vsel %vm3699, %v6119, %v6126
        %v6128 = vrot.slane %v6123, 4
        %v6130 = vshrl.u32 %v5879, 16
        %v6132 = vrot.slane %v6130, 7
        %v6133 = vshll.u32 %v5879, 16
        %v6135 = vor.u32 %v6132, %v6133
        %v6136 = vsel %vm3699, %v6128, %v6135
        %v6138 = vshrl.u32 %v5880, 16
        %v6140 = vrot.slane %v6138, 7
        %v6141 = vrot.slane %v6140, 4
        %v6143 = vshrl.u32 %v5881, 16
        %v6145 = vrot.slane %v6143, 7
        %v6146 = vshll.u32 %v5881, 16
        %v6148 = vor.u32 %v6145, %v6146
        %v6149 = vsel %vm3699, %v6141, %v6148
        %v6150 = vrot.slane %v6145, 4
        %v6152 = vshrl.u32 %v5882, 16
        %v6154 = vrot.slane %v6152, 7
        %v6155 = vshll.u32 %v5882, 16
        %v6157 = vor.u32 %v6154, %v6155
        %v6158 = vsel %vm3699, %v6150, %v6157
        %v6160 = vshrl.u32 %v5883, 16
        %v6162 = vrot.slane %v6160, 7
        %v6163 = vrot.slane %v6162, 4
        %v6165 = vshrl.u32 %v5884, 16
        %v6167 = vrot.slane %v6165, 7
        %v6168 = vshll.u32 %v5884, 16
        %v6170 = vor.u32 %v6167, %v6168
        %v6171 = vsel %vm3699, %v6163, %v6170
        %v6172 = vrot.slane %v6167, 4
        %v6174 = vshrl.u32 %v5885, 16
        %v6176 = vrot.slane %v6174, 7
        %v6177 = vshll.u32 %v5885, 16
        %v6179 = vor.u32 %v6176, %v6177
        %v6180 = vsel %vm3699, %v6172, %v6179
        %v6182 = vshrl.u32 %v5886, 16
        %v6184 = vrot.slane %v6182, 7
        %v6185 = vrot.slane %v6184, 4
        %v6187 = vshrl.u32 %v5887, 16
        %v6189 = vrot.slane %v6187, 7
        %v6190 = vshll.u32 %v5887, 16
        %v6192 = vor.u32 %v6189, %v6190
        %v6193 = vsel %vm3699, %v6185, %v6192
        %v6194 = vrot.slane %v6189, 4
        %v6196 = vshrl.u32 %v5888, 16
        %v6198 = vrot.slane %v6196, 7
        %v6199 = vshll.u32 %v5888, 16
        %v6201 = vor.u32 %v6198, %v6199
        %v6202 = vsel %vm3699, %v6194, %v6201
        %v6204 = vshrl.u32 %v5889, 16
        %v6206 = vrot.slane %v6204, 7
        %v6207 = vrot.slane %v6206, 4
        %v6209 = vshrl.u32 %v5890, 16
        %v6211 = vrot.slane %v6209, 7
        %v6212 = vshll.u32 %v5890, 16
        %v6214 = vor.u32 %v6211, %v6212
        %v6215 = vsel %vm3699, %v6207, %v6214
        %v6216 = vrot.slane %v6211, 4
        %v6218 = vshrl.u32 %v5891, 16
        %v6220 = vrot.slane %v6218, 7
        %v6221 = vshll.u32 %v5891, 16
        %v6223 = vor.u32 %v6220, %v6221
        %v6224 = vsel %vm3699, %v6216, %v6223
        %v6226 = vshrl.u32 %v5892, 16
        %v6228 = vrot.slane %v6226, 7
        %v6229 = vrot.slane %v6228, 4
        %v6231 = vshrl.u32 %v5893, 16
        %v6233 = vrot.slane %v6231, 7
        %v6234 = vshll.u32 %v5893, 16
        %v6236 = vor.u32 %v6233, %v6234
        %v6237 = vsel %vm3699, %v6229, %v6236
        %v6238 = vrot.slane %v6233, 4
        %v6240 = vshrl.u32 %v5894, 16
        %v6242 = vrot.slane %v6240, 7
        %v6243 = vshll.u32 %v5894, 16
        %v6245 = vor.u32 %v6242, %v6243
        %v6246 = vsel %vm3699, %v6238, %v6245
        %v6247 = vld [vmem:[%s5846 + $0xc] sm:$0x1]
        %v6248 = vld [vmem:[%s5846 + $0x1c] sm:$0x1]
        %v6249 = vld [vmem:[%s5846 + $0x2c] sm:$0x1]
        %v6250 = vld [vmem:[%s5846 + $0x3c] sm:$0x1]
        %v6251 = vld [vmem:[%s5846 + $0x4c] sm:$0x1]
        %v6252 = vld [vmem:[%s5846 + $0x5c] sm:$0x1]
        %v6253 = vld [vmem:[%s5846 + $0x6c] sm:$0x1]
        %v6254 = vld [vmem:[%s5846 + $0x7c] sm:$0x1]
        %v6255 = vld [vmem:[%s5846 + $0x8c] sm:$0x1]
        %v6256 = vld [vmem:[%s5846 + $0x9c] sm:$0x1]
        %v6257 = vld [vmem:[%s5846 + $0xac] sm:$0x1]
        %v6258 = vld [vmem:[%s5846 + $0xbc] sm:$0x1]
        %v6259 = vld [vmem:[%s5846 + $0xcc] sm:$0x1]
        %v6260 = vld [vmem:[%s5846 + $0xdc] sm:$0x1]
        %v6261 = vld [vmem:[%s5846 + $0xec] sm:$0x1]
        %v6262 = vld [vmem:[%s5846 + $0xfc] sm:$0x1]
        %v6263 = vrot.slane %v5901, 4
        %v6264 = vrot.slane %v5904, 5
        %v6265 = vor.u32 %v6263, %v6264
        %v6266 = vrot.slane %v6265, 4
        %v6267 = vrot.slane %v5913, 5
        %v6268 = vsel %vm328, %v6266, %v6267
        %v6269 = vrot.slane %v5910, 4
        %v6270 = vor.u32 %v6269, %v6267
        %v6271 = vrot.slane %v6270, 4
        %v6273 = vshll.u32 %v6247, 16
        %v6275 = vrot.slane %v6273, 5
        %v6276 = vsel %vm328, %v6271, %v6275
        %v6277 = vrot.slane %v5923, 4
        %v6278 = vrot.slane %v5926, 5
        %v6279 = vor.u32 %v6277, %v6278
        %v6280 = vrot.slane %v6279, 4
        %v6281 = vrot.slane %v5935, 5
        %v6282 = vsel %vm328, %v6280, %v6281
        %v6283 = vrot.slane %v5932, 4
        %v6284 = vor.u32 %v6283, %v6281
        %v6285 = vrot.slane %v6284, 4
        %v6287 = vshll.u32 %v6248, 16
        %v6289 = vrot.slane %v6287, 5
        %v6290 = vsel %vm328, %v6285, %v6289
        %v6291 = vrot.slane %v5945, 4
        %v6292 = vrot.slane %v5948, 5
        %v6293 = vor.u32 %v6291, %v6292
        %v6294 = vrot.slane %v6293, 4
        %v6295 = vrot.slane %v5957, 5
        %v6296 = vsel %vm328, %v6294, %v6295
        %v6297 = vrot.slane %v5954, 4
        %v6298 = vor.u32 %v6297, %v6295
        %v6299 = vrot.slane %v6298, 4
        %v6301 = vshll.u32 %v6249, 16
        %v6303 = vrot.slane %v6301, 5
        %v6304 = vsel %vm328, %v6299, %v6303
        %v6305 = vrot.slane %v5967, 4
        %v6306 = vrot.slane %v5970, 5
        %v6307 = vor.u32 %v6305, %v6306
        %v6308 = vrot.slane %v6307, 4
        %v6309 = vrot.slane %v5979, 5
        %v6310 = vsel %vm328, %v6308, %v6309
        %v6311 = vrot.slane %v5976, 4
        %v6312 = vor.u32 %v6311, %v6309
        %v6313 = vrot.slane %v6312, 4
        %v6315 = vshll.u32 %v6250, 16
        %v6317 = vrot.slane %v6315, 5
        %v6318 = vsel %vm328, %v6313, %v6317
        %v6319 = vrot.slane %v5989, 4
        %v6320 = vrot.slane %v5992, 5
        %v6321 = vor.u32 %v6319, %v6320
        %v6322 = vrot.slane %v6321, 4
        %v6323 = vrot.slane %v6001, 5
        %v6324 = vsel %vm328, %v6322, %v6323
        %v6325 = vrot.slane %v5998, 4
        %v6326 = vor.u32 %v6325, %v6323
        %v6327 = vrot.slane %v6326, 4
        %v6329 = vshll.u32 %v6251, 16
        %v6331 = vrot.slane %v6329, 5
        %v6332 = vsel %vm328, %v6327, %v6331
        %v6333 = vrot.slane %v6011, 4
        %v6334 = vrot.slane %v6014, 5
        %v6335 = vor.u32 %v6333, %v6334
        %v6336 = vrot.slane %v6335, 4
        %v6337 = vrot.slane %v6023, 5
        %v6338 = vsel %vm328, %v6336, %v6337
        %v6339 = vrot.slane %v6020, 4
        %v6340 = vor.u32 %v6339, %v6337
        %v6341 = vrot.slane %v6340, 4
        %v6343 = vshll.u32 %v6252, 16
        %v6345 = vrot.slane %v6343, 5
        %v6346 = vsel %vm328, %v6341, %v6345
        %v6347 = vrot.slane %v6033, 4
        %v6348 = vrot.slane %v6036, 5
        %v6349 = vor.u32 %v6347, %v6348
        %v6350 = vrot.slane %v6349, 4
        %v6351 = vrot.slane %v6045, 5
        %v6352 = vsel %vm328, %v6350, %v6351
        %v6353 = vrot.slane %v6042, 4
        %v6354 = vor.u32 %v6353, %v6351
        %v6355 = vrot.slane %v6354, 4
        %v6357 = vshll.u32 %v6253, 16
        %v6359 = vrot.slane %v6357, 5
        %v6360 = vsel %vm328, %v6355, %v6359
        %v6361 = vrot.slane %v6055, 4
        %v6362 = vrot.slane %v6058, 5
        %v6363 = vor.u32 %v6361, %v6362
        %v6364 = vrot.slane %v6363, 4
        %v6365 = vrot.slane %v6067, 5
        %v6366 = vsel %vm328, %v6364, %v6365
        %v6367 = vrot.slane %v6064, 4
        %v6368 = vor.u32 %v6367, %v6365
        %v6369 = vrot.slane %v6368, 4
        %v6371 = vshll.u32 %v6254, 16
        %v6373 = vrot.slane %v6371, 5
        %v6374 = vsel %vm328, %v6369, %v6373
        %v6375 = vrot.slane %v6077, 4
        %v6376 = vrot.slane %v6080, 5
        %v6377 = vor.u32 %v6375, %v6376
        %v6378 = vrot.slane %v6377, 4
        %v6379 = vrot.slane %v6089, 5
        %v6380 = vsel %vm328, %v6378, %v6379
        %v6381 = vrot.slane %v6086, 4
        %v6382 = vor.u32 %v6381, %v6379
        %v6383 = vrot.slane %v6382, 4
        %v6385 = vshll.u32 %v6255, 16
        %v6387 = vrot.slane %v6385, 5
        %v6388 = vsel %vm328, %v6383, %v6387
        %v6389 = vrot.slane %v6099, 4
        %v6390 = vrot.slane %v6102, 5
        %v6391 = vor.u32 %v6389, %v6390
        %v6392 = vrot.slane %v6391, 4
        %v6393 = vrot.slane %v6111, 5
        %v6394 = vsel %vm328, %v6392, %v6393
        %v6395 = vrot.slane %v6108, 4
        %v6396 = vor.u32 %v6395, %v6393
        %v6397 = vrot.slane %v6396, 4
        %v6399 = vshll.u32 %v6256, 16
        %v6401 = vrot.slane %v6399, 5
        %v6402 = vsel %vm328, %v6397, %v6401
        %v6403 = vrot.slane %v6121, 4
        %v6404 = vrot.slane %v6124, 5
        %v6405 = vor.u32 %v6403, %v6404
        %v6406 = vrot.slane %v6405, 4
        %v6407 = vrot.slane %v6133, 5
        %v6408 = vsel %vm328, %v6406, %v6407
        %v6409 = vrot.slane %v6130, 4
        %v6410 = vor.u32 %v6409, %v6407
        %v6411 = vrot.slane %v6410, 4
        %v6413 = vshll.u32 %v6257, 16
        %v6415 = vrot.slane %v6413, 5
        %v6416 = vsel %vm328, %v6411, %v6415
        %v6417 = vrot.slane %v6143, 4
        %v6418 = vrot.slane %v6146, 5
        %v6419 = vor.u32 %v6417, %v6418
        %v6420 = vrot.slane %v6419, 4
        %v6421 = vrot.slane %v6155, 5
        %v6422 = vsel %vm328, %v6420, %v6421
        %v6423 = vrot.slane %v6152, 4
        %v6424 = vor.u32 %v6423, %v6421
        %v6425 = vrot.slane %v6424, 4
        %v6427 = vshll.u32 %v6258, 16
        %v6429 = vrot.slane %v6427, 5
        %v6430 = vsel %vm328, %v6425, %v6429
        %v6431 = vrot.slane %v6165, 4
        %v6432 = vrot.slane %v6168, 5
        %v6433 = vor.u32 %v6431, %v6432
        %v6434 = vrot.slane %v6433, 4
        %v6435 = vrot.slane %v6177, 5
        %v6436 = vsel %vm328, %v6434, %v6435
        %v6437 = vrot.slane %v6174, 4
        %v6438 = vor.u32 %v6437, %v6435
        %v6439 = vrot.slane %v6438, 4
        %v6441 = vshll.u32 %v6259, 16
        %v6443 = vrot.slane %v6441, 5
        %v6444 = vsel %vm328, %v6439, %v6443
        %v6445 = vrot.slane %v6187, 4
        %v6446 = vrot.slane %v6190, 5
        %v6447 = vor.u32 %v6445, %v6446
        %v6448 = vrot.slane %v6447, 4
        %v6449 = vrot.slane %v6199, 5
        %v6450 = vsel %vm328, %v6448, %v6449
        %v6451 = vrot.slane %v6196, 4
        %v6452 = vor.u32 %v6451, %v6449
        %v6453 = vrot.slane %v6452, 4
        %v6455 = vshll.u32 %v6260, 16
        %v6457 = vrot.slane %v6455, 5
        %v6458 = vsel %vm328, %v6453, %v6457
        %v6459 = vrot.slane %v6209, 4
        %v6460 = vrot.slane %v6212, 5
        %v6461 = vor.u32 %v6459, %v6460
        %v6462 = vrot.slane %v6461, 4
        %v6463 = vrot.slane %v6221, 5
        %v6464 = vsel %vm328, %v6462, %v6463
        %v6465 = vrot.slane %v6218, 4
        %v6466 = vor.u32 %v6465, %v6463
        %v6467 = vrot.slane %v6466, 4
        %v6469 = vshll.u32 %v6261, 16
        %v6471 = vrot.slane %v6469, 5
        %v6472 = vsel %vm328, %v6467, %v6471
        %v6473 = vrot.slane %v6231, 4
        %v6474 = vrot.slane %v6234, 5
        %v6475 = vor.u32 %v6473, %v6474
        %v6476 = vrot.slane %v6475, 4
        %v6477 = vrot.slane %v6243, 5
        %v6478 = vsel %vm328, %v6476, %v6477
        %v6479 = vrot.slane %v6240, 4
        %v6480 = vor.u32 %v6479, %v6477
        %v6481 = vrot.slane %v6480, 4
        %v6483 = vshll.u32 %v6262, 16
        %v6485 = vrot.slane %v6483, 5
        %v6486 = vsel %vm328, %v6481, %v6485
        %v6487 = vunpack.c.l.b16 %v5907
        %v6488 = vunpack.c.l.b16 %v5916
        %v6489 = vunpack.c.l.b16 %v5929
        %v6490 = vunpack.c.l.b16 %v5938
        %v6491 = vunpack.c.l.b16 %v5951
        %v6492 = vunpack.c.l.b16 %v5960
        %v6493 = vunpack.c.l.b16 %v5973
        %v6494 = vunpack.c.l.b16 %v5982
        %v6495 = vunpack.c.l.b16 %v5995
        %v6496 = vunpack.c.l.b16 %v6004
        %v6497 = vunpack.c.l.b16 %v6017
        %v6498 = vunpack.c.l.b16 %v6026
        %v6499 = vunpack.c.l.b16 %v6039
        %v6500 = vunpack.c.l.b16 %v6048
        %v6501 = vunpack.c.l.b16 %v6061
        %v6502 = vunpack.c.l.b16 %v6070
        %v6503 = vunpack.c.l.b16 %v6083
        %v6504 = vunpack.c.l.b16 %v6092
        %v6505 = vunpack.c.l.b16 %v6105
        %v6506 = vunpack.c.l.b16 %v6114
        %v6507 = vunpack.c.l.b16 %v6127
        %v6508 = vunpack.c.l.b16 %v6136
        %v6509 = vunpack.c.l.b16 %v6149
        %v6510 = vunpack.c.l.b16 %v6158
        %v6511 = vunpack.c.l.b16 %v6171
        %v6512 = vunpack.c.l.b16 %v6180
        %v6513 = vunpack.c.l.b16 %v6193
        %v6514 = vunpack.c.l.b16 %v6202
        %v6515 = vunpack.c.l.b16 %v6215
        %v6516 = vunpack.c.l.b16 %v6224
        %v6517 = vunpack.c.l.b16 %v6237
        %v6518 = vunpack.c.l.b16 %v6246
        %v6519 = vpack.c.b16 %v6488, %v6487
        %v6520 = vpack.c.b16 %v6490, %v6489
        %v6521 = vpack.c.b16 %v6492, %v6491
        %v6522 = vpack.c.b16 %v6494, %v6493
        %v6523 = vpack.c.b16 %v6496, %v6495
        %v6524 = vpack.c.b16 %v6498, %v6497
        %v6525 = vpack.c.b16 %v6500, %v6499
        %v6526 = vpack.c.b16 %v6502, %v6501
        %v6527 = vpack.c.b16 %v6504, %v6503
        %v6528 = vpack.c.b16 %v6506, %v6505
        %v6529 = vpack.c.b16 %v6508, %v6507
        %v6530 = vpack.c.b16 %v6510, %v6509
        %v6531 = vpack.c.b16 %v6512, %v6511
        %v6532 = vpack.c.b16 %v6514, %v6513
        %v6533 = vpack.c.b16 %v6516, %v6515
        %v6534 = vpack.c.b16 %v6518, %v6517
        %v6567 = vunpack.c.l.b16 %v5848
        %v6568 = vunpack.c.l.b16 %v5849
        %v6569 = vunpack.c.l.b16 %v5851
        %v6570 = vunpack.c.l.b16 %v5852
        %v6571 = vunpack.c.l.b16 %v5854
        %v6572 = vunpack.c.l.b16 %v5855
        %v6573 = vunpack.c.l.b16 %v5857
        %v6574 = vunpack.c.l.b16 %v5858
        %v6575 = vunpack.c.l.b16 %v5860
        %v6576 = vunpack.c.l.b16 %v5861
        %v6577 = vunpack.c.l.b16 %v5863
        %v6578 = vunpack.c.l.b16 %v5864
        %v6579 = vunpack.c.l.b16 %v5866
        %v6580 = vunpack.c.l.b16 %v5867
        %v6581 = vunpack.c.l.b16 %v5869
        %v6582 = vunpack.c.l.b16 %v5870
        %v6583 = vunpack.c.l.b16 %v5872
        %v6584 = vunpack.c.l.b16 %v5873
        %v6585 = vunpack.c.l.b16 %v5875
        %v6586 = vunpack.c.l.b16 %v5876
        %v6587 = vunpack.c.l.b16 %v5878
        %v6588 = vunpack.c.l.b16 %v5879
        %v6589 = vunpack.c.l.b16 %v5881
        %v6590 = vunpack.c.l.b16 %v5882
        %v6591 = vunpack.c.l.b16 %v5884
        %v6592 = vunpack.c.l.b16 %v5885
        %v6593 = vunpack.c.l.b16 %v5887
        %v6594 = vunpack.c.l.b16 %v5888
        %v6595 = vunpack.c.l.b16 %v5890
        %v6596 = vunpack.c.l.b16 %v5891
        %v6597 = vunpack.c.l.b16 %v5893
        %v6598 = vunpack.c.l.b16 %v5894
        %v6599 = vpack.c.b16 %v6568, %v6567
        %v6600 = vpack.c.b16 %v6570, %v6569
        %v6601 = vpack.c.b16 %v6572, %v6571
        %v6602 = vpack.c.b16 %v6574, %v6573
        %v6603 = vpack.c.b16 %v6576, %v6575
        %v6604 = vpack.c.b16 %v6578, %v6577
        %v6605 = vpack.c.b16 %v6580, %v6579
        %v6606 = vpack.c.b16 %v6582, %v6581
        %v6607 = vpack.c.b16 %v6584, %v6583
        %v6608 = vpack.c.b16 %v6586, %v6585
        %v6609 = vpack.c.b16 %v6588, %v6587
        %v6610 = vpack.c.b16 %v6590, %v6589
        %v6611 = vpack.c.b16 %v6592, %v6591
        %v6612 = vpack.c.b16 %v6594, %v6593
        %v6613 = vpack.c.b16 %v6596, %v6595
        %v6614 = vpack.c.b16 %v6598, %v6597
        %6615 = vrot.lane.b32.xlu0 %v6599, 8
        %v6616 = vpop.permute.xlu0 %6615
        %6617 = vrot.lane.b32.xlu0 %v6600, 8
        %v6618 = vpop.permute.xlu0 %6617
        %6619 = vrot.lane.b32.xlu0 %v6601, 8
        %v6620 = vpop.permute.xlu0 %6619
        %6621 = vrot.lane.b32.xlu0 %v6602, 8
        %v6622 = vpop.permute.xlu0 %6621
        %6623 = vrot.lane.b32.xlu0 %v6603, 8
        %v6624 = vpop.permute.xlu0 %6623
        %6625 = vrot.lane.b32.xlu0 %v6604, 8
        %v6626 = vpop.permute.xlu0 %6625
        %6627 = vrot.lane.b32.xlu0 %v6605, 8
        %v6628 = vpop.permute.xlu0 %6627
        %6629 = vrot.lane.b32.xlu0 %v6606, 8
        %v6630 = vpop.permute.xlu0 %6629
        %6631 = vrot.lane.b32.xlu0 %v6607, 8
        %v6632 = vpop.permute.xlu0 %6631
        %6633 = vrot.lane.b32.xlu0 %v6608, 8
        %v6634 = vpop.permute.xlu0 %6633
        %6635 = vrot.lane.b32.xlu0 %v6609, 8
        %v6636 = vpop.permute.xlu0 %6635
        %6637 = vrot.lane.b32.xlu0 %v6610, 8
        %v6638 = vpop.permute.xlu0 %6637
        %6639 = vrot.lane.b32.xlu0 %v6611, 8
        %v6640 = vpop.permute.xlu0 %6639
        %6641 = vrot.lane.b32.xlu0 %v6612, 8
        %v6642 = vpop.permute.xlu0 %6641
        %6643 = vrot.lane.b32.xlu0 %v6613, 8
        %v6644 = vpop.permute.xlu0 %6643
        %6645 = vrot.lane.b32.xlu0 %v6614, 8
        %v6646 = vpop.permute.xlu0 %6645
        %v6647 = vunpack.c.l.b16 %v6268
        %v6648 = vunpack.c.l.b16 %v6276
        %v6649 = vunpack.c.l.b16 %v6282
        %v6650 = vunpack.c.l.b16 %v6290
        %v6651 = vunpack.c.l.b16 %v6296
        %v6652 = vunpack.c.l.b16 %v6304
        %v6653 = vunpack.c.l.b16 %v6310
        %v6654 = vunpack.c.l.b16 %v6318
        %v6655 = vunpack.c.l.b16 %v6324
        %v6656 = vunpack.c.l.b16 %v6332
        %v6657 = vunpack.c.l.b16 %v6338
        %v6658 = vunpack.c.l.b16 %v6346
        %v6659 = vunpack.c.l.b16 %v6352
        %v6660 = vunpack.c.l.b16 %v6360
        %v6661 = vunpack.c.l.b16 %v6366
        %v6662 = vunpack.c.l.b16 %v6374
        %v6663 = vunpack.c.l.b16 %v6380
        %v6664 = vunpack.c.l.b16 %v6388
        %v6665 = vunpack.c.l.b16 %v6394
        %v6666 = vunpack.c.l.b16 %v6402
        %v6667 = vunpack.c.l.b16 %v6408
        %v6668 = vunpack.c.l.b16 %v6416
        %v6669 = vunpack.c.l.b16 %v6422
        %v6670 = vunpack.c.l.b16 %v6430
        %v6671 = vunpack.c.l.b16 %v6436
        %v6672 = vunpack.c.l.b16 %v6444
        %v6673 = vunpack.c.l.b16 %v6450
        %v6674 = vunpack.c.l.b16 %v6458
        %v6675 = vunpack.c.l.b16 %v6464
        %v6676 = vunpack.c.l.b16 %v6472
        %v6677 = vunpack.c.l.b16 %v6478
        %v6678 = vunpack.c.l.b16 %v6486
        %v6679 = vpack.c.b16 %v6648, %v6647
        %v6680 = vpack.c.b16 %v6650, %v6649
        %v6681 = vpack.c.b16 %v6652, %v6651
        %v6682 = vpack.c.b16 %v6654, %v6653
        %v6683 = vpack.c.b16 %v6656, %v6655
        %v6684 = vpack.c.b16 %v6658, %v6657
        %v6685 = vpack.c.b16 %v6660, %v6659
        %v6686 = vpack.c.b16 %v6662, %v6661
        %v6687 = vpack.c.b16 %v6664, %v6663
        %v6688 = vpack.c.b16 %v6666, %v6665
        %v6689 = vpack.c.b16 %v6668, %v6667
        %v6690 = vpack.c.b16 %v6670, %v6669
        %v6691 = vpack.c.b16 %v6672, %v6671
        %v6692 = vpack.c.b16 %v6674, %v6673
        %v6693 = vpack.c.b16 %v6676, %v6675
        %v6694 = vpack.c.b16 %v6678, %v6677
        %6695 = vrot.lane.b32.xlu0 %v6679, 16
        %v6696 = vpop.permute.xlu0 %6695
        %6697 = vrot.lane.b32.xlu0 %v6680, 16
        %v6698 = vpop.permute.xlu0 %6697
        %6699 = vrot.lane.b32.xlu0 %v6681, 16
        %v6700 = vpop.permute.xlu0 %6699
        %6701 = vrot.lane.b32.xlu0 %v6682, 16
        %v6702 = vpop.permute.xlu0 %6701
        %6703 = vrot.lane.b32.xlu0 %v6683, 16
        %v6704 = vpop.permute.xlu0 %6703
        %6705 = vrot.lane.b32.xlu0 %v6684, 16
        %v6706 = vpop.permute.xlu0 %6705
        %6707 = vrot.lane.b32.xlu0 %v6685, 16
        %v6708 = vpop.permute.xlu0 %6707
        %6709 = vrot.lane.b32.xlu0 %v6686, 16
        %v6710 = vpop.permute.xlu0 %6709
        %6711 = vrot.lane.b32.xlu0 %v6687, 16
        %v6712 = vpop.permute.xlu0 %6711
        %6713 = vrot.lane.b32.xlu0 %v6688, 16
        %v6714 = vpop.permute.xlu0 %6713
        %6715 = vrot.lane.b32.xlu0 %v6689, 16
        %v6716 = vpop.permute.xlu0 %6715
        %6717 = vrot.lane.b32.xlu0 %v6690, 16
        %v6718 = vpop.permute.xlu0 %6717
        %6719 = vrot.lane.b32.xlu0 %v6691, 16
        %v6720 = vpop.permute.xlu0 %6719
        %6721 = vrot.lane.b32.xlu0 %v6692, 16
        %v6722 = vpop.permute.xlu0 %6721
        %6723 = vrot.lane.b32.xlu0 %v6693, 16
        %v6724 = vpop.permute.xlu0 %6723
        %6725 = vrot.lane.b32.xlu0 %v6694, 16
        %v6726 = vpop.permute.xlu0 %6725
        %v6729 = vsel %vm2895, %v6519, %v6616
        %v6732 = vsel %vm2895, %v6520, %v6618
        %v6735 = vsel %vm2895, %v6521, %v6620
        %v6738 = vsel %vm2895, %v6522, %v6622
        %v6741 = vsel %vm2895, %v6523, %v6624
        %v6744 = vsel %vm2895, %v6524, %v6626
        %v6747 = vsel %vm2895, %v6525, %v6628
        %v6750 = vsel %vm2895, %v6526, %v6630
        %v6753 = vsel %vm2895, %v6527, %v6632
        %v6756 = vsel %vm2895, %v6528, %v6634
        %v6759 = vsel %vm2895, %v6529, %v6636
        %v6762 = vsel %vm2895, %v6530, %v6638
        %v6765 = vsel %vm2895, %v6531, %v6640
        %v6768 = vsel %vm2895, %v6532, %v6642
        %v6771 = vsel %vm2895, %v6533, %v6644
        %v6774 = vsel %vm2895, %v6534, %v6646
        %v6776 = vsel %vm2961, %v6729, %v6696
        %v6778 = vsel %vm2961, %v6732, %v6698
        %v6780 = vsel %vm2961, %v6735, %v6700
        %v6782 = vsel %vm2961, %v6738, %v6702
        %v6784 = vsel %vm2961, %v6741, %v6704
        %v6786 = vsel %vm2961, %v6744, %v6706
        %v6788 = vsel %vm2961, %v6747, %v6708
        %v6790 = vsel %vm2961, %v6750, %v6710
        %v6792 = vsel %vm2961, %v6753, %v6712
        %v6794 = vsel %vm2961, %v6756, %v6714
        %v6796 = vsel %vm2961, %v6759, %v6716
        %v6798 = vsel %vm2961, %v6762, %v6718
        %v6800 = vsel %vm2961, %v6765, %v6720
        %v6802 = vsel %vm2961, %v6768, %v6722
        %v6804 = vsel %vm2961, %v6771, %v6724
        %v6806 = vsel %vm2961, %v6774, %v6726
        %s6807 = scalar_lea.vmem %s4, 24
        %v6808 = vld [vmem:[%s6807] sm:$0xf]
        %v6809 = vld [vmem:[%s6807 + $0x4] sm:$0xf]
        %v6810 = vld [vmem:[%s6807 + $0x8] sm:$0xf]
        %v6814 = vunpack.c.l.b16 %v6808
        %v6815 = vunpack.c.l.b16 %v6809
        %v6816 = vunpack.c.l.b16 %v6810
        %v6817 = vpack.c.b16 %v6815, %v6814
        %v6818 = vpack.c.b16 %v6816, %v6816
        %v6820 = vsel %vm3027, %v6776, 0
        %v6822 = vsel %vm3027, %v6778, 0
        %v6824 = vsel %vm3027, %v6780, 0
        %v6826 = vsel %vm3027, %v6782, 0
        %v6828 = vsel %vm3027, %v6784, 0
        %v6830 = vsel %vm3027, %v6786, 0
        %v6832 = vsel %vm3027, %v6788, 0
        %v6834 = vsel %vm3027, %v6790, 0
        %v6836 = vsel %vm3027, %v6792, 0
        %v6838 = vsel %vm3027, %v6794, 0
        %v6840 = vsel %vm3027, %v6796, 0
        %v6842 = vsel %vm3027, %v6798, 0
        %v6844 = vsel %vm3027, %v6800, 0
        %v6846 = vsel %vm3027, %v6802, 0
        %v6848 = vsel %vm3027, %v6804, 0
        %v6850 = vsel %vm3027, %v6806, 0
        %v6853 = vsel %vm5620, %v6818, 0
        %6855 = vmatpush.bf16.msra.mxu0 0
        %6856 = vmatpush.bf16.msra.mxu0 0
        %6857 = vmatpush.bf16.msra.mxu0 0
        %6858 = vmatpush.bf16.msra.mxu0 0
        %6859 = vmatpush.bf16.msra.mxu0 0
        %6860 = vmatpush.bf16.msra.mxu0 0
        %6861 = vmatpush.bf16.msra.mxu0 %v6853
        %6862 = vmatpush.bf16.msra.mxu0 %v6817
        %6863 = vmatmul.bf16.gmra.mxu0 %v6820
        %v6864 = vpop.f32.mrf.mxu0
        %v6865 = vadd.f32 0.0, %v6864
        %v6866 = vpop.f32.mrf.mxu0
        %v6867 = vadd.f32 0.0, %v6866
        %6868 = vmatmul.bf16.gmra.mxu0 %v6822
        %v6869 = vpop.f32.mrf.mxu0
        %v6870 = vadd.f32 0.0, %v6869
        %v6871 = vpop.f32.mrf.mxu0
        %v6872 = vadd.f32 0.0, %v6871
        %6873 = vmatmul.bf16.gmra.mxu0 %v6824
        %v6874 = vpop.f32.mrf.mxu0
        %v6875 = vadd.f32 0.0, %v6874
        %v6876 = vpop.f32.mrf.mxu0
        %v6877 = vadd.f32 0.0, %v6876
        %6878 = vmatmul.bf16.gmra.mxu0 %v6826
        %v6879 = vpop.f32.mrf.mxu0
        %v6880 = vadd.f32 0.0, %v6879
        %v6881 = vpop.f32.mrf.mxu0
        %v6882 = vadd.f32 0.0, %v6881
        %6883 = vmatmul.bf16.gmra.mxu0 %v6828
        %v6884 = vpop.f32.mrf.mxu0
        %v6885 = vadd.f32 0.0, %v6884
        %v6886 = vpop.f32.mrf.mxu0
        %v6887 = vadd.f32 0.0, %v6886
        %6888 = vmatmul.bf16.gmra.mxu0 %v6830
        %v6889 = vpop.f32.mrf.mxu0
        %v6890 = vadd.f32 0.0, %v6889
        %v6891 = vpop.f32.mrf.mxu0
        %v6892 = vadd.f32 0.0, %v6891
        %6893 = vmatmul.bf16.gmra.mxu0 %v6832
        %v6894 = vpop.f32.mrf.mxu0
        %v6895 = vadd.f32 0.0, %v6894
        %v6896 = vpop.f32.mrf.mxu0
        %v6897 = vadd.f32 0.0, %v6896
        %6898 = vmatmul.bf16.gmra.mxu0 %v6834
        %v6899 = vpop.f32.mrf.mxu0
        %v6900 = vadd.f32 0.0, %v6899
        %v6901 = vpop.f32.mrf.mxu0
        %v6902 = vadd.f32 0.0, %v6901
        %6903 = vmatmul.bf16.gmra.mxu0 %v6836
        %v6904 = vpop.f32.mrf.mxu0
        %v6905 = vadd.f32 0.0, %v6904
        %v6906 = vpop.f32.mrf.mxu0
        %v6907 = vadd.f32 0.0, %v6906
        %6908 = vmatmul.bf16.gmra.mxu0 %v6838
        %v6909 = vpop.f32.mrf.mxu0
        %v6910 = vadd.f32 0.0, %v6909
        %v6911 = vpop.f32.mrf.mxu0
        %v6912 = vadd.f32 0.0, %v6911
        %6913 = vmatmul.bf16.gmra.mxu0 %v6840
        %v6914 = vpop.f32.mrf.mxu0
        %v6915 = vadd.f32 0.0, %v6914
        %v6916 = vpop.f32.mrf.mxu0
        %v6917 = vadd.f32 0.0, %v6916
        %6918 = vmatmul.bf16.gmra.mxu0 %v6842
        %v6919 = vpop.f32.mrf.mxu0
        %v6920 = vadd.f32 0.0, %v6919
        %v6921 = vpop.f32.mrf.mxu0
        %v6922 = vadd.f32 0.0, %v6921
        %6923 = vmatmul.bf16.gmra.mxu0 %v6844
        %v6924 = vpop.f32.mrf.mxu0
        %v6925 = vadd.f32 0.0, %v6924
        %v6926 = vpop.f32.mrf.mxu0
        %v6927 = vadd.f32 0.0, %v6926
        %6928 = vmatmul.bf16.gmra.mxu0 %v6846
        %v6929 = vpop.f32.mrf.mxu0
        %v6930 = vadd.f32 0.0, %v6929
        %v6931 = vpop.f32.mrf.mxu0
        %v6932 = vadd.f32 0.0, %v6931
        %6933 = vmatmul.bf16.gmra.mxu0 %v6848
        %v6934 = vpop.f32.mrf.mxu0
        %v6935 = vadd.f32 0.0, %v6934
        %v6936 = vpop.f32.mrf.mxu0
        %v6937 = vadd.f32 0.0, %v6936
        %6938 = vmatmul.bf16.gmra.mxu0 %v6850
        %v6939 = vpop.f32.mrf.mxu0
        %v6940 = vadd.f32 0.0, %v6939
        %v6941 = vpop.f32.mrf.mxu0
        %v6942 = vadd.f32 0.0, %v6941
        %6943 = vdwg.mxu0
        %v6944 = vadd.f32 %v5767, %v6865
        %v6945 = vadd.f32 %v5769, %v6867
        %v6946 = vadd.f32 %v5772, %v6870
        %v6947 = vadd.f32 %v5774, %v6872
        %v6948 = vadd.f32 %v5777, %v6875
        %v6949 = vadd.f32 %v5779, %v6877
        %v6950 = vadd.f32 %v5782, %v6880
        %v6951 = vadd.f32 %v5784, %v6882
        %v6952 = vadd.f32 %v5787, %v6885
        %v6953 = vadd.f32 %v5789, %v6887
        %v6954 = vadd.f32 %v5792, %v6890
        %v6955 = vadd.f32 %v5794, %v6892
        %v6956 = vadd.f32 %v5797, %v6895
        %v6957 = vadd.f32 %v5799, %v6897
        %v6958 = vadd.f32 %v5802, %v6900
        %v6959 = vadd.f32 %v5804, %v6902
        %v6960 = vadd.f32 %v5807, %v6905
        %v6961 = vadd.f32 %v5809, %v6907
        %v6962 = vadd.f32 %v5812, %v6910
        %v6963 = vadd.f32 %v5814, %v6912
        %v6964 = vadd.f32 %v5817, %v6915
        %v6965 = vadd.f32 %v5819, %v6917
        %v6966 = vadd.f32 %v5822, %v6920
        %v6967 = vadd.f32 %v5824, %v6922
        %v6968 = vadd.f32 %v5827, %v6925
        %v6969 = vadd.f32 %v5829, %v6927
        %v6970 = vadd.f32 %v5832, %v6930
        %v6971 = vadd.f32 %v5834, %v6932
        %v6972 = vadd.f32 %v5837, %v6935
        %v6973 = vadd.f32 %v5839, %v6937
        %v6974 = vadd.f32 %v5842, %v6940
        %v6975 = vadd.f32 %v5844, %v6942
        %v6976 = vld [vmem:[%s5] sm:$0x1]
        %v6978 = vperm.slane %v6976, 0
        %v6980 = vmul.f32 %v6944, %v6978
        %v6981 = vmul.f32 %v6945, %v6978
        %v6982 = vmul.f32 %v6946, %v6978
        %v6983 = vmul.f32 %v6947, %v6978
        %v6984 = vmul.f32 %v6948, %v6978
        %v6985 = vmul.f32 %v6949, %v6978
        %v6986 = vmul.f32 %v6950, %v6978
        %v6987 = vmul.f32 %v6951, %v6978
        %v6988 = vmul.f32 %v6952, %v6978
        %v6989 = vmul.f32 %v6953, %v6978
        %v6990 = vmul.f32 %v6954, %v6978
        %v6991 = vmul.f32 %v6955, %v6978
        %v6992 = vmul.f32 %v6956, %v6978
        %v6993 = vmul.f32 %v6957, %v6978
        %v6994 = vmul.f32 %v6958, %v6978
        %v6995 = vmul.f32 %v6959, %v6978
        %v6996 = vmul.f32 %v6960, %v6978
        %v6997 = vmul.f32 %v6961, %v6978
        %v6998 = vmul.f32 %v6962, %v6978
        %v6999 = vmul.f32 %v6963, %v6978
        %v7000 = vmul.f32 %v6964, %v6978
        %v7001 = vmul.f32 %v6965, %v6978
        %v7002 = vmul.f32 %v6966, %v6978
        %v7003 = vmul.f32 %v6967, %v6978
        %v7004 = vmul.f32 %v6968, %v6978
        %v7005 = vmul.f32 %v6969, %v6978
        %v7006 = vmul.f32 %v6970, %v6978
        %v7007 = vmul.f32 %v6971, %v6978
        %v7008 = vmul.f32 %v6972, %v6978
        %v7009 = vmul.f32 %v6973, %v6978
        %v7010 = vmul.f32 %v6974, %v6978
        %v7011 = vmul.f32 %v6975, %v6978
        %v7012 = vld [vmem:[%s6] sm:$0x1]
        %v7014 = vperm.slane %v7012, 0
        %v7016 = vadd.f32 %v6980, %v7014
        %v7017 = vadd.f32 %v6981, %v7014
        %v7018 = vadd.f32 %v6982, %v7014
        %v7019 = vadd.f32 %v6983, %v7014
        %v7020 = vadd.f32 %v6984, %v7014
        %v7021 = vadd.f32 %v6985, %v7014
        %v7022 = vadd.f32 %v6986, %v7014
        %v7023 = vadd.f32 %v6987, %v7014
        %v7024 = vadd.f32 %v6988, %v7014
        %v7025 = vadd.f32 %v6989, %v7014
        %v7026 = vadd.f32 %v6990, %v7014
        %v7027 = vadd.f32 %v6991, %v7014
        %v7028 = vadd.f32 %v6992, %v7014
        %v7029 = vadd.f32 %v6993, %v7014
        %v7030 = vadd.f32 %v6994, %v7014
        %v7031 = vadd.f32 %v6995, %v7014
        %v7032 = vadd.f32 %v6996, %v7014
        %v7033 = vadd.f32 %v6997, %v7014
        %v7034 = vadd.f32 %v6998, %v7014
        %v7035 = vadd.f32 %v6999, %v7014
        %v7036 = vadd.f32 %v7000, %v7014
        %v7037 = vadd.f32 %v7001, %v7014
        %v7038 = vadd.f32 %v7002, %v7014
        %v7039 = vadd.f32 %v7003, %v7014
        %v7040 = vadd.f32 %v7004, %v7014
        %v7041 = vadd.f32 %v7005, %v7014
        %v7042 = vadd.f32 %v7006, %v7014
        %v7043 = vadd.f32 %v7007, %v7014
        %v7044 = vadd.f32 %v7008, %v7014
        %v7045 = vadd.f32 %v7009, %v7014
        %v7046 = vadd.f32 %v7010, %v7014
        %v7047 = vadd.f32 %v7011, %v7014
        %v7048 = vld [vmem:[%s271] sm:$0xf]
        %v7049 = vld [vmem:[%s271 + $0x4] sm:$0xf]
        %v7050 = vld [vmem:[%s271 + $0x8] sm:$0xf]
        %v7051 = vld [vmem:[%s271 + $0xc] sm:$0xf]
        %v7052 = vld [vmem:[%s271 + $0x10] sm:$0xf]
        %v7053 = vld [vmem:[%s271 + $0x14] sm:$0xf]
        %v7054 = vld [vmem:[%s271 + $0x18] sm:$0xf]
        %v7055 = vld [vmem:[%s271 + $0x1c] sm:$0xf]
        %v7056 = vld [vmem:[%s271 + $0x20] sm:$0xf]
        %v7057 = vld [vmem:[%s271 + $0x24] sm:$0xf]
        %v7058 = vld [vmem:[%s271 + $0x28] sm:$0xf]
        %v7059 = vld [vmem:[%s271 + $0x2c] sm:$0xf]
        %v7060 = vld [vmem:[%s271 + $0x30] sm:$0xf]
        %v7061 = vld [vmem:[%s271 + $0x34] sm:$0xf]
        %v7062 = vld [vmem:[%s271 + $0x38] sm:$0xf]
        %v7063 = vld [vmem:[%s271 + $0x3c] sm:$0xf]
        %v7064 = vld [vmem:[%s271 + $0x40] sm:$0xf]
        %v7065 = vld [vmem:[%s271 + $0x44] sm:$0xf]
        %v7066 = vld [vmem:[%s271 + $0x48] sm:$0xf]
        %v7067 = vld [vmem:[%s271 + $0x4c] sm:$0xf]
        %v7068 = vld [vmem:[%s271 + $0x50] sm:$0xf]
        %v7069 = vld [vmem:[%s271 + $0x54] sm:$0xf]
        %v7070 = vld [vmem:[%s271 + $0x58] sm:$0xf]
        %v7071 = vld [vmem:[%s271 + $0x5c] sm:$0xf]
        %v7072 = vld [vmem:[%s271 + $0x60] sm:$0xf]
        %v7073 = vld [vmem:[%s271 + $0x64] sm:$0xf]
        %v7074 = vld [vmem:[%s271 + $0x68] sm:$0xf]
        %v7075 = vld [vmem:[%s271 + $0x6c] sm:$0xf]
        %v7076 = vld [vmem:[%s271 + $0x70] sm:$0xf]
        %v7077 = vld [vmem:[%s271 + $0x74] sm:$0xf]
        %v7078 = vld [vmem:[%s271 + $0x78] sm:$0xf]
        %v7079 = vld [vmem:[%s271 + $0x7c] sm:$0xf]
        %v7080 = vunpack.c.l.bf16 %v7048
        %v7081 = vunpack.c.l.bf16 %v7049
        %v7082 = vunpack.c.l.bf16 %v7050
        %v7083 = vunpack.c.l.bf16 %v7051
        %v7084 = vunpack.c.l.bf16 %v7052
        %v7085 = vunpack.c.l.bf16 %v7053
        %v7086 = vunpack.c.l.bf16 %v7054
        %v7087 = vunpack.c.l.bf16 %v7055
        %v7088 = vunpack.c.l.bf16 %v7056
        %v7089 = vunpack.c.l.bf16 %v7057
        %v7090 = vunpack.c.l.bf16 %v7058
        %v7091 = vunpack.c.l.bf16 %v7059
        %v7092 = vunpack.c.l.bf16 %v7060
        %v7093 = vunpack.c.l.bf16 %v7061
        %v7094 = vunpack.c.l.bf16 %v7062
        %v7095 = vunpack.c.l.bf16 %v7063
        %v7096 = vunpack.c.l.bf16 %v7064
        %v7097 = vunpack.c.l.bf16 %v7065
        %v7098 = vunpack.c.l.bf16 %v7066
        %v7099 = vunpack.c.l.bf16 %v7067
        %v7100 = vunpack.c.l.bf16 %v7068
        %v7101 = vunpack.c.l.bf16 %v7069
        %v7102 = vunpack.c.l.bf16 %v7070
        %v7103 = vunpack.c.l.bf16 %v7071
        %v7104 = vunpack.c.l.bf16 %v7072
        %v7105 = vunpack.c.l.bf16 %v7073
        %v7106 = vunpack.c.l.bf16 %v7074
        %v7107 = vunpack.c.l.bf16 %v7075
        %v7108 = vunpack.c.l.bf16 %v7076
        %v7109 = vunpack.c.l.bf16 %v7077
        %v7110 = vunpack.c.l.bf16 %v7078
        %v7111 = vunpack.c.l.bf16 %v7079
        %v7112 = vadd.f32 %v7080, %v7016
        %v7113 = vadd.f32 %v7081, %v7017
        %v7114 = vadd.f32 %v7082, %v7018
        %v7115 = vadd.f32 %v7083, %v7019
        %v7116 = vadd.f32 %v7084, %v7020
        %v7117 = vadd.f32 %v7085, %v7021
        %v7118 = vadd.f32 %v7086, %v7022
        %v7119 = vadd.f32 %v7087, %v7023
        %v7120 = vadd.f32 %v7088, %v7024
        %v7121 = vadd.f32 %v7089, %v7025
        %v7122 = vadd.f32 %v7090, %v7026
        %v7123 = vadd.f32 %v7091, %v7027
        %v7124 = vadd.f32 %v7092, %v7028
        %v7125 = vadd.f32 %v7093, %v7029
        %v7126 = vadd.f32 %v7094, %v7030
        %v7127 = vadd.f32 %v7095, %v7031
        %v7128 = vadd.f32 %v7096, %v7032
        %v7129 = vadd.f32 %v7097, %v7033
        %v7130 = vadd.f32 %v7098, %v7034
        %v7131 = vadd.f32 %v7099, %v7035
        %v7132 = vadd.f32 %v7100, %v7036
        %v7133 = vadd.f32 %v7101, %v7037
        %v7134 = vadd.f32 %v7102, %v7038
        %v7135 = vadd.f32 %v7103, %v7039
        %v7136 = vadd.f32 %v7104, %v7040
        %v7137 = vadd.f32 %v7105, %v7041
        %v7138 = vadd.f32 %v7106, %v7042
        %v7139 = vadd.f32 %v7107, %v7043
        %v7140 = vadd.f32 %v7108, %v7044
        %v7141 = vadd.f32 %v7109, %v7045
        %v7142 = vadd.f32 %v7110, %v7046
        %v7143 = vadd.f32 %v7111, %v7047
        %v7144 = vpack.c.bf16 %v7112, %v7112
        %v7145 = vpack.c.bf16 %v7113, %v7113
        %v7146 = vpack.c.bf16 %v7114, %v7114
        %v7147 = vpack.c.bf16 %v7115, %v7115
        %v7148 = vpack.c.bf16 %v7116, %v7116
        %v7149 = vpack.c.bf16 %v7117, %v7117
        %v7150 = vpack.c.bf16 %v7118, %v7118
        %v7151 = vpack.c.bf16 %v7119, %v7119
        %v7152 = vpack.c.bf16 %v7120, %v7120
        %v7153 = vpack.c.bf16 %v7121, %v7121
        %v7154 = vpack.c.bf16 %v7122, %v7122
        %v7155 = vpack.c.bf16 %v7123, %v7123
        %v7156 = vpack.c.bf16 %v7124, %v7124
        %v7157 = vpack.c.bf16 %v7125, %v7125
        %v7158 = vpack.c.bf16 %v7126, %v7126
        %v7159 = vpack.c.bf16 %v7127, %v7127
        %v7160 = vpack.c.bf16 %v7128, %v7128
        %v7161 = vpack.c.bf16 %v7129, %v7129
        %v7162 = vpack.c.bf16 %v7130, %v7130
        %v7163 = vpack.c.bf16 %v7131, %v7131
        %v7164 = vpack.c.bf16 %v7132, %v7132
        %v7165 = vpack.c.bf16 %v7133, %v7133
        %v7166 = vpack.c.bf16 %v7134, %v7134
        %v7167 = vpack.c.bf16 %v7135, %v7135
        %v7168 = vpack.c.bf16 %v7136, %v7136
        %v7169 = vpack.c.bf16 %v7137, %v7137
        %v7170 = vpack.c.bf16 %v7138, %v7138
        %v7171 = vpack.c.bf16 %v7139, %v7139
        %v7172 = vpack.c.bf16 %v7140, %v7140
        %v7173 = vpack.c.bf16 %v7141, %v7141
        %v7174 = vpack.c.bf16 %v7142, %v7142
        %v7175 = vpack.c.bf16 %v7143, %v7143
        %7176 = vst [vmem:[%s271] sm:$0xf] %v7144
        %7177 = vst [vmem:[%s271 + $0x4] sm:$0xf] %v7145
        %7178 = vst [vmem:[%s271 + $0x8] sm:$0xf] %v7146
        %7179 = vst [vmem:[%s271 + $0xc] sm:$0xf] %v7147
        %7180 = vst [vmem:[%s271 + $0x10] sm:$0xf] %v7148
        %7181 = vst [vmem:[%s271 + $0x14] sm:$0xf] %v7149
        %7182 = vst [vmem:[%s271 + $0x18] sm:$0xf] %v7150
        %7183 = vst [vmem:[%s271 + $0x1c] sm:$0xf] %v7151
        %7184 = vst [vmem:[%s271 + $0x20] sm:$0xf] %v7152
        %7185 = vst [vmem:[%s271 + $0x24] sm:$0xf] %v7153
        %7186 = vst [vmem:[%s271 + $0x28] sm:$0xf] %v7154
        %7187 = vst [vmem:[%s271 + $0x2c] sm:$0xf] %v7155
        %7188 = vst [vmem:[%s271 + $0x30] sm:$0xf] %v7156
        %7189 = vst [vmem:[%s271 + $0x34] sm:$0xf] %v7157
        %7190 = vst [vmem:[%s271 + $0x38] sm:$0xf] %v7158
        %7191 = vst [vmem:[%s271 + $0x3c] sm:$0xf] %v7159
        %7192 = vst [vmem:[%s271 + $0x40] sm:$0xf] %v7160
        %7193 = vst [vmem:[%s271 + $0x44] sm:$0xf] %v7161
        %7194 = vst [vmem:[%s271 + $0x48] sm:$0xf] %v7162
        %7195 = vst [vmem:[%s271 + $0x4c] sm:$0xf] %v7163
        %7196 = vst [vmem:[%s271 + $0x50] sm:$0xf] %v7164
        %7197 = vst [vmem:[%s271 + $0x54] sm:$0xf] %v7165
        %7198 = vst [vmem:[%s271 + $0x58] sm:$0xf] %v7166
        %7199 = vst [vmem:[%s271 + $0x5c] sm:$0xf] %v7167
        %7200 = vst [vmem:[%s271 + $0x60] sm:$0xf] %v7168
        %7201 = vst [vmem:[%s271 + $0x64] sm:$0xf] %v7169
        %7202 = vst [vmem:[%s271 + $0x68] sm:$0xf] %v7170
        %7203 = vst [vmem:[%s271 + $0x6c] sm:$0xf] %v7171
        %7204 = vst [vmem:[%s271 + $0x70] sm:$0xf] %v7172
        %7205 = vst [vmem:[%s271 + $0x74] sm:$0xf] %v7173
        %7206 = vst [vmem:[%s271 + $0x78] sm:$0xf] %v7174
        %7207 = vst [vmem:[%s271 + $0x7c] sm:$0xf] %v7175
        %s7208 = sand.u32 %s181, 1
        %s7209 = scalar_lea.sflag [#allocation4], %s7208
        %s7210 = sand.u32 %s181, 1
        %s7211 = smul.addr %s7210, 128
        %s7212 = scalar_lea.vmem [#allocation3], %s7211
        // Predicated region
        $region49: #{tpu_custom_call.1} parent=47 // pred_check
          %p7213 = pneg %p191
        $region50: #{tpu_custom_call.1} parent=47 // pred_check_branch
          %7215 = sbr.rel (%p7213) target = $region52
        $region51: #{tpu_custom_call.1} parent=47 // pred_region
          %7217 = vsyncadd %s7209, 0
          %s7218 = smul.addr %s21, 32
          %s7219 = smul.addr %s7218, 4
          %s7220 = scalar_lea.hbm %s7, %s7219
          %s7221 = sshll.u32 %s7212, 4
          %s7222 = int_to_ptr.vmem [resolvable:$true] %s7221
          %s7223 = sshll.u32 %s7220, 4
          %s7224 = int_to_ptr.hbm [resolvable:$true] %s7223
          %7229 = dma.vmem_to_hbm [thread:$0]  %s7222, 2048, %s7224, %s7209, 64, 64, 4
        $region52: #{tpu_custom_call.1} parent=47 // pred_fallthru
          _
      $region48: #{tpu_custom_call.1} parent=5 // pred_fallthru
        _
      %p7230 = scmp.le.s32.totalorder 2, %s16
      // Predicated region
      $region53: #{tpu_custom_call.1} parent=5 // pred_check
        %p7231 = pneg %p7230
      $region54: #{tpu_custom_call.1} parent=5 // pred_check_branch
        %7233 = sbr.rel (%p7231) target = $region56
      $region55: #{tpu_custom_call.1} parent=5 // pred_region
        %s7234 = ssub.s32 %s16, 2
        // Predicated region
        $region57: #{tpu_custom_call.1} parent=55 // pred_check
          %p7235 = pneg %p197
        $region58: #{tpu_custom_call.1} parent=55 // pred_check_branch
          %7237 = sbr.rel (%p7235) target = $region60
        $region59: #{tpu_custom_call.1} parent=55 // pred_region
          %s7238 = sand.u32 %s182, 1
          %s7239 = scalar_lea.sflag [#allocation4], %s7238
          %s7240 = sand.u32 %s182, 1
          %s7241 = smul.addr %s7240, 128
          %s7242 = scalar_lea.vmem [#allocation3], %s7241
          %7244 = dma.done %s7239, 2048
        $region60: #{tpu_custom_call.1} parent=55 // pred_fallthru
          _
      $region56: #{tpu_custom_call.1} parent=5 // pred_fallthru
        _
    $region6: #{tpu_custom_call.1} parent=1 // loop_footer
      %s20 = sadd.s32 1, %s16
    $region7: #{tpu_custom_call.1} parent=1 // loop_footer_branch
      %15 = sbr.rel target = $region3
    $region8: #{tpu_custom_call.1} parent=1 // loop_exit
      _
    %7245 = vsyncpa [#allocation4], 1
    %s7246 = scalar_lea.sflag [#allocation4], 1
    %7247 = vsyncpa %s7246, 1

</llo_original>
